<compile_context>
chip_gen: v5e
topology: v5e:2x2
jax: 0.10.0
libtpu: 0.0.40
codegen_flags: <defaults>
</compile_context>

<pallas_src>
import jax
import jax.numpy as jnp
from jax.experimental import pallas as pl
from jax.experimental.pallas import tpu as pltpu

# model dimensions (small demo shapes consistent with the module)
N_BATCH = 2
H_IMG = W_IMG = 16
HO = WO = H_IMG // 2            # stride-2 stem conv
HW = HO * WO                    # 64
C_IN = 3
K_RAW = 9 * C_IN                # 27  (3x3 kernel * 3 input channels)
K_PAD = 32                      # zero-padded contraction dim
C_STEM = 32
C_HEAD = 1280
C_CLS = 128
C_META = 12
BN_EPS = 1e-3                   # tf_ variants in timm keep TF's eps=1e-3


# ---------------------------------------------------------------------------
# Single fused kernel: stem conv (im2col matmul) + BN + SiLU
#                      -> head 1x1 conv + BN + SiLU -> global avg pool
#                      -> Linear(1280->128) -> (dropout=id) -> concat meta
#                      -> Linear(140->1)
# All intermediates stay in VMEM / vregs.
# ---------------------------------------------------------------------------
def fused_pet_kernel(patches_ref, stem_w_ref, stem_shift_ref,
                     head_w_ref, head_shift_ref, pool_ref,
                     cls_w_ref, cls_b_ref,
                     meta_ref, w2f_ref, w2m_ref, b2_ref,
                     o_ref):
    # stem conv (bf16 MXU, f32 acc) + folded-BN shift + SiLU (f32 epilogue)
    y = jnp.dot(patches_ref[...], stem_w_ref[...],
                preferred_element_type=jnp.float32)            # (N*HW, 32)
    y = y + stem_shift_ref[...]
    y = y * jax.nn.sigmoid(y)                                  # SiLU

    # head 1x1 conv as one batched matmul + folded-BN shift + SiLU
    h = jnp.dot(y.astype(head_w_ref.dtype), head_w_ref[...],
                preferred_element_type=jnp.float32)            # (N*HW, 1280)
    h = h + head_shift_ref[...]
    h = h * jax.nn.sigmoid(h)

    # per-batch global average pool as a tiny pooling matmul (MXU)
    feat = jnp.dot(pool_ref[...], h,
                   preferred_element_type=jnp.float32)         # (N, 1280)

    # classifier Linear(1280 -> 128); dropout == identity in eval mode
    z = jnp.dot(feat.astype(cls_w_ref.dtype), cls_w_ref[...],
                preferred_element_type=jnp.float32)            # (N, 128)
    z = z + cls_b_ref[...]

    # concat(metadata) + Linear(140 -> 1), realized as split VPU multiply
    # + lane reduce (avoids a 1-column MXU matmul / masked wide stores)
    out_f = jnp.sum(z * w2f_ref[...], axis=-1, keepdims=True)              # (N, 1)
    out_m = jnp.sum(meta_ref[...] * w2m_ref[...], axis=-1, keepdims=True)  # (N, 1)
    o_ref[...] = out_f + out_m + b2_ref[...]


def pet_fused(patches, stem_w, stem_shift, head_w, head_shift, pool,
              cls_w, cls_b, meta, w2f, w2m, b2):
    args = (patches, stem_w, stem_shift, head_w, head_shift, pool,
            cls_w, cls_b, meta, w2f, w2m, b2)
    n = pool.shape[0]

    def full_spec(a):
        nd = a.ndim
        return pl.BlockSpec(a.shape, lambda i, _nd=nd: (0,) * _nd)

    return pl.pallas_call(
        fused_pet_kernel,
        out_shape=jax.ShapeDtypeStruct((n, 1), jnp.float32),
        grid=(1,),
        in_specs=[full_spec(a) for a in args],
        out_specs=pl.BlockSpec((n, 1), lambda i: (0, 0)),
        compiler_params=pltpu.CompilerParams(
            dimension_semantics=("arbitrary",)),
    )(*args)


# ---------------------------------------------------------------------------
# Wrapper-side glue (pure JAX, under the same jit)
# ---------------------------------------------------------------------------
def im2col_3x3_s2_same(x_nhwc):
    # TF-"SAME" padding for 16 -> 8 with k=3, s=2: pad 0 before, 1 after.
    n, h, w, _ = x_nhwc.shape
    ho, wo = h // 2, w // 2
    xp = jnp.pad(x_nhwc, ((0, 0), (0, 1), (0, 1), (0, 0)))
    pieces = []
    for kh in range(3):
        for kw in range(3):
            pieces.append(xp[:, kh:kh + 2 * ho - 1:2, kw:kw + 2 * wo - 1:2, :])
    patches = jnp.stack(pieces, axis=3)                # (n, ho, wo, 9, c)
    return patches.reshape(n * ho * wo, 9 * x_nhwc.shape[3])


def fold_bn(gamma, beta, mean, var, eps=BN_EPS):
    scale = gamma / jnp.sqrt(var + eps)
    shift = beta - mean * scale
    return scale.reshape(1, -1), shift.reshape(1, -1)


@jax.jit
def pet_model_forward(image_nchw, metadata, params):
    # NCHW (PyTorch) -> NHWC so channels ride the lane axis
    x = jnp.transpose(image_nchw, (0, 2, 3, 1)).astype(jnp.float32)
    n = x.shape[0]
    hw = (x.shape[1] // 2) * (x.shape[2] // 2)

    # im2col for the stride-2 stem conv; K zero-padded 27 -> 32
    patches = im2col_3x3_s2_same(x)
    patches = jnp.pad(patches, ((0, 0), (0, K_PAD - patches.shape[1])))

    # fold BN scale into the conv weights (wrapper-side, done once under jit)
    stem_scale, stem_shift = fold_bn(*params["stem_bn"])
    head_scale, head_shift = fold_bn(*params["head_bn"])
    stem_w = jnp.pad(params["stem_w"], ((0, K_PAD - K_RAW), (0, 0))) * stem_scale
    head_w = params["head_w"] * head_scale

    # bf16 MXU operands (f32 accumulation + f32 epilogue inside the kernel)
    patches = patches.astype(jnp.bfloat16)
    stem_w = stem_w.astype(jnp.bfloat16)
    head_w = head_w.astype(jnp.bfloat16)
    cls_w = params["cls_w"].astype(jnp.bfloat16)

    # per-batch average-pool matrix: feat = pool @ silu(head_conv(...))
    pool = jnp.repeat(jnp.eye(n, dtype=jnp.float32), hw, axis=1) / float(hw)

    return pet_fused(
        patches, stem_w, stem_shift, head_w, head_shift, pool,
        cls_w, params["cls_b"],
        metadata.astype(jnp.float32),
        params["out_w_feat"], params["out_w_meta"], params["out_b"],
    )                                                   # (N, 1)


def init_params(key):
    ks = jax.random.split(key, 8)
    stem_w = (jax.random.normal(ks[0], (3, 3, 3, C_STEM), jnp.float32) * 0.1)
    stem_w = stem_w.reshape(K_RAW, C_STEM)              # (kh*kw*cin, cout)
    stem_bn = (jnp.ones((C_STEM,)),                     # gamma
               jnp.zeros((C_STEM,)),                    # beta
               jax.random.normal(ks[1], (C_STEM,)) * 0.01,   # running mean
               jnp.ones((C_STEM,)))                     # running var
    head_w = jax.random.normal(ks[2], (C_STEM, C_HEAD), jnp.float32) * 0.05
    head_bn = (jnp.ones((C_HEAD,)),
               jnp.zeros((C_HEAD,)),
               jax.random.normal(ks[3], (C_HEAD,)) * 0.01,
               jnp.ones((C_HEAD,)))
    cls_w = jax.random.normal(ks[4], (C_HEAD, C_CLS), jnp.float32) * 0.02
    cls_b = jax.random.normal(ks[5], (1, C_CLS), jnp.float32) * 0.01
    out_w = jax.random.normal(ks[6], (1, C_CLS + C_META), jnp.float32) * 0.05
    out_b = jax.random.normal(ks[7], (1, 1), jnp.float32) * 0.01
    return dict(
        stem_w=stem_w, stem_bn=stem_bn,
        head_w=head_w, head_bn=head_bn,
        cls_w=cls_w, cls_b=cls_b,
        out_w_feat=out_w[:, :C_CLS],                    # (1, 128)
        out_w_meta=out_w[:, C_CLS:],                    # (1, 12)
        out_b=out_b,                                    # (1, 1)
    )


if __name__ == "__main__":
    key = jax.random.PRNGKey(0)
    k_img, k_meta, k_par = jax.random.split(key, 3)

    image = jax.random.normal(k_img, (N_BATCH, C_IN, H_IMG, W_IMG), jnp.float32)  # NCHW
    metadata = jax.random.normal(k_meta, (N_BATCH, C_META), jnp.float32)
    params = init_params(k_par)

    out = pet_model_forward(image, metadata, params)
    out = jax.block_until_ready(out)
    assert out.shape == (N_BATCH, 1) and out.dtype == jnp.float32
    print("KERNEL_OK")
</pallas_src>

<mosaic_0001>
module attributes {stable_mosaic.version = 11 : i64} {
  func.func @fused_pet_kernel(%arg0: i32, %arg1: memref<128x32xbf16, #tpu.memory_space<vmem>>, %arg2: memref<32x32xbf16, #tpu.memory_space<vmem>>, %arg3: memref<1x32xf32, #tpu.memory_space<vmem>>, %arg4: memref<32x1280xbf16, #tpu.memory_space<vmem>>, %arg5: memref<1x1280xf32, #tpu.memory_space<vmem>>, %arg6: memref<2x128xf32, #tpu.memory_space<vmem>>, %arg7: memref<1280x128xbf16, #tpu.memory_space<vmem>>, %arg8: memref<1x128xf32, #tpu.memory_space<vmem>>, %arg9: memref<2x12xf32, #tpu.memory_space<vmem>>, %arg10: memref<1x128xf32, #tpu.memory_space<vmem>>, %arg11: memref<1x12xf32, #tpu.memory_space<vmem>>, %arg12: memref<1x1xf32, #tpu.memory_space<vmem>>, %arg13: memref<2x1xf32, #tpu.memory_space<vmem>>) attributes {dimension_semantics = [#tpu.dimension_semantics<arbitrary>], iteration_bounds = array<i64: 1>, scalar_prefetch = 0 : i64, scratch_operands = 0 : i64, tpu.core_type = #tpu.core_type<tc>, window_params = [{pipeline_mode = #tpu.pipeline_mode<synchronous>, transform_indices = @transform_0, window_bounds = array<i64: 128, 32>}, {pipeline_mode = #tpu.pipeline_mode<synchronous>, transform_indices = @transform_1, window_bounds = array<i64: 32, 32>}, {pipeline_mode = #tpu.pipeline_mode<synchronous>, transform_indices = @transform_2, window_bounds = array<i64: 1, 32>}, {pipeline_mode = #tpu.pipeline_mode<synchronous>, transform_indices = @transform_3, window_bounds = array<i64: 32, 1280>}, {pipeline_mode = #tpu.pipeline_mode<synchronous>, transform_indices = @transform_4, window_bounds = array<i64: 1, 1280>}, {pipeline_mode = #tpu.pipeline_mode<synchronous>, transform_indices = @transform_5, window_bounds = array<i64: 2, 128>}, {pipeline_mode = #tpu.pipeline_mode<synchronous>, transform_indices = @transform_6, window_bounds = array<i64: 1280, 128>}, {pipeline_mode = #tpu.pipeline_mode<synchronous>, transform_indices = @transform_7, window_bounds = array<i64: 1, 128>}, {pipeline_mode = #tpu.pipeline_mode<synchronous>, transform_indices = @transform_8, window_bounds = array<i64: 2, 12>}, {pipeline_mode = #tpu.pipeline_mode<synchronous>, transform_indices = @transform_9, window_bounds = array<i64: 1, 128>}, {pipeline_mode = #tpu.pipeline_mode<synchronous>, transform_indices = @transform_10, window_bounds = array<i64: 1, 12>}, {pipeline_mode = #tpu.pipeline_mode<synchronous>, transform_indices = @transform_11, window_bounds = array<i64: 1, 1>}, {pipeline_mode = #tpu.pipeline_mode<synchronous>, transform_indices = @transform_12, window_bounds = array<i64: 2, 1>}]} {
    %c0 = arith.constant 0 : index
    %c0_0 = arith.constant 0 : index
    %0 = vector.load %arg1[%c0, %c0_0] : memref<128x32xbf16, #tpu.memory_space<vmem>>, vector<128x32xbf16>
    %c0_1 = arith.constant 0 : index
    %c0_2 = arith.constant 0 : index
    %1 = vector.load %arg2[%c0_1, %c0_2] : memref<32x32xbf16, #tpu.memory_space<vmem>>, vector<32x32xbf16>
    %cst = arith.constant dense<0.000000e+00> : vector<128x32xf32>
    %2 = tpu.matmul %0, %1, %cst {dimension_numbers = #tpu.dot_dimension_numbers<[1], [0], [0], [1], [0, 0, 1, 1], [], []>} : vector<128x32xbf16>, vector<32x32xbf16>, vector<128x32xf32> -> vector<128x32xf32>
    %c0_3 = arith.constant 0 : index
    %c0_4 = arith.constant 0 : index
    %3 = vector.load %arg3[%c0_3, %c0_4] : memref<1x32xf32, #tpu.memory_space<vmem>>, vector<1x32xf32>
    %4 = vector.broadcast %3 : vector<1x32xf32> to vector<128x32xf32>
    %5 = arith.addf %2, %4 : vector<128x32xf32>
    %6 = arith.negf %5 : vector<128x32xf32>
    %7 = math.exp %6 : vector<128x32xf32>
    %cst_5 = arith.constant 1.000000e+00 : f32
    %8 = vector.broadcast %cst_5 : f32 to vector<128x32xf32>
    %9 = arith.addf %8, %7 : vector<128x32xf32>
    %10 = arith.divf %8, %9 : vector<128x32xf32>
    %11 = arith.mulf %5, %10 : vector<128x32xf32>
    %12 = arith.truncf %11 : vector<128x32xf32> to vector<128x32xbf16>
    %c0_6 = arith.constant 0 : index
    %c0_7 = arith.constant 0 : index
    %13 = vector.load %arg4[%c0_6, %c0_7] : memref<32x1280xbf16, #tpu.memory_space<vmem>>, vector<32x1280xbf16>
    %cst_8 = arith.constant dense<0.000000e+00> : vector<128x1280xf32>
    %14 = tpu.matmul %12, %13, %cst_8 {dimension_numbers = #tpu.dot_dimension_numbers<[1], [0], [0], [1], [0, 0, 1, 1], [], []>} : vector<128x32xbf16>, vector<32x1280xbf16>, vector<128x1280xf32> -> vector<128x1280xf32>
    %c0_9 = arith.constant 0 : index
    %c0_10 = arith.constant 0 : index
    %15 = vector.load %arg5[%c0_9, %c0_10] : memref<1x1280xf32, #tpu.memory_space<vmem>>, vector<1x1280xf32>
    %16 = vector.broadcast %15 : vector<1x1280xf32> to vector<128x1280xf32>
    %17 = arith.addf %14, %16 : vector<128x1280xf32>
    %18 = arith.negf %17 : vector<128x1280xf32>
    %19 = math.exp %18 : vector<128x1280xf32>
    %cst_11 = arith.constant 1.000000e+00 : f32
    %20 = vector.broadcast %cst_11 : f32 to vector<128x1280xf32>
    %21 = arith.addf %20, %19 : vector<128x1280xf32>
    %22 = arith.divf %20, %21 : vector<128x1280xf32>
    %23 = arith.mulf %17, %22 : vector<128x1280xf32>
    %c0_12 = arith.constant 0 : index
    %c0_13 = arith.constant 0 : index
    %24 = vector.load %arg6[%c0_12, %c0_13] : memref<2x128xf32, #tpu.memory_space<vmem>>, vector<2x128xf32>
    %cst_14 = arith.constant dense<0.000000e+00> : vector<2x1280xf32>
    %25 = tpu.matmul %24, %23, %cst_14 {dimension_numbers = #tpu.dot_dimension_numbers<[1], [0], [0], [1], [0, 0, 1, 1], [], []>} : vector<2x128xf32>, vector<128x1280xf32>, vector<2x1280xf32> -> vector<2x1280xf32>
    %26 = arith.truncf %25 : vector<2x1280xf32> to vector<2x1280xbf16>
    %c0_15 = arith.constant 0 : index
    %c0_16 = arith.constant 0 : index
    %27 = vector.load %arg7[%c0_15, %c0_16] : memref<1280x128xbf16, #tpu.memory_space<vmem>>, vector<1280x128xbf16>
    %cst_17 = arith.constant dense<0.000000e+00> : vector<2x128xf32>
    %28 = tpu.matmul %26, %27, %cst_17 {dimension_numbers = #tpu.dot_dimension_numbers<[1], [0], [0], [1], [0, 0, 1, 1], [], []>} : vector<2x1280xbf16>, vector<1280x128xbf16>, vector<2x128xf32> -> vector<2x128xf32>
    %c0_18 = arith.constant 0 : index
    %c0_19 = arith.constant 0 : index
    %29 = vector.load %arg8[%c0_18, %c0_19] : memref<1x128xf32, #tpu.memory_space<vmem>>, vector<1x128xf32>
    %30 = vector.broadcast %29 : vector<1x128xf32> to vector<2x128xf32>
    %31 = arith.addf %28, %30 : vector<2x128xf32>
    %c0_20 = arith.constant 0 : index
    %c0_21 = arith.constant 0 : index
    %32 = vector.load %arg10[%c0_20, %c0_21] : memref<1x128xf32, #tpu.memory_space<vmem>>, vector<1x128xf32>
    %33 = vector.broadcast %32 : vector<1x128xf32> to vector<2x128xf32>
    %34 = arith.mulf %31, %33 : vector<2x128xf32>
    %cst_22 = arith.constant dense<0.000000e+00> : vector<2xf32>
    %35 = vector.multi_reduction <add>, %34, %cst_22 [1] : vector<2x128xf32> to vector<2xf32>
    %36 = vector.shape_cast %35 : vector<2xf32> to vector<2x1xf32>
    %c0_23 = arith.constant 0 : index
    %c0_24 = arith.constant 0 : index
    %37 = vector.load %arg9[%c0_23, %c0_24] : memref<2x12xf32, #tpu.memory_space<vmem>>, vector<2x12xf32>
    %c0_25 = arith.constant 0 : index
    %c0_26 = arith.constant 0 : index
    %38 = vector.load %arg11[%c0_25, %c0_26] : memref<1x12xf32, #tpu.memory_space<vmem>>, vector<1x12xf32>
    %39 = vector.broadcast %38 : vector<1x12xf32> to vector<2x12xf32>
    %40 = arith.mulf %37, %39 : vector<2x12xf32>
    %cst_27 = arith.constant dense<0.000000e+00> : vector<2xf32>
    %41 = vector.multi_reduction <add>, %40, %cst_27 [1] : vector<2x12xf32> to vector<2xf32>
    %42 = vector.shape_cast %41 : vector<2xf32> to vector<2x1xf32>
    %43 = arith.addf %36, %42 : vector<2x1xf32>
    %c0_28 = arith.constant 0 : index
    %c0_29 = arith.constant 0 : index
    %44 = vector.load %arg12[%c0_28, %c0_29] : memref<1x1xf32, #tpu.memory_space<vmem>>, vector<1x1xf32>
    %45 = vector.broadcast %44 : vector<1x1xf32> to vector<2x1xf32>
    %46 = arith.addf %43, %45 : vector<2x1xf32>
    %c0_30 = arith.constant 0 : index
    %c0_31 = arith.constant 0 : index
    %47 = vector.load %arg13[%c0_30, %c0_31] : memref<2x1xf32, #tpu.memory_space<vmem>>, vector<2x1xf32>
    tpu.vector_store %arg13[%c0_30, %c0_31], %46 {strides = array<i32>} : memref<2x1xf32, #tpu.memory_space<vmem>>, vector<2x1xf32>,
    return
  }
  func.func @transform_0(%arg0: i32) -> (i32, i32) {
    %c0_i32 = arith.constant 0 : i32
    %c0_i32_0 = arith.constant 0 : i32
    %c0_i32_1 = arith.constant 0 : i32
    return %c0_i32, %c0_i32_0 : i32, i32
  }
  func.func @transform_1(%arg0: i32) -> (i32, i32) {
    %c0_i32 = arith.constant 0 : i32
    %c0_i32_0 = arith.constant 0 : i32
    %c0_i32_1 = arith.constant 0 : i32
    return %c0_i32, %c0_i32_0 : i32, i32
  }
  func.func @transform_2(%arg0: i32) -> (i32, i32) {
    %c0_i32 = arith.constant 0 : i32
    %c0_i32_0 = arith.constant 0 : i32
    %c0_i32_1 = arith.constant 0 : i32
    return %c0_i32, %c0_i32_0 : i32, i32
  }
  func.func @transform_3(%arg0: i32) -> (i32, i32) {
    %c0_i32 = arith.constant 0 : i32
    %c0_i32_0 = arith.constant 0 : i32
    %c0_i32_1 = arith.constant 0 : i32
    return %c0_i32, %c0_i32_0 : i32, i32
  }
  func.func @transform_4(%arg0: i32) -> (i32, i32) {
    %c0_i32 = arith.constant 0 : i32
    %c0_i32_0 = arith.constant 0 : i32
    %c0_i32_1 = arith.constant 0 : i32
    return %c0_i32, %c0_i32_0 : i32, i32
  }
  func.func @transform_5(%arg0: i32) -> (i32, i32) {
    %c0_i32 = arith.constant 0 : i32
    %c0_i32_0 = arith.constant 0 : i32
    %c0_i32_1 = arith.constant 0 : i32
    return %c0_i32, %c0_i32_0 : i32, i32
  }
  func.func @transform_6(%arg0: i32) -> (i32, i32) {
    %c0_i32 = arith.constant 0 : i32
    %c0_i32_0 = arith.constant 0 : i32
    %c0_i32_1 = arith.constant 0 : i32
    return %c0_i32, %c0_i32_0 : i32, i32
  }
  func.func @transform_7(%arg0: i32) -> (i32, i32) {
    %c0_i32 = arith.constant 0 : i32
    %c0_i32_0 = arith.constant 0 : i32
    %c0_i32_1 = arith.constant 0 : i32
    return %c0_i32, %c0_i32_0 : i32, i32
  }
  func.func @transform_8(%arg0: i32) -> (i32, i32) {
    %c0_i32 = arith.constant 0 : i32
    %c0_i32_0 = arith.constant 0 : i32
    %c0_i32_1 = arith.constant 0 : i32
    return %c0_i32, %c0_i32_0 : i32, i32
  }
  func.func @transform_9(%arg0: i32) -> (i32, i32) {
    %c0_i32 = arith.constant 0 : i32
    %c0_i32_0 = arith.constant 0 : i32
    %c0_i32_1 = arith.constant 0 : i32
    return %c0_i32, %c0_i32_0 : i32, i32
  }
  func.func @transform_10(%arg0: i32) -> (i32, i32) {
    %c0_i32 = arith.constant 0 : i32
    %c0_i32_0 = arith.constant 0 : i32
    %c0_i32_1 = arith.constant 0 : i32
    return %c0_i32, %c0_i32_0 : i32, i32
  }
  func.func @transform_11(%arg0: i32) -> (i32, i32) {
    %c0_i32 = arith.constant 0 : i32
    %c0_i32_0 = arith.constant 0 : i32
    %c0_i32_1 = arith.constant 0 : i32
    return %c0_i32, %c0_i32_0 : i32, i32
  }
  func.func @transform_12(%arg0: i32) -> (i32, i32) {
    %c0_i32 = arith.constant 0 : i32
    %c0_i32_0 = arith.constant 0 : i32
    %c0_i32_1 = arith.constant 0 : i32
    return %c0_i32, %c0_i32_0 : i32, i32
  }
}

</mosaic_0001>

<llo_original>
// kernel: pet_model_forward.1
$region0: #{pet_model_forward.1}
  #allocation0 [shape = 'u32[]', space=smem, size = 0x4, offset = 0x4, fixed_abs, tag = 'smem constant byte address 0x4 - core index']
  #allocation1 [shape = 'u32[72,128]{1,0:T(1,128)}', space=vmem, size = 0x9000, scoped, tag = 'internal scratch']
  #allocation2 [shape = 'f32[1,1]{1,0:T(1,128)S(1)}', space=vmem, size = 0x200, scoped, tag = 'scoped memory for pet_model_forward.1']
  %s0 = inlined_call_operand.vmem [shape: bf16[128,32], index: 0, kind: input, shape index: {}]
  %s1 = inlined_call_operand.vmem [shape: bf16[32,32], index: 1, kind: input, shape index: {}]
  %s2 = inlined_call_operand.vmem [shape: f32[1,32], index: 2, kind: input, shape index: {}]
  %s3 = inlined_call_operand.vmem [shape: bf16[32,1280], index: 3, kind: input, shape index: {}]
  %s4 = inlined_call_operand.vmem [shape: f32[1,1280], index: 4, kind: input, shape index: {}]
  %s5 = inlined_call_operand.vmem [shape: f32[2,128], index: 5, kind: input, shape index: {}]
  %s6 = inlined_call_operand.vmem [shape: bf16[1280,128], index: 6, kind: input, shape index: {}]
  %s7 = inlined_call_operand.vmem [shape: f32[1,128], index: 7, kind: input, shape index: {}]
  %s8 = inlined_call_operand.vmem [shape: f32[2,12], index: 8, kind: input, shape index: {}]
  %s9 = inlined_call_operand.vmem [shape: f32[1,128], index: 9, kind: input, shape index: {}]
  %s10 = inlined_call_operand.vmem [shape: f32[1,12], index: 10, kind: input, shape index: {}]
  %s11 = inlined_call_operand.<no memory space> [shape: f32[1,1], index: 11, kind: input, shape index: {}]
  %s12 = inlined_call_operand.vmem [shape: f32[2,1], index: 12, kind: output, shape index: {}]
  %s13 = sld [smem:[#allocation0]]
  $region58: #{pet_model_forward.1} parent=0
    _
  %s15 = ssub.s32 1, %s13
  %s16 = scalar_select 0, %s15, %s13
  %v17 = vstv %s11
  %18 = vst [vmem:[#allocation2] sm:$0x1] %v17
  // Predicated region
  $region2: #{pet_model_forward.1} parent=0 // pred_check
    _
  $region3: #{pet_model_forward.1} parent=0 // pred_check_branch
    %20 = sbr.rel (0) target = $region5
  $region4: #{pet_model_forward.1} parent=0 // pred_region
    _
  $region5: #{pet_model_forward.1} parent=0 // pred_fallthru
    _
  // Predicated region
  $region6: #{pet_model_forward.1} parent=0 // pred_check
    _
  $region7: #{pet_model_forward.1} parent=0 // pred_check_branch
    %22 = sbr.rel (0) target = $region9
  $region8: #{pet_model_forward.1} parent=0 // pred_region
    _
  $region9: #{pet_model_forward.1} parent=0 // pred_fallthru
    _
  // Predicated region
  $region10: #{pet_model_forward.1} parent=0 // pred_check
    _
  $region11: #{pet_model_forward.1} parent=0 // pred_check_branch
    %24 = sbr.rel (0) target = $region13
  $region12: #{pet_model_forward.1} parent=0 // pred_region
    _
  $region13: #{pet_model_forward.1} parent=0 // pred_fallthru
    _
  // Predicated region
  $region14: #{pet_model_forward.1} parent=0 // pred_check
    _
  $region15: #{pet_model_forward.1} parent=0 // pred_check_branch
    %26 = sbr.rel (0) target = $region17
  $region16: #{pet_model_forward.1} parent=0 // pred_region
    _
  $region17: #{pet_model_forward.1} parent=0 // pred_fallthru
    _
  // Predicated region
  $region18: #{pet_model_forward.1} parent=0 // pred_check
    _
  $region19: #{pet_model_forward.1} parent=0 // pred_check_branch
    %28 = sbr.rel (0) target = $region21
  $region20: #{pet_model_forward.1} parent=0 // pred_region
    _
  $region21: #{pet_model_forward.1} parent=0 // pred_fallthru
    _
  // Predicated region
  $region22: #{pet_model_forward.1} parent=0 // pred_check
    _
  $region23: #{pet_model_forward.1} parent=0 // pred_check_branch
    %30 = sbr.rel (0) target = $region25
  $region24: #{pet_model_forward.1} parent=0 // pred_region
    _
  $region25: #{pet_model_forward.1} parent=0 // pred_fallthru
    _
  // Predicated region
  $region26: #{pet_model_forward.1} parent=0 // pred_check
    _
  $region27: #{pet_model_forward.1} parent=0 // pred_check_branch
    %32 = sbr.rel (0) target = $region29
  $region28: #{pet_model_forward.1} parent=0 // pred_region
    _
  $region29: #{pet_model_forward.1} parent=0 // pred_fallthru
    _
  // Predicated region
  $region30: #{pet_model_forward.1} parent=0 // pred_check
    _
  $region31: #{pet_model_forward.1} parent=0 // pred_check_branch
    %34 = sbr.rel (0) target = $region33
  $region32: #{pet_model_forward.1} parent=0 // pred_region
    _
  $region33: #{pet_model_forward.1} parent=0 // pred_fallthru
    _
  // Predicated region
  $region34: #{pet_model_forward.1} parent=0 // pred_check
    _
  $region35: #{pet_model_forward.1} parent=0 // pred_check_branch
    %36 = sbr.rel (0) target = $region37
  $region36: #{pet_model_forward.1} parent=0 // pred_region
    _
  $region37: #{pet_model_forward.1} parent=0 // pred_fallthru
    _
  // Predicated region
  $region38: #{pet_model_forward.1} parent=0 // pred_check
    _
  $region39: #{pet_model_forward.1} parent=0 // pred_check_branch
    %38 = sbr.rel (0) target = $region41
  $region40: #{pet_model_forward.1} parent=0 // pred_region
    _
  $region41: #{pet_model_forward.1} parent=0 // pred_fallthru
    _
  // Predicated region
  $region42: #{pet_model_forward.1} parent=0 // pred_check
    _
  $region43: #{pet_model_forward.1} parent=0 // pred_check_branch
    %40 = sbr.rel (0) target = $region45
  $region44: #{pet_model_forward.1} parent=0 // pred_region
    _
  $region45: #{pet_model_forward.1} parent=0 // pred_fallthru
    _
  // Predicated region
  $region46: #{pet_model_forward.1} parent=0 // pred_check
    _
  $region47: #{pet_model_forward.1} parent=0 // pred_check_branch
    %42 = sbr.rel (0) target = $region49
  $region48: #{pet_model_forward.1} parent=0 // pred_region
    _
  $region49: #{pet_model_forward.1} parent=0 // pred_fallthru
    _
  %v44 = vld [vmem:[%s0] sm:$0xf]
  %v45 = vld [vmem:[%s0 + $0x4] sm:$0xf]
  %v46 = vld [vmem:[%s0 + $0x8] sm:$0xf]
  %v47 = vld [vmem:[%s0 + $0xc] sm:$0xf]
  %v48 = vld [vmem:[%s0 + $0x10] sm:$0xf]
  %v49 = vld [vmem:[%s0 + $0x14] sm:$0xf]
  %v50 = vld [vmem:[%s0 + $0x18] sm:$0xf]
  %v51 = vld [vmem:[%s0 + $0x1c] sm:$0xf]
  %v52 = vld [vmem:[%s0 + $0x20] sm:$0xf]
  %v53 = vld [vmem:[%s0 + $0x24] sm:$0xf]
  %v54 = vld [vmem:[%s0 + $0x28] sm:$0xf]
  %v55 = vld [vmem:[%s0 + $0x2c] sm:$0xf]
  %v56 = vld [vmem:[%s0 + $0x30] sm:$0xf]
  %v57 = vld [vmem:[%s0 + $0x34] sm:$0xf]
  %v58 = vld [vmem:[%s0 + $0x38] sm:$0xf]
  %v59 = vld [vmem:[%s0 + $0x3c] sm:$0xf]
  %v60 = vld [vmem:[%s1] sm:$0xf]
  %v61 = vld [vmem:[%s1 + $0x4] sm:$0xf]
  %v62 = vld [vmem:[%s1 + $0x8] sm:$0xf]
  %v63 = vld [vmem:[%s1 + $0xc] sm:$0xf]
  %v64 = vld [vmem:[%s2] sm:$0x1]
  %v66 = vperm.slane %v64, 0
  %v84 = vunpack.c.l.b16 %v44
  %v85 = vunpack.c.l.b16 %v45
  %v86 = vunpack.c.l.b16 %v46
  %v87 = vunpack.c.l.b16 %v47
  %v88 = vunpack.c.l.b16 %v48
  %v89 = vunpack.c.l.b16 %v49
  %v90 = vunpack.c.l.b16 %v50
  %v91 = vunpack.c.l.b16 %v51
  %v92 = vunpack.c.l.b16 %v52
  %v93 = vunpack.c.l.b16 %v53
  %v94 = vunpack.c.l.b16 %v54
  %v95 = vunpack.c.l.b16 %v55
  %v96 = vunpack.c.l.b16 %v56
  %v97 = vunpack.c.l.b16 %v57
  %v98 = vunpack.c.l.b16 %v58
  %v99 = vunpack.c.l.b16 %v59
  %v100 = vpack.c.b16 %v85, %v84
  %v101 = vpack.c.b16 %v87, %v86
  %v102 = vpack.c.b16 %v89, %v88
  %v103 = vpack.c.b16 %v91, %v90
  %v104 = vpack.c.b16 %v93, %v92
  %v105 = vpack.c.b16 %v95, %v94
  %v106 = vpack.c.b16 %v97, %v96
  %v107 = vpack.c.b16 %v99, %v98
  %v112 = vunpack.c.l.b16 %v60
  %v113 = vunpack.c.l.b16 %v61
  %v114 = vunpack.c.l.b16 %v62
  %v115 = vunpack.c.l.b16 %v63
  %v116 = vpack.c.b16 %v113, %v112
  %v117 = vpack.c.b16 %v115, %v114
  %vm120 = vcmask 261120
  %v122 = vsel %vm120, %v100, 0
  %v125 = vsel %vm120, %v101, 0
  %v128 = vsel %vm120, %v102, 0
  %v131 = vsel %vm120, %v103, 0
  %v134 = vsel %vm120, %v104, 0
  %v137 = vsel %vm120, %v105, 0
  %v140 = vsel %vm120, %v106, 0
  %v143 = vsel %vm120, %v107, 0
  %145 = vmatpush.bf16.msra.mxu0 0
  %146 = vmatpush.bf16.msra.mxu0 0
  %147 = vmatpush.bf16.msra.mxu0 0
  %148 = vmatpush.bf16.msra.mxu0 0
  %149 = vmatpush.bf16.msra.mxu0 0
  %150 = vmatpush.bf16.msra.mxu0 0
  %151 = vmatpush.bf16.msra.mxu0 %v117
  %152 = vmatpush.bf16.msra.mxu0 %v116
  %153 = vmatmul.bf16.gmra.mxu0 %v122
  %v154 = vpop.f32.mrf.mxu0
  %v155 = vadd.f32 %v66, %v154
  %v156 = vpop.f32.mrf.mxu0
  %v157 = vadd.f32 %v66, %v156
  %158 = vmatmul.bf16.gmra.mxu0 %v125
  %v159 = vpop.f32.mrf.mxu0
  %v160 = vadd.f32 %v66, %v159
  %v161 = vpop.f32.mrf.mxu0
  %v162 = vadd.f32 %v66, %v161
  %163 = vmatmul.bf16.gmra.mxu0 %v128
  %v164 = vpop.f32.mrf.mxu0
  %v165 = vadd.f32 %v66, %v164
  %v166 = vpop.f32.mrf.mxu0
  %v167 = vadd.f32 %v66, %v166
  %168 = vmatmul.bf16.gmra.mxu0 %v131
  %v169 = vpop.f32.mrf.mxu0
  %v170 = vadd.f32 %v66, %v169
  %v171 = vpop.f32.mrf.mxu0
  %v172 = vadd.f32 %v66, %v171
  %173 = vmatmul.bf16.gmra.mxu0 %v134
  %v174 = vpop.f32.mrf.mxu0
  %v175 = vadd.f32 %v66, %v174
  %v176 = vpop.f32.mrf.mxu0
  %v177 = vadd.f32 %v66, %v176
  %178 = vmatmul.bf16.gmra.mxu0 %v137
  %v179 = vpop.f32.mrf.mxu0
  %v180 = vadd.f32 %v66, %v179
  %v181 = vpop.f32.mrf.mxu0
  %v182 = vadd.f32 %v66, %v181
  %183 = vmatmul.bf16.gmra.mxu0 %v140
  %v184 = vpop.f32.mrf.mxu0
  %v185 = vadd.f32 %v66, %v184
  %v186 = vpop.f32.mrf.mxu0
  %v187 = vadd.f32 %v66, %v186
  %188 = vmatmul.bf16.gmra.mxu0 %v143
  %v189 = vpop.f32.mrf.mxu0
  %v190 = vadd.f32 %v66, %v189
  %v191 = vpop.f32.mrf.mxu0
  %v192 = vadd.f32 %v66, %v191
  %193 = vdwg.mxu0
  %v194 = vxor.u32 %v155, 2147483648
  %v195 = vxor.u32 %v157, 2147483648
  %v196 = vxor.u32 %v160, 2147483648
  %v197 = vxor.u32 %v162, 2147483648
  %v198 = vxor.u32 %v165, 2147483648
  %v199 = vxor.u32 %v167, 2147483648
  %v200 = vxor.u32 %v170, 2147483648
  %v201 = vxor.u32 %v172, 2147483648
  %v202 = vxor.u32 %v175, 2147483648
  %v203 = vxor.u32 %v177, 2147483648
  %v204 = vxor.u32 %v180, 2147483648
  %v205 = vxor.u32 %v182, 2147483648
  %v206 = vxor.u32 %v185, 2147483648
  %v207 = vxor.u32 %v187, 2147483648
  %v208 = vxor.u32 %v190, 2147483648
  %v209 = vxor.u32 %v192, 2147483648
  %v210 = vmul.f32 %v194, 1.442695
  %v211 = vpow.pop %v210
  %v212 = vmul.f32 %v195, 1.442695
  %v213 = vpow.pop %v212
  %v214 = vmul.f32 %v196, 1.442695
  %v215 = vpow.pop %v214
  %v216 = vmul.f32 %v197, 1.442695
  %v217 = vpow.pop %v216
  %v218 = vmul.f32 %v198, 1.442695
  %v219 = vpow.pop %v218
  %v220 = vmul.f32 %v199, 1.442695
  %v221 = vpow.pop %v220
  %v222 = vmul.f32 %v200, 1.442695
  %v223 = vpow.pop %v222
  %v224 = vmul.f32 %v201, 1.442695
  %v225 = vpow.pop %v224
  %v226 = vmul.f32 %v202, 1.442695
  %v227 = vpow.pop %v226
  %v228 = vmul.f32 %v203, 1.442695
  %v229 = vpow.pop %v228
  %v230 = vmul.f32 %v204, 1.442695
  %v231 = vpow.pop %v230
  %v232 = vmul.f32 %v205, 1.442695
  %v233 = vpow.pop %v232
  %v234 = vmul.f32 %v206, 1.442695
  %v235 = vpow.pop %v234
  %v236 = vmul.f32 %v207, 1.442695
  %v237 = vpow.pop %v236
  %v238 = vmul.f32 %v208, 1.442695
  %v239 = vpow.pop %v238
  %v240 = vmul.f32 %v209, 1.442695
  %v241 = vpow.pop %v240
  %v242 = vadd.f32 %v211, 1.0
  %v243 = vadd.f32 %v213, 1.0
  %v244 = vadd.f32 %v215, 1.0
  %v245 = vadd.f32 %v217, 1.0
  %v246 = vadd.f32 %v219, 1.0
  %v247 = vadd.f32 %v221, 1.0
  %v248 = vadd.f32 %v223, 1.0
  %v249 = vadd.f32 %v225, 1.0
  %v250 = vadd.f32 %v227, 1.0
  %v251 = vadd.f32 %v229, 1.0
  %v252 = vadd.f32 %v231, 1.0
  %v253 = vadd.f32 %v233, 1.0
  %v254 = vadd.f32 %v235, 1.0
  %v255 = vadd.f32 %v237, 1.0
  %v256 = vadd.f32 %v239, 1.0
  %v257 = vadd.f32 %v241, 1.0
  %v258 = vrcp.pop %v242
  %v259 = vmul.f32 %v242, %v258
  %v260 = vsub.f32 1.0, %v259
  %v261 = vmul.f32 %v258, %v260
  %v262 = vadd.f32 %v258, %v261
  %vm263 = vweird.f32 %v242
  %vm264 = vweird.f32 %v258
  %vm265 = vmor %vm263, %vm264
  %v266 = vsel %vm265, %v258, %v262
  %v267 = vand.u32 2147483647, %v242
  %vm268 = vcmp.eq.f32.partialorder %v267, 8.507059e+37
  %v269 = vand.u32 %v242, 2147483648
  %v270 = vor.u32 1.1754944e-38, %v269
  %v271 = vsel %vm268, %v270, %v266
  %v272 = vmul.f32 1.0, %v271
  %v273 = vrcp.pop %v243
  %v274 = vmul.f32 %v243, %v273
  %v275 = vsub.f32 1.0, %v274
  %v276 = vmul.f32 %v273, %v275
  %v277 = vadd.f32 %v273, %v276
  %vm278 = vweird.f32 %v243
  %vm279 = vweird.f32 %v273
  %vm280 = vmor %vm278, %vm279
  %v281 = vsel %vm280, %v273, %v277
  %v282 = vand.u32 2147483647, %v243
  %vm283 = vcmp.eq.f32.partialorder %v282, 8.507059e+37
  %v284 = vand.u32 %v243, 2147483648
  %v285 = vor.u32 1.1754944e-38, %v284
  %v286 = vsel %vm283, %v285, %v281
  %v287 = vmul.f32 1.0, %v286
  %v288 = vrcp.pop %v244
  %v289 = vmul.f32 %v244, %v288
  %v290 = vsub.f32 1.0, %v289
  %v291 = vmul.f32 %v288, %v290
  %v292 = vadd.f32 %v288, %v291
  %vm293 = vweird.f32 %v244
  %vm294 = vweird.f32 %v288
  %vm295 = vmor %vm293, %vm294
  %v296 = vsel %vm295, %v288, %v292
  %v297 = vand.u32 2147483647, %v244
  %vm298 = vcmp.eq.f32.partialorder %v297, 8.507059e+37
  %v299 = vand.u32 %v244, 2147483648
  %v300 = vor.u32 1.1754944e-38, %v299
  %v301 = vsel %vm298, %v300, %v296
  %v302 = vmul.f32 1.0, %v301
  %v303 = vrcp.pop %v245
  %v304 = vmul.f32 %v245, %v303
  %v305 = vsub.f32 1.0, %v304
  %v306 = vmul.f32 %v303, %v305
  %v307 = vadd.f32 %v303, %v306
  %vm308 = vweird.f32 %v245
  %vm309 = vweird.f32 %v303
  %vm310 = vmor %vm308, %vm309
  %v311 = vsel %vm310, %v303, %v307
  %v312 = vand.u32 2147483647, %v245
  %vm313 = vcmp.eq.f32.partialorder %v312, 8.507059e+37
  %v314 = vand.u32 %v245, 2147483648
  %v315 = vor.u32 1.1754944e-38, %v314
  %v316 = vsel %vm313, %v315, %v311
  %v317 = vmul.f32 1.0, %v316
  %v318 = vrcp.pop %v246
  %v319 = vmul.f32 %v246, %v318
  %v320 = vsub.f32 1.0, %v319
  %v321 = vmul.f32 %v318, %v320
  %v322 = vadd.f32 %v318, %v321
  %vm323 = vweird.f32 %v246
  %vm324 = vweird.f32 %v318
  %vm325 = vmor %vm323, %vm324
  %v326 = vsel %vm325, %v318, %v322
  %v327 = vand.u32 2147483647, %v246
  %vm328 = vcmp.eq.f32.partialorder %v327, 8.507059e+37
  %v329 = vand.u32 %v246, 2147483648
  %v330 = vor.u32 1.1754944e-38, %v329
  %v331 = vsel %vm328, %v330, %v326
  %v332 = vmul.f32 1.0, %v331
  %v333 = vrcp.pop %v247
  %v334 = vmul.f32 %v247, %v333
  %v335 = vsub.f32 1.0, %v334
  %v336 = vmul.f32 %v333, %v335
  %v337 = vadd.f32 %v333, %v336
  %vm338 = vweird.f32 %v247
  %vm339 = vweird.f32 %v333
  %vm340 = vmor %vm338, %vm339
  %v341 = vsel %vm340, %v333, %v337
  %v342 = vand.u32 2147483647, %v247
  %vm343 = vcmp.eq.f32.partialorder %v342, 8.507059e+37
  %v344 = vand.u32 %v247, 2147483648
  %v345 = vor.u32 1.1754944e-38, %v344
  %v346 = vsel %vm343, %v345, %v341
  %v347 = vmul.f32 1.0, %v346
  %v348 = vrcp.pop %v248
  %v349 = vmul.f32 %v248, %v348
  %v350 = vsub.f32 1.0, %v349
  %v351 = vmul.f32 %v348, %v350
  %v352 = vadd.f32 %v348, %v351
  %vm353 = vweird.f32 %v248
  %vm354 = vweird.f32 %v348
  %vm355 = vmor %vm353, %vm354
  %v356 = vsel %vm355, %v348, %v352
  %v357 = vand.u32 2147483647, %v248
  %vm358 = vcmp.eq.f32.partialorder %v357, 8.507059e+37
  %v359 = vand.u32 %v248, 2147483648
  %v360 = vor.u32 1.1754944e-38, %v359
  %v361 = vsel %vm358, %v360, %v356
  %v362 = vmul.f32 1.0, %v361
  %v363 = vrcp.pop %v249
  %v364 = vmul.f32 %v249, %v363
  %v365 = vsub.f32 1.0, %v364
  %v366 = vmul.f32 %v363, %v365
  %v367 = vadd.f32 %v363, %v366
  %vm368 = vweird.f32 %v249
  %vm369 = vweird.f32 %v363
  %vm370 = vmor %vm368, %vm369
  %v371 = vsel %vm370, %v363, %v367
  %v372 = vand.u32 2147483647, %v249
  %vm373 = vcmp.eq.f32.partialorder %v372, 8.507059e+37
  %v374 = vand.u32 %v249, 2147483648
  %v375 = vor.u32 1.1754944e-38, %v374
  %v376 = vsel %vm373, %v375, %v371
  %v377 = vmul.f32 1.0, %v376
  %v378 = vrcp.pop %v250
  %v379 = vmul.f32 %v250, %v378
  %v380 = vsub.f32 1.0, %v379
  %v381 = vmul.f32 %v378, %v380
  %v382 = vadd.f32 %v378, %v381
  %vm383 = vweird.f32 %v250
  %vm384 = vweird.f32 %v378
  %vm385 = vmor %vm383, %vm384
  %v386 = vsel %vm385, %v378, %v382
  %v387 = vand.u32 2147483647, %v250
  %vm388 = vcmp.eq.f32.partialorder %v387, 8.507059e+37
  %v389 = vand.u32 %v250, 2147483648
  %v390 = vor.u32 1.1754944e-38, %v389
  %v391 = vsel %vm388, %v390, %v386
  %v392 = vmul.f32 1.0, %v391
  %v393 = vrcp.pop %v251
  %v394 = vmul.f32 %v251, %v393
  %v395 = vsub.f32 1.0, %v394
  %v396 = vmul.f32 %v393, %v395
  %v397 = vadd.f32 %v393, %v396
  %vm398 = vweird.f32 %v251
  %vm399 = vweird.f32 %v393
  %vm400 = vmor %vm398, %vm399
  %v401 = vsel %vm400, %v393, %v397
  %v402 = vand.u32 2147483647, %v251
  %vm403 = vcmp.eq.f32.partialorder %v402, 8.507059e+37
  %v404 = vand.u32 %v251, 2147483648
  %v405 = vor.u32 1.1754944e-38, %v404
  %v406 = vsel %vm403, %v405, %v401
  %v407 = vmul.f32 1.0, %v406
  %v408 = vrcp.pop %v252
  %v409 = vmul.f32 %v252, %v408
  %v410 = vsub.f32 1.0, %v409
  %v411 = vmul.f32 %v408, %v410
  %v412 = vadd.f32 %v408, %v411
  %vm413 = vweird.f32 %v252
  %vm414 = vweird.f32 %v408
  %vm415 = vmor %vm413, %vm414
  %v416 = vsel %vm415, %v408, %v412
  %v417 = vand.u32 2147483647, %v252
  %vm418 = vcmp.eq.f32.partialorder %v417, 8.507059e+37
  %v419 = vand.u32 %v252, 2147483648
  %v420 = vor.u32 1.1754944e-38, %v419
  %v421 = vsel %vm418, %v420, %v416
  %v422 = vmul.f32 1.0, %v421
  %v423 = vrcp.pop %v253
  %v424 = vmul.f32 %v253, %v423
  %v425 = vsub.f32 1.0, %v424
  %v426 = vmul.f32 %v423, %v425
  %v427 = vadd.f32 %v423, %v426
  %vm428 = vweird.f32 %v253
  %vm429 = vweird.f32 %v423
  %vm430 = vmor %vm428, %vm429
  %v431 = vsel %vm430, %v423, %v427
  %v432 = vand.u32 2147483647, %v253
  %vm433 = vcmp.eq.f32.partialorder %v432, 8.507059e+37
  %v434 = vand.u32 %v253, 2147483648
  %v435 = vor.u32 1.1754944e-38, %v434
  %v436 = vsel %vm433, %v435, %v431
  %v437 = vmul.f32 1.0, %v436
  %v438 = vrcp.pop %v254
  %v439 = vmul.f32 %v254, %v438
  %v440 = vsub.f32 1.0, %v439
  %v441 = vmul.f32 %v438, %v440
  %v442 = vadd.f32 %v438, %v441
  %vm443 = vweird.f32 %v254
  %vm444 = vweird.f32 %v438
  %vm445 = vmor %vm443, %vm444
  %v446 = vsel %vm445, %v438, %v442
  %v447 = vand.u32 2147483647, %v254
  %vm448 = vcmp.eq.f32.partialorder %v447, 8.507059e+37
  %v449 = vand.u32 %v254, 2147483648
  %v450 = vor.u32 1.1754944e-38, %v449
  %v451 = vsel %vm448, %v450, %v446
  %v452 = vmul.f32 1.0, %v451
  %v453 = vrcp.pop %v255
  %v454 = vmul.f32 %v255, %v453
  %v455 = vsub.f32 1.0, %v454
  %v456 = vmul.f32 %v453, %v455
  %v457 = vadd.f32 %v453, %v456
  %vm458 = vweird.f32 %v255
  %vm459 = vweird.f32 %v453
  %vm460 = vmor %vm458, %vm459
  %v461 = vsel %vm460, %v453, %v457
  %v462 = vand.u32 2147483647, %v255
  %vm463 = vcmp.eq.f32.partialorder %v462, 8.507059e+37
  %v464 = vand.u32 %v255, 2147483648
  %v465 = vor.u32 1.1754944e-38, %v464
  %v466 = vsel %vm463, %v465, %v461
  %v467 = vmul.f32 1.0, %v466
  %v468 = vrcp.pop %v256
  %v469 = vmul.f32 %v256, %v468
  %v470 = vsub.f32 1.0, %v469
  %v471 = vmul.f32 %v468, %v470
  %v472 = vadd.f32 %v468, %v471
  %vm473 = vweird.f32 %v256
  %vm474 = vweird.f32 %v468
  %vm475 = vmor %vm473, %vm474
  %v476 = vsel %vm475, %v468, %v472
  %v477 = vand.u32 2147483647, %v256
  %vm478 = vcmp.eq.f32.partialorder %v477, 8.507059e+37
  %v479 = vand.u32 %v256, 2147483648
  %v480 = vor.u32 1.1754944e-38, %v479
  %v481 = vsel %vm478, %v480, %v476
  %v482 = vmul.f32 1.0, %v481
  %v483 = vrcp.pop %v257
  %v484 = vmul.f32 %v257, %v483
  %v485 = vsub.f32 1.0, %v484
  %v486 = vmul.f32 %v483, %v485
  %v487 = vadd.f32 %v483, %v486
  %vm488 = vweird.f32 %v257
  %vm489 = vweird.f32 %v483
  %vm490 = vmor %vm488, %vm489
  %v491 = vsel %vm490, %v483, %v487
  %v492 = vand.u32 2147483647, %v257
  %vm493 = vcmp.eq.f32.partialorder %v492, 8.507059e+37
  %v494 = vand.u32 %v257, 2147483648
  %v495 = vor.u32 1.1754944e-38, %v494
  %v496 = vsel %vm493, %v495, %v491
  %v497 = vmul.f32 1.0, %v496
  %v498 = vmul.f32 %v155, %v272
  %v499 = vmul.f32 %v157, %v287
  %v500 = vmul.f32 %v160, %v302
  %v501 = vmul.f32 %v162, %v317
  %v502 = vmul.f32 %v165, %v332
  %v503 = vmul.f32 %v167, %v347
  %v504 = vmul.f32 %v170, %v362
  %v505 = vmul.f32 %v172, %v377
  %v506 = vmul.f32 %v175, %v392
  %v507 = vmul.f32 %v177, %v407
  %v508 = vmul.f32 %v180, %v422
  %v509 = vmul.f32 %v182, %v437
  %v510 = vmul.f32 %v185, %v452
  %v511 = vmul.f32 %v187, %v467
  %v512 = vmul.f32 %v190, %v482
  %v513 = vmul.f32 %v192, %v497
  %v514 = vpack.c.bf16 %v499, %v498
  %v515 = vpack.c.bf16 %v501, %v500
  %v516 = vpack.c.bf16 %v503, %v502
  %v517 = vpack.c.bf16 %v505, %v504
  %v518 = vpack.c.bf16 %v507, %v506
  %v519 = vpack.c.bf16 %v509, %v508
  %v520 = vpack.c.bf16 %v511, %v510
  %v521 = vpack.c.bf16 %v513, %v512
  %v522 = vld [vmem:[%s3] sm:$0xff]
  %v523 = vld [vmem:[%s3 + $0x8] sm:$0xff]
  %v524 = vld [vmem:[%s3 + $0x10] sm:$0xff]
  %v525 = vld [vmem:[%s3 + $0x18] sm:$0xff]
  %v526 = vld [vmem:[%s3 + $0x20] sm:$0xff]
  %v527 = vld [vmem:[%s3 + $0x28] sm:$0xff]
  %v528 = vld [vmem:[%s3 + $0x30] sm:$0xff]
  %v529 = vld [vmem:[%s3 + $0x38] sm:$0xff]
  %v530 = vld [vmem:[%s3 + $0x40] sm:$0xff]
  %v531 = vld [vmem:[%s3 + $0x48] sm:$0xff]
  %v532 = vld [vmem:[%s3 + $0x50] sm:$0xff]
  %v533 = vld [vmem:[%s3 + $0x58] sm:$0xff]
  %v534 = vld [vmem:[%s3 + $0x60] sm:$0xff]
  %v535 = vld [vmem:[%s3 + $0x68] sm:$0xff]
  %v536 = vld [vmem:[%s3 + $0x70] sm:$0xff]
  %v537 = vld [vmem:[%s3 + $0x78] sm:$0xff]
  %v538 = vld [vmem:[%s3 + $0x80] sm:$0xff]
  %v539 = vld [vmem:[%s3 + $0x88] sm:$0xff]
  %v540 = vld [vmem:[%s3 + $0x90] sm:$0xff]
  %v541 = vld [vmem:[%s3 + $0x98] sm:$0xff]
  %v542 = vld [vmem:[%s4] sm:$0xff]
  %v543 = vld [vmem:[%s4 + $0x8] sm:$0x3]
  %v546 = vperm.slane %v542, 0
  %v547 = vperm.slane %v542, 1
  %v548 = vperm.slane %v542, 2
  %v549 = vperm.slane %v542, 3
  %v550 = vperm.slane %v542, 4
  %v551 = vperm.slane %v542, 5
  %v552 = vperm.slane %v542, 6
  %v553 = vperm.slane %v542, 7
  %v554 = vperm.slane %v543, 0
  %v555 = vperm.slane %v543, 1
  %v586 = vunpack.c.l.b16 %v522
  %v587 = vunpack.c.h.b16 %v522
  %v588 = vunpack.c.l.b16 %v523
  %v589 = vunpack.c.h.b16 %v523
  %v590 = vunpack.c.l.b16 %v524
  %v591 = vunpack.c.h.b16 %v524
  %v592 = vunpack.c.l.b16 %v525
  %v593 = vunpack.c.h.b16 %v525
  %v594 = vunpack.c.l.b16 %v526
  %v595 = vunpack.c.h.b16 %v526
  %v596 = vunpack.c.l.b16 %v527
  %v597 = vunpack.c.h.b16 %v527
  %v598 = vunpack.c.l.b16 %v528
  %v599 = vunpack.c.h.b16 %v528
  %v600 = vunpack.c.l.b16 %v529
  %v601 = vunpack.c.h.b16 %v529
  %v602 = vunpack.c.l.b16 %v530
  %v603 = vunpack.c.h.b16 %v530
  %v604 = vunpack.c.l.b16 %v531
  %v605 = vunpack.c.h.b16 %v531
  %v606 = vunpack.c.l.b16 %v532
  %v607 = vunpack.c.h.b16 %v532
  %v608 = vunpack.c.l.b16 %v533
  %v609 = vunpack.c.h.b16 %v533
  %v610 = vunpack.c.l.b16 %v534
  %v611 = vunpack.c.h.b16 %v534
  %v612 = vunpack.c.l.b16 %v535
  %v613 = vunpack.c.h.b16 %v535
  %v614 = vunpack.c.l.b16 %v536
  %v615 = vunpack.c.h.b16 %v536
  %v616 = vunpack.c.l.b16 %v537
  %v617 = vunpack.c.h.b16 %v537
  %v618 = vunpack.c.l.b16 %v538
  %v619 = vunpack.c.h.b16 %v538
  %v620 = vunpack.c.l.b16 %v539
  %v621 = vunpack.c.h.b16 %v539
  %v622 = vunpack.c.l.b16 %v540
  %v623 = vunpack.c.h.b16 %v540
  %v624 = vunpack.c.l.b16 %v541
  %v625 = vunpack.c.h.b16 %v541
  %v626 = vpack.c.b16 %v596, %v586
  %v627 = vpack.c.b16 %v597, %v587
  %v628 = vpack.c.b16 %v598, %v588
  %v629 = vpack.c.b16 %v599, %v589
  %v630 = vpack.c.b16 %v600, %v590
  %v631 = vpack.c.b16 %v601, %v591
  %v632 = vpack.c.b16 %v602, %v592
  %v633 = vpack.c.b16 %v603, %v593
  %v634 = vpack.c.b16 %v604, %v594
  %v635 = vpack.c.b16 %v605, %v595
  %v636 = vpack.c.b16 %v616, %v606
  %v637 = vpack.c.b16 %v617, %v607
  %v638 = vpack.c.b16 %v618, %v608
  %v639 = vpack.c.b16 %v619, %v609
  %v640 = vpack.c.b16 %v620, %v610
  %v641 = vpack.c.b16 %v621, %v611
  %v642 = vpack.c.b16 %v622, %v612
  %v643 = vpack.c.b16 %v623, %v613
  %v644 = vpack.c.b16 %v624, %v614
  %v645 = vpack.c.b16 %v625, %v615
  %v667 = vsel %vm120, %v514, 0
  %v670 = vsel %vm120, %v515, 0
  %v673 = vsel %vm120, %v516, 0
  %v676 = vsel %vm120, %v517, 0
  %v679 = vsel %vm120, %v518, 0
  %v682 = vsel %vm120, %v519, 0
  %v685 = vsel %vm120, %v520, 0
  %v688 = vsel %vm120, %v521, 0
  %690 = vmatpush.bf16.msra.mxu0 0
  %691 = vmatpush.bf16.msra.mxu0 0
  %692 = vmatpush.bf16.msra.mxu0 0
  %693 = vmatpush.bf16.msra.mxu0 0
  %694 = vmatpush.bf16.msra.mxu0 0
  %695 = vmatpush.bf16.msra.mxu0 0
  %696 = vmatpush.bf16.msra.mxu0 %v636
  %697 = vmatpush.bf16.msra.mxu0 %v626
  %698 = vmatmul.bf16.gmra.mxu0 %v667
  %v699 = vpop.f32.mrf.mxu0
  %v700 = vadd.f32 %v546, %v699
  %v701 = vpop.f32.mrf.mxu0
  %v702 = vadd.f32 %v546, %v701
  %703 = vmatmul.bf16.gmra.mxu0 %v670
  %v704 = vpop.f32.mrf.mxu0
  %v705 = vadd.f32 %v546, %v704
  %v706 = vpop.f32.mrf.mxu0
  %v707 = vadd.f32 %v546, %v706
  %708 = vmatmul.bf16.gmra.mxu0 %v673
  %v709 = vpop.f32.mrf.mxu0
  %v710 = vadd.f32 %v546, %v709
  %v711 = vpop.f32.mrf.mxu0
  %v712 = vadd.f32 %v546, %v711
  %713 = vmatmul.bf16.gmra.mxu0 %v676
  %v714 = vpop.f32.mrf.mxu0
  %v715 = vadd.f32 %v546, %v714
  %v716 = vpop.f32.mrf.mxu0
  %v717 = vadd.f32 %v546, %v716
  %718 = vmatmul.bf16.gmra.mxu0 %v679
  %v719 = vpop.f32.mrf.mxu0
  %v720 = vadd.f32 %v546, %v719
  %v721 = vpop.f32.mrf.mxu0
  %v722 = vadd.f32 %v546, %v721
  %723 = vmatmul.bf16.gmra.mxu0 %v682
  %v724 = vpop.f32.mrf.mxu0
  %v725 = vadd.f32 %v546, %v724
  %v726 = vpop.f32.mrf.mxu0
  %v727 = vadd.f32 %v546, %v726
  %728 = vmatmul.bf16.gmra.mxu0 %v685
  %v729 = vpop.f32.mrf.mxu0
  %v730 = vadd.f32 %v546, %v729
  %v731 = vpop.f32.mrf.mxu0
  %v732 = vadd.f32 %v546, %v731
  %733 = vmatmul.bf16.gmra.mxu0 %v688
  %v734 = vpop.f32.mrf.mxu0
  %v735 = vadd.f32 %v546, %v734
  %v736 = vpop.f32.mrf.mxu0
  %v737 = vadd.f32 %v546, %v736
  %738 = vdwg.mxu0
  %739 = vmatpush.bf16.msra.mxu0 0
  %740 = vmatpush.bf16.msra.mxu0 0
  %741 = vmatpush.bf16.msra.mxu0 0
  %742 = vmatpush.bf16.msra.mxu0 0
  %743 = vmatpush.bf16.msra.mxu0 0
  %744 = vmatpush.bf16.msra.mxu0 0
  %745 = vmatpush.bf16.msra.mxu0 %v637
  %746 = vmatpush.bf16.msra.mxu0 %v627
  %747 = vmatmul.bf16.gmra.mxu0 %v667
  %v748 = vpop.f32.mrf.mxu0
  %v749 = vadd.f32 %v547, %v748
  %v750 = vpop.f32.mrf.mxu0
  %v751 = vadd.f32 %v547, %v750
  %752 = vmatmul.bf16.gmra.mxu0 %v670
  %v753 = vpop.f32.mrf.mxu0
  %v754 = vadd.f32 %v547, %v753
  %v755 = vpop.f32.mrf.mxu0
  %v756 = vadd.f32 %v547, %v755
  %757 = vmatmul.bf16.gmra.mxu0 %v673
  %v758 = vpop.f32.mrf.mxu0
  %v759 = vadd.f32 %v547, %v758
  %v760 = vpop.f32.mrf.mxu0
  %v761 = vadd.f32 %v547, %v760
  %762 = vmatmul.bf16.gmra.mxu0 %v676
  %v763 = vpop.f32.mrf.mxu0
  %v764 = vadd.f32 %v547, %v763
  %v765 = vpop.f32.mrf.mxu0
  %v766 = vadd.f32 %v547, %v765
  %767 = vmatmul.bf16.gmra.mxu0 %v679
  %v768 = vpop.f32.mrf.mxu0
  %v769 = vadd.f32 %v547, %v768
  %v770 = vpop.f32.mrf.mxu0
  %v771 = vadd.f32 %v547, %v770
  %772 = vmatmul.bf16.gmra.mxu0 %v682
  %v773 = vpop.f32.mrf.mxu0
  %v774 = vadd.f32 %v547, %v773
  %v775 = vpop.f32.mrf.mxu0
  %v776 = vadd.f32 %v547, %v775
  %777 = vmatmul.bf16.gmra.mxu0 %v685
  %v778 = vpop.f32.mrf.mxu0
  %v779 = vadd.f32 %v547, %v778
  %v780 = vpop.f32.mrf.mxu0
  %v781 = vadd.f32 %v547, %v780
  %782 = vmatmul.bf16.gmra.mxu0 %v688
  %v783 = vpop.f32.mrf.mxu0
  %v784 = vadd.f32 %v547, %v783
  %v785 = vpop.f32.mrf.mxu0
  %v786 = vadd.f32 %v547, %v785
  %787 = vdwg.mxu0
  %788 = vmatpush.bf16.msra.mxu0 0
  %789 = vmatpush.bf16.msra.mxu0 0
  %790 = vmatpush.bf16.msra.mxu0 0
  %791 = vmatpush.bf16.msra.mxu0 0
  %792 = vmatpush.bf16.msra.mxu0 0
  %793 = vmatpush.bf16.msra.mxu0 0
  %794 = vmatpush.bf16.msra.mxu0 %v638
  %795 = vmatpush.bf16.msra.mxu0 %v628
  %796 = vmatmul.bf16.gmra.mxu0 %v667
  %v797 = vpop.f32.mrf.mxu0
  %v798 = vadd.f32 %v548, %v797
  %v799 = vpop.f32.mrf.mxu0
  %v800 = vadd.f32 %v548, %v799
  %801 = vmatmul.bf16.gmra.mxu0 %v670
  %v802 = vpop.f32.mrf.mxu0
  %v803 = vadd.f32 %v548, %v802
  %v804 = vpop.f32.mrf.mxu0
  %v805 = vadd.f32 %v548, %v804
  %806 = vmatmul.bf16.gmra.mxu0 %v673
  %v807 = vpop.f32.mrf.mxu0
  %v808 = vadd.f32 %v548, %v807
  %v809 = vpop.f32.mrf.mxu0
  %v810 = vadd.f32 %v548, %v809
  %811 = vmatmul.bf16.gmra.mxu0 %v676
  %v812 = vpop.f32.mrf.mxu0
  %v813 = vadd.f32 %v548, %v812
  %v814 = vpop.f32.mrf.mxu0
  %v815 = vadd.f32 %v548, %v814
  %816 = vmatmul.bf16.gmra.mxu0 %v679
  %v817 = vpop.f32.mrf.mxu0
  %v818 = vadd.f32 %v548, %v817
  %v819 = vpop.f32.mrf.mxu0
  %v820 = vadd.f32 %v548, %v819
  %821 = vmatmul.bf16.gmra.mxu0 %v682
  %v822 = vpop.f32.mrf.mxu0
  %v823 = vadd.f32 %v548, %v822
  %v824 = vpop.f32.mrf.mxu0
  %v825 = vadd.f32 %v548, %v824
  %826 = vmatmul.bf16.gmra.mxu0 %v685
  %v827 = vpop.f32.mrf.mxu0
  %v828 = vadd.f32 %v548, %v827
  %v829 = vpop.f32.mrf.mxu0
  %v830 = vadd.f32 %v548, %v829
  %831 = vmatmul.bf16.gmra.mxu0 %v688
  %v832 = vpop.f32.mrf.mxu0
  %v833 = vadd.f32 %v548, %v832
  %v834 = vpop.f32.mrf.mxu0
  %v835 = vadd.f32 %v548, %v834
  %836 = vdwg.mxu0
  %837 = vmatpush.bf16.msra.mxu0 0
  %838 = vmatpush.bf16.msra.mxu0 0
  %839 = vmatpush.bf16.msra.mxu0 0
  %840 = vmatpush.bf16.msra.mxu0 0
  %841 = vmatpush.bf16.msra.mxu0 0
  %842 = vmatpush.bf16.msra.mxu0 0
  %843 = vmatpush.bf16.msra.mxu0 %v639
  %844 = vmatpush.bf16.msra.mxu0 %v629
  %845 = vmatmul.bf16.gmra.mxu0 %v667
  %v846 = vpop.f32.mrf.mxu0
  %v847 = vadd.f32 %v549, %v846
  %v848 = vpop.f32.mrf.mxu0
  %v849 = vadd.f32 %v549, %v848
  %850 = vmatmul.bf16.gmra.mxu0 %v670
  %v851 = vpop.f32.mrf.mxu0
  %v852 = vadd.f32 %v549, %v851
  %v853 = vpop.f32.mrf.mxu0
  %v854 = vadd.f32 %v549, %v853
  %855 = vmatmul.bf16.gmra.mxu0 %v673
  %v856 = vpop.f32.mrf.mxu0
  %v857 = vadd.f32 %v549, %v856
  %v858 = vpop.f32.mrf.mxu0
  %v859 = vadd.f32 %v549, %v858
  %860 = vmatmul.bf16.gmra.mxu0 %v676
  %v861 = vpop.f32.mrf.mxu0
  %v862 = vadd.f32 %v549, %v861
  %v863 = vpop.f32.mrf.mxu0
  %v864 = vadd.f32 %v549, %v863
  %865 = vmatmul.bf16.gmra.mxu0 %v679
  %v866 = vpop.f32.mrf.mxu0
  %v867 = vadd.f32 %v549, %v866
  %v868 = vpop.f32.mrf.mxu0
  %v869 = vadd.f32 %v549, %v868
  %870 = vmatmul.bf16.gmra.mxu0 %v682
  %v871 = vpop.f32.mrf.mxu0
  %v872 = vadd.f32 %v549, %v871
  %v873 = vpop.f32.mrf.mxu0
  %v874 = vadd.f32 %v549, %v873
  %875 = vmatmul.bf16.gmra.mxu0 %v685
  %v876 = vpop.f32.mrf.mxu0
  %v877 = vadd.f32 %v549, %v876
  %v878 = vpop.f32.mrf.mxu0
  %v879 = vadd.f32 %v549, %v878
  %880 = vmatmul.bf16.gmra.mxu0 %v688
  %v881 = vpop.f32.mrf.mxu0
  %v882 = vadd.f32 %v549, %v881
  %v883 = vpop.f32.mrf.mxu0
  %v884 = vadd.f32 %v549, %v883
  %885 = vdwg.mxu0
  %886 = vmatpush.bf16.msra.mxu0 0
  %887 = vmatpush.bf16.msra.mxu0 0
  %888 = vmatpush.bf16.msra.mxu0 0
  %889 = vmatpush.bf16.msra.mxu0 0
  %890 = vmatpush.bf16.msra.mxu0 0
  %891 = vmatpush.bf16.msra.mxu0 0
  %892 = vmatpush.bf16.msra.mxu0 %v640
  %893 = vmatpush.bf16.msra.mxu0 %v630
  %894 = vmatmul.bf16.gmra.mxu0 %v667
  %v895 = vpop.f32.mrf.mxu0
  %v896 = vadd.f32 %v550, %v895
  %v897 = vpop.f32.mrf.mxu0
  %v898 = vadd.f32 %v550, %v897
  %899 = vmatmul.bf16.gmra.mxu0 %v670
  %v900 = vpop.f32.mrf.mxu0
  %v901 = vadd.f32 %v550, %v900
  %v902 = vpop.f32.mrf.mxu0
  %v903 = vadd.f32 %v550, %v902
  %904 = vmatmul.bf16.gmra.mxu0 %v673
  %v905 = vpop.f32.mrf.mxu0
  %v906 = vadd.f32 %v550, %v905
  %v907 = vpop.f32.mrf.mxu0
  %v908 = vadd.f32 %v550, %v907
  %909 = vmatmul.bf16.gmra.mxu0 %v676
  %v910 = vpop.f32.mrf.mxu0
  %v911 = vadd.f32 %v550, %v910
  %v912 = vpop.f32.mrf.mxu0
  %v913 = vadd.f32 %v550, %v912
  %914 = vmatmul.bf16.gmra.mxu0 %v679
  %v915 = vpop.f32.mrf.mxu0
  %v916 = vadd.f32 %v550, %v915
  %v917 = vpop.f32.mrf.mxu0
  %v918 = vadd.f32 %v550, %v917
  %919 = vmatmul.bf16.gmra.mxu0 %v682
  %v920 = vpop.f32.mrf.mxu0
  %v921 = vadd.f32 %v550, %v920
  %v922 = vpop.f32.mrf.mxu0
  %v923 = vadd.f32 %v550, %v922
  %924 = vmatmul.bf16.gmra.mxu0 %v685
  %v925 = vpop.f32.mrf.mxu0
  %v926 = vadd.f32 %v550, %v925
  %v927 = vpop.f32.mrf.mxu0
  %v928 = vadd.f32 %v550, %v927
  %929 = vmatmul.bf16.gmra.mxu0 %v688
  %v930 = vpop.f32.mrf.mxu0
  %v931 = vadd.f32 %v550, %v930
  %v932 = vpop.f32.mrf.mxu0
  %v933 = vadd.f32 %v550, %v932
  %934 = vdwg.mxu0
  %935 = vmatpush.bf16.msra.mxu0 0
  %936 = vmatpush.bf16.msra.mxu0 0
  %937 = vmatpush.bf16.msra.mxu0 0
  %938 = vmatpush.bf16.msra.mxu0 0
  %939 = vmatpush.bf16.msra.mxu0 0
  %940 = vmatpush.bf16.msra.mxu0 0
  %941 = vmatpush.bf16.msra.mxu0 %v641
  %942 = vmatpush.bf16.msra.mxu0 %v631
  %943 = vmatmul.bf16.gmra.mxu0 %v667
  %v944 = vpop.f32.mrf.mxu0
  %v945 = vadd.f32 %v551, %v944
  %v946 = vpop.f32.mrf.mxu0
  %v947 = vadd.f32 %v551, %v946
  %948 = vmatmul.bf16.gmra.mxu0 %v670
  %v949 = vpop.f32.mrf.mxu0
  %v950 = vadd.f32 %v551, %v949
  %v951 = vpop.f32.mrf.mxu0
  %v952 = vadd.f32 %v551, %v951
  %953 = vmatmul.bf16.gmra.mxu0 %v673
  %v954 = vpop.f32.mrf.mxu0
  %v955 = vadd.f32 %v551, %v954
  %v956 = vpop.f32.mrf.mxu0
  %v957 = vadd.f32 %v551, %v956
  %958 = vmatmul.bf16.gmra.mxu0 %v676
  %v959 = vpop.f32.mrf.mxu0
  %v960 = vadd.f32 %v551, %v959
  %v961 = vpop.f32.mrf.mxu0
  %v962 = vadd.f32 %v551, %v961
  %963 = vmatmul.bf16.gmra.mxu0 %v679
  %v964 = vpop.f32.mrf.mxu0
  %v965 = vadd.f32 %v551, %v964
  %v966 = vpop.f32.mrf.mxu0
  %v967 = vadd.f32 %v551, %v966
  %968 = vmatmul.bf16.gmra.mxu0 %v682
  %v969 = vpop.f32.mrf.mxu0
  %v970 = vadd.f32 %v551, %v969
  %v971 = vpop.f32.mrf.mxu0
  %v972 = vadd.f32 %v551, %v971
  %973 = vmatmul.bf16.gmra.mxu0 %v685
  %v974 = vpop.f32.mrf.mxu0
  %v975 = vadd.f32 %v551, %v974
  %v976 = vpop.f32.mrf.mxu0
  %v977 = vadd.f32 %v551, %v976
  %978 = vmatmul.bf16.gmra.mxu0 %v688
  %v979 = vpop.f32.mrf.mxu0
  %v980 = vadd.f32 %v551, %v979
  %v981 = vpop.f32.mrf.mxu0
  %v982 = vadd.f32 %v551, %v981
  %983 = vdwg.mxu0
  %984 = vmatpush.bf16.msra.mxu0 0
  %985 = vmatpush.bf16.msra.mxu0 0
  %986 = vmatpush.bf16.msra.mxu0 0
  %987 = vmatpush.bf16.msra.mxu0 0
  %988 = vmatpush.bf16.msra.mxu0 0
  %989 = vmatpush.bf16.msra.mxu0 0
  %990 = vmatpush.bf16.msra.mxu0 %v642
  %991 = vmatpush.bf16.msra.mxu0 %v632
  %992 = vmatmul.bf16.gmra.mxu0 %v667
  %v993 = vpop.f32.mrf.mxu0
  %v994 = vadd.f32 %v552, %v993
  %v995 = vpop.f32.mrf.mxu0
  %v996 = vadd.f32 %v552, %v995
  %997 = vmatmul.bf16.gmra.mxu0 %v670
  %v998 = vpop.f32.mrf.mxu0
  %v999 = vadd.f32 %v552, %v998
  %v1000 = vpop.f32.mrf.mxu0
  %v1001 = vadd.f32 %v552, %v1000
  %1002 = vmatmul.bf16.gmra.mxu0 %v673
  %v1003 = vpop.f32.mrf.mxu0
  %v1004 = vadd.f32 %v552, %v1003
  %v1005 = vpop.f32.mrf.mxu0
  %v1006 = vadd.f32 %v552, %v1005
  %1007 = vmatmul.bf16.gmra.mxu0 %v676
  %v1008 = vpop.f32.mrf.mxu0
  %v1009 = vadd.f32 %v552, %v1008
  %v1010 = vpop.f32.mrf.mxu0
  %v1011 = vadd.f32 %v552, %v1010
  %1012 = vmatmul.bf16.gmra.mxu0 %v679
  %v1013 = vpop.f32.mrf.mxu0
  %v1014 = vadd.f32 %v552, %v1013
  %v1015 = vpop.f32.mrf.mxu0
  %v1016 = vadd.f32 %v552, %v1015
  %1017 = vmatmul.bf16.gmra.mxu0 %v682
  %v1018 = vpop.f32.mrf.mxu0
  %v1019 = vadd.f32 %v552, %v1018
  %v1020 = vpop.f32.mrf.mxu0
  %v1021 = vadd.f32 %v552, %v1020
  %1022 = vmatmul.bf16.gmra.mxu0 %v685
  %v1023 = vpop.f32.mrf.mxu0
  %v1024 = vadd.f32 %v552, %v1023
  %v1025 = vpop.f32.mrf.mxu0
  %v1026 = vadd.f32 %v552, %v1025
  %1027 = vmatmul.bf16.gmra.mxu0 %v688
  %v1028 = vpop.f32.mrf.mxu0
  %v1029 = vadd.f32 %v552, %v1028
  %v1030 = vpop.f32.mrf.mxu0
  %v1031 = vadd.f32 %v552, %v1030
  %1032 = vdwg.mxu0
  %1033 = vmatpush.bf16.msra.mxu0 0
  %1034 = vmatpush.bf16.msra.mxu0 0
  %1035 = vmatpush.bf16.msra.mxu0 0
  %1036 = vmatpush.bf16.msra.mxu0 0
  %1037 = vmatpush.bf16.msra.mxu0 0
  %1038 = vmatpush.bf16.msra.mxu0 0
  %1039 = vmatpush.bf16.msra.mxu0 %v643
  %1040 = vmatpush.bf16.msra.mxu0 %v633
  %1041 = vmatmul.bf16.gmra.mxu0 %v667
  %v1042 = vpop.f32.mrf.mxu0
  %v1043 = vadd.f32 %v553, %v1042
  %v1044 = vpop.f32.mrf.mxu0
  %v1045 = vadd.f32 %v553, %v1044
  %1046 = vmatmul.bf16.gmra.mxu0 %v670
  %v1047 = vpop.f32.mrf.mxu0
  %v1048 = vadd.f32 %v553, %v1047
  %v1049 = vpop.f32.mrf.mxu0
  %v1050 = vadd.f32 %v553, %v1049
  %1051 = vmatmul.bf16.gmra.mxu0 %v673
  %v1052 = vpop.f32.mrf.mxu0
  %v1053 = vadd.f32 %v553, %v1052
  %v1054 = vpop.f32.mrf.mxu0
  %v1055 = vadd.f32 %v553, %v1054
  %1056 = vmatmul.bf16.gmra.mxu0 %v676
  %v1057 = vpop.f32.mrf.mxu0
  %v1058 = vadd.f32 %v553, %v1057
  %v1059 = vpop.f32.mrf.mxu0
  %v1060 = vadd.f32 %v553, %v1059
  %1061 = vmatmul.bf16.gmra.mxu0 %v679
  %v1062 = vpop.f32.mrf.mxu0
  %v1063 = vadd.f32 %v553, %v1062
  %v1064 = vpop.f32.mrf.mxu0
  %v1065 = vadd.f32 %v553, %v1064
  %1066 = vmatmul.bf16.gmra.mxu0 %v682
  %v1067 = vpop.f32.mrf.mxu0
  %v1068 = vadd.f32 %v553, %v1067
  %v1069 = vpop.f32.mrf.mxu0
  %v1070 = vadd.f32 %v553, %v1069
  %1071 = vmatmul.bf16.gmra.mxu0 %v685
  %v1072 = vpop.f32.mrf.mxu0
  %v1073 = vadd.f32 %v553, %v1072
  %v1074 = vpop.f32.mrf.mxu0
  %v1075 = vadd.f32 %v553, %v1074
  %1076 = vmatmul.bf16.gmra.mxu0 %v688
  %v1077 = vpop.f32.mrf.mxu0
  %v1078 = vadd.f32 %v553, %v1077
  %v1079 = vpop.f32.mrf.mxu0
  %v1080 = vadd.f32 %v553, %v1079
  %1081 = vdwg.mxu0
  %1082 = vmatpush.bf16.msra.mxu0 0
  %1083 = vmatpush.bf16.msra.mxu0 0
  %1084 = vmatpush.bf16.msra.mxu0 0
  %1085 = vmatpush.bf16.msra.mxu0 0
  %1086 = vmatpush.bf16.msra.mxu0 0
  %1087 = vmatpush.bf16.msra.mxu0 0
  %1088 = vmatpush.bf16.msra.mxu0 %v644
  %1089 = vmatpush.bf16.msra.mxu0 %v634
  %1090 = vmatmul.bf16.gmra.mxu0 %v667
  %v1091 = vpop.f32.mrf.mxu0
  %v1092 = vadd.f32 %v554, %v1091
  %v1093 = vpop.f32.mrf.mxu0
  %v1094 = vadd.f32 %v554, %v1093
  %1095 = vmatmul.bf16.gmra.mxu0 %v670
  %v1096 = vpop.f32.mrf.mxu0
  %v1097 = vadd.f32 %v554, %v1096
  %v1098 = vpop.f32.mrf.mxu0
  %v1099 = vadd.f32 %v554, %v1098
  %1100 = vmatmul.bf16.gmra.mxu0 %v673
  %v1101 = vpop.f32.mrf.mxu0
  %v1102 = vadd.f32 %v554, %v1101
  %v1103 = vpop.f32.mrf.mxu0
  %v1104 = vadd.f32 %v554, %v1103
  %1105 = vmatmul.bf16.gmra.mxu0 %v676
  %v1106 = vpop.f32.mrf.mxu0
  %v1107 = vadd.f32 %v554, %v1106
  %v1108 = vpop.f32.mrf.mxu0
  %v1109 = vadd.f32 %v554, %v1108
  %1110 = vmatmul.bf16.gmra.mxu0 %v679
  %v1111 = vpop.f32.mrf.mxu0
  %v1112 = vadd.f32 %v554, %v1111
  %v1113 = vpop.f32.mrf.mxu0
  %v1114 = vadd.f32 %v554, %v1113
  %1115 = vmatmul.bf16.gmra.mxu0 %v682
  %v1116 = vpop.f32.mrf.mxu0
  %v1117 = vadd.f32 %v554, %v1116
  %v1118 = vpop.f32.mrf.mxu0
  %v1119 = vadd.f32 %v554, %v1118
  %1120 = vmatmul.bf16.gmra.mxu0 %v685
  %v1121 = vpop.f32.mrf.mxu0
  %v1122 = vadd.f32 %v554, %v1121
  %v1123 = vpop.f32.mrf.mxu0
  %v1124 = vadd.f32 %v554, %v1123
  %1125 = vmatmul.bf16.gmra.mxu0 %v688
  %v1126 = vpop.f32.mrf.mxu0
  %v1127 = vadd.f32 %v554, %v1126
  %v1128 = vpop.f32.mrf.mxu0
  %v1129 = vadd.f32 %v554, %v1128
  %1130 = vdwg.mxu0
  %1131 = vmatpush.bf16.msra.mxu0 0
  %1132 = vmatpush.bf16.msra.mxu0 0
  %1133 = vmatpush.bf16.msra.mxu0 0
  %1134 = vmatpush.bf16.msra.mxu0 0
  %1135 = vmatpush.bf16.msra.mxu0 0
  %1136 = vmatpush.bf16.msra.mxu0 0
  %1137 = vmatpush.bf16.msra.mxu0 %v645
  %1138 = vmatpush.bf16.msra.mxu0 %v635
  %1139 = vmatmul.bf16.gmra.mxu0 %v667
  %v1140 = vpop.f32.mrf.mxu0
  %v1141 = vadd.f32 %v555, %v1140
  %v1142 = vpop.f32.mrf.mxu0
  %v1143 = vadd.f32 %v555, %v1142
  %1144 = vmatmul.bf16.gmra.mxu0 %v670
  %v1145 = vpop.f32.mrf.mxu0
  %v1146 = vadd.f32 %v555, %v1145
  %v1147 = vpop.f32.mrf.mxu0
  %v1148 = vadd.f32 %v555, %v1147
  %1149 = vmatmul.bf16.gmra.mxu0 %v673
  %v1150 = vpop.f32.mrf.mxu0
  %v1151 = vadd.f32 %v555, %v1150
  %v1152 = vpop.f32.mrf.mxu0
  %v1153 = vadd.f32 %v555, %v1152
  %1154 = vmatmul.bf16.gmra.mxu0 %v676
  %v1155 = vpop.f32.mrf.mxu0
  %v1156 = vadd.f32 %v555, %v1155
  %v1157 = vpop.f32.mrf.mxu0
  %v1158 = vadd.f32 %v555, %v1157
  %1159 = vmatmul.bf16.gmra.mxu0 %v679
  %v1160 = vpop.f32.mrf.mxu0
  %v1161 = vadd.f32 %v555, %v1160
  %v1162 = vpop.f32.mrf.mxu0
  %v1163 = vadd.f32 %v555, %v1162
  %1164 = vmatmul.bf16.gmra.mxu0 %v682
  %v1165 = vpop.f32.mrf.mxu0
  %v1166 = vadd.f32 %v555, %v1165
  %v1167 = vpop.f32.mrf.mxu0
  %v1168 = vadd.f32 %v555, %v1167
  %1169 = vmatmul.bf16.gmra.mxu0 %v685
  %v1170 = vpop.f32.mrf.mxu0
  %v1171 = vadd.f32 %v555, %v1170
  %v1172 = vpop.f32.mrf.mxu0
  %v1173 = vadd.f32 %v555, %v1172
  %1174 = vmatmul.bf16.gmra.mxu0 %v688
  %v1175 = vpop.f32.mrf.mxu0
  %v1176 = vadd.f32 %v555, %v1175
  %v1177 = vpop.f32.mrf.mxu0
  %v1178 = vadd.f32 %v555, %v1177
  %1179 = vdwg.mxu0
  %v1180 = vxor.u32 %v700, 2147483648
  %v1181 = vxor.u32 %v749, 2147483648
  %v1182 = vxor.u32 %v798, 2147483648
  %v1183 = vxor.u32 %v847, 2147483648
  %v1184 = vxor.u32 %v896, 2147483648
  %v1185 = vxor.u32 %v945, 2147483648
  %v1186 = vxor.u32 %v994, 2147483648
  %v1187 = vxor.u32 %v1043, 2147483648
  %v1188 = vxor.u32 %v1092, 2147483648
  %v1189 = vxor.u32 %v1141, 2147483648
  %v1190 = vxor.u32 %v702, 2147483648
  %v1191 = vxor.u32 %v751, 2147483648
  %v1192 = vxor.u32 %v800, 2147483648
  %v1193 = vxor.u32 %v849, 2147483648
  %v1194 = vxor.u32 %v898, 2147483648
  %v1195 = vxor.u32 %v947, 2147483648
  %v1196 = vxor.u32 %v996, 2147483648
  %v1197 = vxor.u32 %v1045, 2147483648
  %v1198 = vxor.u32 %v1094, 2147483648
  %v1199 = vxor.u32 %v1143, 2147483648
  %v1200 = vxor.u32 %v705, 2147483648
  %v1201 = vxor.u32 %v754, 2147483648
  %v1202 = vxor.u32 %v803, 2147483648
  %v1203 = vxor.u32 %v852, 2147483648
  %v1204 = vxor.u32 %v901, 2147483648
  %v1205 = vxor.u32 %v950, 2147483648
  %v1206 = vxor.u32 %v999, 2147483648
  %v1207 = vxor.u32 %v1048, 2147483648
  %v1208 = vxor.u32 %v1097, 2147483648
  %v1209 = vxor.u32 %v1146, 2147483648
  %v1210 = vxor.u32 %v707, 2147483648
  %v1211 = vxor.u32 %v756, 2147483648
  %v1212 = vxor.u32 %v805, 2147483648
  %v1213 = vxor.u32 %v854, 2147483648
  %v1214 = vxor.u32 %v903, 2147483648
  %v1215 = vxor.u32 %v952, 2147483648
  %v1216 = vxor.u32 %v1001, 2147483648
  %v1217 = vxor.u32 %v1050, 2147483648
  %v1218 = vxor.u32 %v1099, 2147483648
  %v1219 = vxor.u32 %v1148, 2147483648
  %v1220 = vxor.u32 %v710, 2147483648
  %v1221 = vxor.u32 %v759, 2147483648
  %v1222 = vxor.u32 %v808, 2147483648
  %v1223 = vxor.u32 %v857, 2147483648
  %v1224 = vxor.u32 %v906, 2147483648
  %v1225 = vxor.u32 %v955, 2147483648
  %v1226 = vxor.u32 %v1004, 2147483648
  %v1227 = vxor.u32 %v1053, 2147483648
  %v1228 = vxor.u32 %v1102, 2147483648
  %v1229 = vxor.u32 %v1151, 2147483648
  %v1230 = vxor.u32 %v712, 2147483648
  %v1231 = vxor.u32 %v761, 2147483648
  %v1232 = vxor.u32 %v810, 2147483648
  %v1233 = vxor.u32 %v859, 2147483648
  %v1234 = vxor.u32 %v908, 2147483648
  %v1235 = vxor.u32 %v957, 2147483648
  %v1236 = vxor.u32 %v1006, 2147483648
  %v1237 = vxor.u32 %v1055, 2147483648
  %v1238 = vxor.u32 %v1104, 2147483648
  %v1239 = vxor.u32 %v1153, 2147483648
  %v1240 = vxor.u32 %v715, 2147483648
  %v1241 = vxor.u32 %v764, 2147483648
  %v1242 = vxor.u32 %v813, 2147483648
  %v1243 = vxor.u32 %v862, 2147483648
  %v1244 = vxor.u32 %v911, 2147483648
  %v1245 = vxor.u32 %v960, 2147483648
  %v1246 = vxor.u32 %v1009, 2147483648
  %v1247 = vxor.u32 %v1058, 2147483648
  %v1248 = vxor.u32 %v1107, 2147483648
  %v1249 = vxor.u32 %v1156, 2147483648
  %v1250 = vxor.u32 %v717, 2147483648
  %v1251 = vxor.u32 %v766, 2147483648
  %v1252 = vxor.u32 %v815, 2147483648
  %v1253 = vxor.u32 %v864, 2147483648
  %v1254 = vxor.u32 %v913, 2147483648
  %v1255 = vxor.u32 %v962, 2147483648
  %v1256 = vxor.u32 %v1011, 2147483648
  %v1257 = vxor.u32 %v1060, 2147483648
  %v1258 = vxor.u32 %v1109, 2147483648
  %v1259 = vxor.u32 %v1158, 2147483648
  %v1260 = vxor.u32 %v720, 2147483648
  %v1261 = vxor.u32 %v769, 2147483648
  %v1262 = vxor.u32 %v818, 2147483648
  %v1263 = vxor.u32 %v867, 2147483648
  %v1264 = vxor.u32 %v916, 2147483648
  %v1265 = vxor.u32 %v965, 2147483648
  %v1266 = vxor.u32 %v1014, 2147483648
  %v1267 = vxor.u32 %v1063, 2147483648
  %v1268 = vxor.u32 %v1112, 2147483648
  %v1269 = vxor.u32 %v1161, 2147483648
  %v1270 = vxor.u32 %v722, 2147483648
  %v1271 = vxor.u32 %v771, 2147483648
  %v1272 = vxor.u32 %v820, 2147483648
  %v1273 = vxor.u32 %v869, 2147483648
  %v1274 = vxor.u32 %v918, 2147483648
  %v1275 = vxor.u32 %v967, 2147483648
  %v1276 = vxor.u32 %v1016, 2147483648
  %v1277 = vxor.u32 %v1065, 2147483648
  %v1278 = vxor.u32 %v1114, 2147483648
  %v1279 = vxor.u32 %v1163, 2147483648
  %v1280 = vxor.u32 %v725, 2147483648
  %v1281 = vxor.u32 %v774, 2147483648
  %v1282 = vxor.u32 %v823, 2147483648
  %v1283 = vxor.u32 %v872, 2147483648
  %v1284 = vxor.u32 %v921, 2147483648
  %v1285 = vxor.u32 %v970, 2147483648
  %v1286 = vxor.u32 %v1019, 2147483648
  %v1287 = vxor.u32 %v1068, 2147483648
  %v1288 = vxor.u32 %v1117, 2147483648
  %v1289 = vxor.u32 %v1166, 2147483648
  %v1290 = vxor.u32 %v727, 2147483648
  %v1291 = vxor.u32 %v776, 2147483648
  %v1292 = vxor.u32 %v825, 2147483648
  %v1293 = vxor.u32 %v874, 2147483648
  %v1294 = vxor.u32 %v923, 2147483648
  %v1295 = vxor.u32 %v972, 2147483648
  %v1296 = vxor.u32 %v1021, 2147483648
  %v1297 = vxor.u32 %v1070, 2147483648
  %v1298 = vxor.u32 %v1119, 2147483648
  %v1299 = vxor.u32 %v1168, 2147483648
  %v1300 = vxor.u32 %v730, 2147483648
  %v1301 = vxor.u32 %v779, 2147483648
  %v1302 = vxor.u32 %v828, 2147483648
  %v1303 = vxor.u32 %v877, 2147483648
  %v1304 = vxor.u32 %v926, 2147483648
  %v1305 = vxor.u32 %v975, 2147483648
  %v1306 = vxor.u32 %v1024, 2147483648
  %v1307 = vxor.u32 %v1073, 2147483648
  %v1308 = vxor.u32 %v1122, 2147483648
  %v1309 = vxor.u32 %v1171, 2147483648
  %v1310 = vxor.u32 %v732, 2147483648
  %v1311 = vxor.u32 %v781, 2147483648
  %v1312 = vxor.u32 %v830, 2147483648
  %v1313 = vxor.u32 %v879, 2147483648
  %v1314 = vxor.u32 %v928, 2147483648
  %v1315 = vxor.u32 %v977, 2147483648
  %v1316 = vxor.u32 %v1026, 2147483648
  %v1317 = vxor.u32 %v1075, 2147483648
  %v1318 = vxor.u32 %v1124, 2147483648
  %v1319 = vxor.u32 %v1173, 2147483648
  %v1320 = vxor.u32 %v735, 2147483648
  %v1321 = vxor.u32 %v784, 2147483648
  %v1322 = vxor.u32 %v833, 2147483648
  %v1323 = vxor.u32 %v882, 2147483648
  %v1324 = vxor.u32 %v931, 2147483648
  %v1325 = vxor.u32 %v980, 2147483648
  %v1326 = vxor.u32 %v1029, 2147483648
  %v1327 = vxor.u32 %v1078, 2147483648
  %v1328 = vxor.u32 %v1127, 2147483648
  %v1329 = vxor.u32 %v1176, 2147483648
  %v1330 = vxor.u32 %v737, 2147483648
  %v1331 = vxor.u32 %v786, 2147483648
  %v1332 = vxor.u32 %v835, 2147483648
  %v1333 = vxor.u32 %v884, 2147483648
  %v1334 = vxor.u32 %v933, 2147483648
  %v1335 = vxor.u32 %v982, 2147483648
  %v1336 = vxor.u32 %v1031, 2147483648
  %v1337 = vxor.u32 %v1080, 2147483648
  %v1338 = vxor.u32 %v1129, 2147483648
  %v1339 = vxor.u32 %v1178, 2147483648
  %v1340 = vmul.f32 %v1180, 1.442695
  %v1341 = vpow.pop %v1340
  %v1342 = vmul.f32 %v1181, 1.442695
  %v1343 = vpow.pop %v1342
  %v1344 = vmul.f32 %v1182, 1.442695
  %v1345 = vpow.pop %v1344
  %v1346 = vmul.f32 %v1183, 1.442695
  %v1347 = vpow.pop %v1346
  %v1348 = vmul.f32 %v1184, 1.442695
  %v1349 = vpow.pop %v1348
  %v1350 = vmul.f32 %v1185, 1.442695
  %v1351 = vpow.pop %v1350
  %v1352 = vmul.f32 %v1186, 1.442695
  %v1353 = vpow.pop %v1352
  %v1354 = vmul.f32 %v1187, 1.442695
  %v1355 = vpow.pop %v1354
  %v1356 = vmul.f32 %v1188, 1.442695
  %v1357 = vpow.pop %v1356
  %v1358 = vmul.f32 %v1189, 1.442695
  %v1359 = vpow.pop %v1358
  %v1360 = vmul.f32 %v1190, 1.442695
  %v1361 = vpow.pop %v1360
  %v1362 = vmul.f32 %v1191, 1.442695
  %v1363 = vpow.pop %v1362
  %v1364 = vmul.f32 %v1192, 1.442695
  %v1365 = vpow.pop %v1364
  %v1366 = vmul.f32 %v1193, 1.442695
  %v1367 = vpow.pop %v1366
  %v1368 = vmul.f32 %v1194, 1.442695
  %v1369 = vpow.pop %v1368
  %v1370 = vmul.f32 %v1195, 1.442695
  %v1371 = vpow.pop %v1370
  %v1372 = vmul.f32 %v1196, 1.442695
  %v1373 = vpow.pop %v1372
  %v1374 = vmul.f32 %v1197, 1.442695
  %v1375 = vpow.pop %v1374
  %v1376 = vmul.f32 %v1198, 1.442695
  %v1377 = vpow.pop %v1376
  %v1378 = vmul.f32 %v1199, 1.442695
  %v1379 = vpow.pop %v1378
  %v1380 = vmul.f32 %v1200, 1.442695
  %v1381 = vpow.pop %v1380
  %v1382 = vmul.f32 %v1201, 1.442695
  %v1383 = vpow.pop %v1382
  %v1384 = vmul.f32 %v1202, 1.442695
  %v1385 = vpow.pop %v1384
  %v1386 = vmul.f32 %v1203, 1.442695
  %v1387 = vpow.pop %v1386
  %v1388 = vmul.f32 %v1204, 1.442695
  %v1389 = vpow.pop %v1388
  %v1390 = vmul.f32 %v1205, 1.442695
  %v1391 = vpow.pop %v1390
  %v1392 = vmul.f32 %v1206, 1.442695
  %v1393 = vpow.pop %v1392
  %v1394 = vmul.f32 %v1207, 1.442695
  %v1395 = vpow.pop %v1394
  %v1396 = vmul.f32 %v1208, 1.442695
  %v1397 = vpow.pop %v1396
  %v1398 = vmul.f32 %v1209, 1.442695
  %v1399 = vpow.pop %v1398
  %v1400 = vmul.f32 %v1210, 1.442695
  %v1401 = vpow.pop %v1400
  %v1402 = vmul.f32 %v1211, 1.442695
  %v1403 = vpow.pop %v1402
  %v1404 = vmul.f32 %v1212, 1.442695
  %v1405 = vpow.pop %v1404
  %v1406 = vmul.f32 %v1213, 1.442695
  %v1407 = vpow.pop %v1406
  %v1408 = vmul.f32 %v1214, 1.442695
  %v1409 = vpow.pop %v1408
  %v1410 = vmul.f32 %v1215, 1.442695
  %v1411 = vpow.pop %v1410
  %v1412 = vmul.f32 %v1216, 1.442695
  %v1413 = vpow.pop %v1412
  %v1414 = vmul.f32 %v1217, 1.442695
  %v1415 = vpow.pop %v1414
  %v1416 = vmul.f32 %v1218, 1.442695
  %v1417 = vpow.pop %v1416
  %v1418 = vmul.f32 %v1219, 1.442695
  %v1419 = vpow.pop %v1418
  %v1420 = vmul.f32 %v1220, 1.442695
  %v1421 = vpow.pop %v1420
  %v1422 = vmul.f32 %v1221, 1.442695
  %v1423 = vpow.pop %v1422
  %v1424 = vmul.f32 %v1222, 1.442695
  %v1425 = vpow.pop %v1424
  %v1426 = vmul.f32 %v1223, 1.442695
  %v1427 = vpow.pop %v1426
  %v1428 = vmul.f32 %v1224, 1.442695
  %v1429 = vpow.pop %v1428
  %v1430 = vmul.f32 %v1225, 1.442695
  %v1431 = vpow.pop %v1430
  %v1432 = vmul.f32 %v1226, 1.442695
  %v1433 = vpow.pop %v1432
  %v1434 = vmul.f32 %v1227, 1.442695
  %v1435 = vpow.pop %v1434
  %v1436 = vmul.f32 %v1228, 1.442695
  %v1437 = vpow.pop %v1436
  %v1438 = vmul.f32 %v1229, 1.442695
  %v1439 = vpow.pop %v1438
  %v1440 = vmul.f32 %v1230, 1.442695
  %v1441 = vpow.pop %v1440
  %v1442 = vmul.f32 %v1231, 1.442695
  %v1443 = vpow.pop %v1442
  %v1444 = vmul.f32 %v1232, 1.442695
  %v1445 = vpow.pop %v1444
  %v1446 = vmul.f32 %v1233, 1.442695
  %v1447 = vpow.pop %v1446
  %v1448 = vmul.f32 %v1234, 1.442695
  %v1449 = vpow.pop %v1448
  %v1450 = vmul.f32 %v1235, 1.442695
  %v1451 = vpow.pop %v1450
  %v1452 = vmul.f32 %v1236, 1.442695
  %v1453 = vpow.pop %v1452
  %v1454 = vmul.f32 %v1237, 1.442695
  %v1455 = vpow.pop %v1454
  %v1456 = vmul.f32 %v1238, 1.442695
  %v1457 = vpow.pop %v1456
  %v1458 = vmul.f32 %v1239, 1.442695
  %v1459 = vpow.pop %v1458
  %v1460 = vmul.f32 %v1240, 1.442695
  %v1461 = vpow.pop %v1460
  %v1462 = vmul.f32 %v1241, 1.442695
  %v1463 = vpow.pop %v1462
  %v1464 = vmul.f32 %v1242, 1.442695
  %v1465 = vpow.pop %v1464
  %v1466 = vmul.f32 %v1243, 1.442695
  %v1467 = vpow.pop %v1466
  %v1468 = vmul.f32 %v1244, 1.442695
  %v1469 = vpow.pop %v1468
  %v1470 = vmul.f32 %v1245, 1.442695
  %v1471 = vpow.pop %v1470
  %v1472 = vmul.f32 %v1246, 1.442695
  %v1473 = vpow.pop %v1472
  %v1474 = vmul.f32 %v1247, 1.442695
  %v1475 = vpow.pop %v1474
  %v1476 = vmul.f32 %v1248, 1.442695
  %v1477 = vpow.pop %v1476
  %v1478 = vmul.f32 %v1249, 1.442695
  %v1479 = vpow.pop %v1478
  %v1480 = vmul.f32 %v1250, 1.442695
  %v1481 = vpow.pop %v1480
  %v1482 = vmul.f32 %v1251, 1.442695
  %v1483 = vpow.pop %v1482
  %v1484 = vmul.f32 %v1252, 1.442695
  %v1485 = vpow.pop %v1484
  %v1486 = vmul.f32 %v1253, 1.442695
  %v1487 = vpow.pop %v1486
  %v1488 = vmul.f32 %v1254, 1.442695
  %v1489 = vpow.pop %v1488
  %v1490 = vmul.f32 %v1255, 1.442695
  %v1491 = vpow.pop %v1490
  %v1492 = vmul.f32 %v1256, 1.442695
  %v1493 = vpow.pop %v1492
  %v1494 = vmul.f32 %v1257, 1.442695
  %v1495 = vpow.pop %v1494
  %v1496 = vmul.f32 %v1258, 1.442695
  %v1497 = vpow.pop %v1496
  %v1498 = vmul.f32 %v1259, 1.442695
  %v1499 = vpow.pop %v1498
  %v1500 = vmul.f32 %v1260, 1.442695
  %v1501 = vpow.pop %v1500
  %v1502 = vmul.f32 %v1261, 1.442695
  %v1503 = vpow.pop %v1502
  %v1504 = vmul.f32 %v1262, 1.442695
  %v1505 = vpow.pop %v1504
  %v1506 = vmul.f32 %v1263, 1.442695
  %v1507 = vpow.pop %v1506
  %v1508 = vmul.f32 %v1264, 1.442695
  %v1509 = vpow.pop %v1508
  %v1510 = vmul.f32 %v1265, 1.442695
  %v1511 = vpow.pop %v1510
  %v1512 = vmul.f32 %v1266, 1.442695
  %v1513 = vpow.pop %v1512
  %v1514 = vmul.f32 %v1267, 1.442695
  %v1515 = vpow.pop %v1514
  %v1516 = vmul.f32 %v1268, 1.442695
  %v1517 = vpow.pop %v1516
  %v1518 = vmul.f32 %v1269, 1.442695
  %v1519 = vpow.pop %v1518
  %v1520 = vmul.f32 %v1270, 1.442695
  %v1521 = vpow.pop %v1520
  %v1522 = vmul.f32 %v1271, 1.442695
  %v1523 = vpow.pop %v1522
  %v1524 = vmul.f32 %v1272, 1.442695
  %v1525 = vpow.pop %v1524
  %v1526 = vmul.f32 %v1273, 1.442695
  %v1527 = vpow.pop %v1526
  %v1528 = vmul.f32 %v1274, 1.442695
  %v1529 = vpow.pop %v1528
  %v1530 = vmul.f32 %v1275, 1.442695
  %v1531 = vpow.pop %v1530
  %v1532 = vmul.f32 %v1276, 1.442695
  %v1533 = vpow.pop %v1532
  %v1534 = vmul.f32 %v1277, 1.442695
  %v1535 = vpow.pop %v1534
  %v1536 = vmul.f32 %v1278, 1.442695
  %v1537 = vpow.pop %v1536
  %v1538 = vmul.f32 %v1279, 1.442695
  %v1539 = vpow.pop %v1538
  %v1540 = vmul.f32 %v1280, 1.442695
  %v1541 = vpow.pop %v1540
  %v1542 = vmul.f32 %v1281, 1.442695
  %v1543 = vpow.pop %v1542
  %v1544 = vmul.f32 %v1282, 1.442695
  %v1545 = vpow.pop %v1544
  %v1546 = vmul.f32 %v1283, 1.442695
  %v1547 = vpow.pop %v1546
  %v1548 = vmul.f32 %v1284, 1.442695
  %v1549 = vpow.pop %v1548
  %v1550 = vmul.f32 %v1285, 1.442695
  %v1551 = vpow.pop %v1550
  %v1552 = vmul.f32 %v1286, 1.442695
  %v1553 = vpow.pop %v1552
  %v1554 = vmul.f32 %v1287, 1.442695
  %v1555 = vpow.pop %v1554
  %v1556 = vmul.f32 %v1288, 1.442695
  %v1557 = vpow.pop %v1556
  %v1558 = vmul.f32 %v1289, 1.442695
  %v1559 = vpow.pop %v1558
  %v1560 = vmul.f32 %v1290, 1.442695
  %v1561 = vpow.pop %v1560
  %v1562 = vmul.f32 %v1291, 1.442695
  %v1563 = vpow.pop %v1562
  %v1564 = vmul.f32 %v1292, 1.442695
  %v1565 = vpow.pop %v1564
  %v1566 = vmul.f32 %v1293, 1.442695
  %v1567 = vpow.pop %v1566
  %v1568 = vmul.f32 %v1294, 1.442695
  %v1569 = vpow.pop %v1568
  %v1570 = vmul.f32 %v1295, 1.442695
  %v1571 = vpow.pop %v1570
  %v1572 = vmul.f32 %v1296, 1.442695
  %v1573 = vpow.pop %v1572
  %v1574 = vmul.f32 %v1297, 1.442695
  %v1575 = vpow.pop %v1574
  %v1576 = vmul.f32 %v1298, 1.442695
  %v1577 = vpow.pop %v1576
  %v1578 = vmul.f32 %v1299, 1.442695
  %v1579 = vpow.pop %v1578
  %v1580 = vmul.f32 %v1300, 1.442695
  %v1581 = vpow.pop %v1580
  %v1582 = vmul.f32 %v1301, 1.442695
  %v1583 = vpow.pop %v1582
  %v1584 = vmul.f32 %v1302, 1.442695
  %v1585 = vpow.pop %v1584
  %v1586 = vmul.f32 %v1303, 1.442695
  %v1587 = vpow.pop %v1586
  %v1588 = vmul.f32 %v1304, 1.442695
  %v1589 = vpow.pop %v1588
  %v1590 = vmul.f32 %v1305, 1.442695
  %v1591 = vpow.pop %v1590
  %v1592 = vmul.f32 %v1306, 1.442695
  %v1593 = vpow.pop %v1592
  %v1594 = vmul.f32 %v1307, 1.442695
  %v1595 = vpow.pop %v1594
  %v1596 = vmul.f32 %v1308, 1.442695
  %v1597 = vpow.pop %v1596
  %v1598 = vmul.f32 %v1309, 1.442695
  %v1599 = vpow.pop %v1598
  %v1600 = vmul.f32 %v1310, 1.442695
  %v1601 = vpow.pop %v1600
  %v1602 = vmul.f32 %v1311, 1.442695
  %v1603 = vpow.pop %v1602
  %v1604 = vmul.f32 %v1312, 1.442695
  %v1605 = vpow.pop %v1604
  %v1606 = vmul.f32 %v1313, 1.442695
  %v1607 = vpow.pop %v1606
  %v1608 = vmul.f32 %v1314, 1.442695
  %v1609 = vpow.pop %v1608
  %v1610 = vmul.f32 %v1315, 1.442695
  %v1611 = vpow.pop %v1610
  %v1612 = vmul.f32 %v1316, 1.442695
  %v1613 = vpow.pop %v1612
  %v1614 = vmul.f32 %v1317, 1.442695
  %v1615 = vpow.pop %v1614
  %v1616 = vmul.f32 %v1318, 1.442695
  %v1617 = vpow.pop %v1616
  %v1618 = vmul.f32 %v1319, 1.442695
  %v1619 = vpow.pop %v1618
  %v1620 = vmul.f32 %v1320, 1.442695
  %v1621 = vpow.pop %v1620
  %v1622 = vmul.f32 %v1321, 1.442695
  %v1623 = vpow.pop %v1622
  %v1624 = vmul.f32 %v1322, 1.442695
  %v1625 = vpow.pop %v1624
  %v1626 = vmul.f32 %v1323, 1.442695
  %v1627 = vpow.pop %v1626
  %v1628 = vmul.f32 %v1324, 1.442695
  %v1629 = vpow.pop %v1628
  %v1630 = vmul.f32 %v1325, 1.442695
  %v1631 = vpow.pop %v1630
  %v1632 = vmul.f32 %v1326, 1.442695
  %v1633 = vpow.pop %v1632
  %v1634 = vmul.f32 %v1327, 1.442695
  %v1635 = vpow.pop %v1634
  %v1636 = vmul.f32 %v1328, 1.442695
  %v1637 = vpow.pop %v1636
  %v1638 = vmul.f32 %v1329, 1.442695
  %v1639 = vpow.pop %v1638
  %v1640 = vmul.f32 %v1330, 1.442695
  %v1641 = vpow.pop %v1640
  %v1642 = vmul.f32 %v1331, 1.442695
  %v1643 = vpow.pop %v1642
  %v1644 = vmul.f32 %v1332, 1.442695
  %v1645 = vpow.pop %v1644
  %v1646 = vmul.f32 %v1333, 1.442695
  %v1647 = vpow.pop %v1646
  %v1648 = vmul.f32 %v1334, 1.442695
  %v1649 = vpow.pop %v1648
  %v1650 = vmul.f32 %v1335, 1.442695
  %v1651 = vpow.pop %v1650
  %v1652 = vmul.f32 %v1336, 1.442695
  %v1653 = vpow.pop %v1652
  %v1654 = vmul.f32 %v1337, 1.442695
  %v1655 = vpow.pop %v1654
  %v1656 = vmul.f32 %v1338, 1.442695
  %v1657 = vpow.pop %v1656
  %v1658 = vmul.f32 %v1339, 1.442695
  %v1659 = vpow.pop %v1658
  %v1660 = vadd.f32 %v1341, 1.0
  %v1661 = vadd.f32 %v1343, 1.0
  %v1662 = vadd.f32 %v1345, 1.0
  %v1663 = vadd.f32 %v1347, 1.0
  %v1664 = vadd.f32 %v1349, 1.0
  %v1665 = vadd.f32 %v1351, 1.0
  %v1666 = vadd.f32 %v1353, 1.0
  %v1667 = vadd.f32 %v1355, 1.0
  %v1668 = vadd.f32 %v1357, 1.0
  %v1669 = vadd.f32 %v1359, 1.0
  %v1670 = vadd.f32 %v1361, 1.0
  %v1671 = vadd.f32 %v1363, 1.0
  %v1672 = vadd.f32 %v1365, 1.0
  %v1673 = vadd.f32 %v1367, 1.0
  %v1674 = vadd.f32 %v1369, 1.0
  %v1675 = vadd.f32 %v1371, 1.0
  %v1676 = vadd.f32 %v1373, 1.0
  %v1677 = vadd.f32 %v1375, 1.0
  %v1678 = vadd.f32 %v1377, 1.0
  %v1679 = vadd.f32 %v1379, 1.0
  %v1680 = vadd.f32 %v1381, 1.0
  %v1681 = vadd.f32 %v1383, 1.0
  %v1682 = vadd.f32 %v1385, 1.0
  %v1683 = vadd.f32 %v1387, 1.0
  %v1684 = vadd.f32 %v1389, 1.0
  %v1685 = vadd.f32 %v1391, 1.0
  %v1686 = vadd.f32 %v1393, 1.0
  %v1687 = vadd.f32 %v1395, 1.0
  %v1688 = vadd.f32 %v1397, 1.0
  %v1689 = vadd.f32 %v1399, 1.0
  %v1690 = vadd.f32 %v1401, 1.0
  %v1691 = vadd.f32 %v1403, 1.0
  %v1692 = vadd.f32 %v1405, 1.0
  %v1693 = vadd.f32 %v1407, 1.0
  %v1694 = vadd.f32 %v1409, 1.0
  %v1695 = vadd.f32 %v1411, 1.0
  %v1696 = vadd.f32 %v1413, 1.0
  %v1697 = vadd.f32 %v1415, 1.0
  %v1698 = vadd.f32 %v1417, 1.0
  %v1699 = vadd.f32 %v1419, 1.0
  %v1700 = vadd.f32 %v1421, 1.0
  %v1701 = vadd.f32 %v1423, 1.0
  %v1702 = vadd.f32 %v1425, 1.0
  %v1703 = vadd.f32 %v1427, 1.0
  %v1704 = vadd.f32 %v1429, 1.0
  %v1705 = vadd.f32 %v1431, 1.0
  %v1706 = vadd.f32 %v1433, 1.0
  %v1707 = vadd.f32 %v1435, 1.0
  %v1708 = vadd.f32 %v1437, 1.0
  %v1709 = vadd.f32 %v1439, 1.0
  %v1710 = vadd.f32 %v1441, 1.0
  %v1711 = vadd.f32 %v1443, 1.0
  %v1712 = vadd.f32 %v1445, 1.0
  %v1713 = vadd.f32 %v1447, 1.0
  %v1714 = vadd.f32 %v1449, 1.0
  %v1715 = vadd.f32 %v1451, 1.0
  %v1716 = vadd.f32 %v1453, 1.0
  %v1717 = vadd.f32 %v1455, 1.0
  %v1718 = vadd.f32 %v1457, 1.0
  %v1719 = vadd.f32 %v1459, 1.0
  %v1720 = vadd.f32 %v1461, 1.0
  %v1721 = vadd.f32 %v1463, 1.0
  %v1722 = vadd.f32 %v1465, 1.0
  %v1723 = vadd.f32 %v1467, 1.0
  %v1724 = vadd.f32 %v1469, 1.0
  %v1725 = vadd.f32 %v1471, 1.0
  %v1726 = vadd.f32 %v1473, 1.0
  %v1727 = vadd.f32 %v1475, 1.0
  %v1728 = vadd.f32 %v1477, 1.0
  %v1729 = vadd.f32 %v1479, 1.0
  %v1730 = vadd.f32 %v1481, 1.0
  %v1731 = vadd.f32 %v1483, 1.0
  %v1732 = vadd.f32 %v1485, 1.0
  %v1733 = vadd.f32 %v1487, 1.0
  %v1734 = vadd.f32 %v1489, 1.0
  %v1735 = vadd.f32 %v1491, 1.0
  %v1736 = vadd.f32 %v1493, 1.0
  %v1737 = vadd.f32 %v1495, 1.0
  %v1738 = vadd.f32 %v1497, 1.0
  %v1739 = vadd.f32 %v1499, 1.0
  %v1740 = vadd.f32 %v1501, 1.0
  %v1741 = vadd.f32 %v1503, 1.0
  %v1742 = vadd.f32 %v1505, 1.0
  %v1743 = vadd.f32 %v1507, 1.0
  %v1744 = vadd.f32 %v1509, 1.0
  %v1745 = vadd.f32 %v1511, 1.0
  %v1746 = vadd.f32 %v1513, 1.0
  %v1747 = vadd.f32 %v1515, 1.0
  %v1748 = vadd.f32 %v1517, 1.0
  %v1749 = vadd.f32 %v1519, 1.0
  %v1750 = vadd.f32 %v1521, 1.0
  %v1751 = vadd.f32 %v1523, 1.0
  %v1752 = vadd.f32 %v1525, 1.0
  %v1753 = vadd.f32 %v1527, 1.0
  %v1754 = vadd.f32 %v1529, 1.0
  %v1755 = vadd.f32 %v1531, 1.0
  %v1756 = vadd.f32 %v1533, 1.0
  %v1757 = vadd.f32 %v1535, 1.0
  %v1758 = vadd.f32 %v1537, 1.0
  %v1759 = vadd.f32 %v1539, 1.0
  %v1760 = vadd.f32 %v1541, 1.0
  %v1761 = vadd.f32 %v1543, 1.0
  %v1762 = vadd.f32 %v1545, 1.0
  %v1763 = vadd.f32 %v1547, 1.0
  %v1764 = vadd.f32 %v1549, 1.0
  %v1765 = vadd.f32 %v1551, 1.0
  %v1766 = vadd.f32 %v1553, 1.0
  %v1767 = vadd.f32 %v1555, 1.0
  %v1768 = vadd.f32 %v1557, 1.0
  %v1769 = vadd.f32 %v1559, 1.0
  %v1770 = vadd.f32 %v1561, 1.0
  %v1771 = vadd.f32 %v1563, 1.0
  %v1772 = vadd.f32 %v1565, 1.0
  %v1773 = vadd.f32 %v1567, 1.0
  %v1774 = vadd.f32 %v1569, 1.0
  %v1775 = vadd.f32 %v1571, 1.0
  %v1776 = vadd.f32 %v1573, 1.0
  %v1777 = vadd.f32 %v1575, 1.0
  %v1778 = vadd.f32 %v1577, 1.0
  %v1779 = vadd.f32 %v1579, 1.0
  %v1780 = vadd.f32 %v1581, 1.0
  %v1781 = vadd.f32 %v1583, 1.0
  %v1782 = vadd.f32 %v1585, 1.0
  %v1783 = vadd.f32 %v1587, 1.0
  %v1784 = vadd.f32 %v1589, 1.0
  %v1785 = vadd.f32 %v1591, 1.0
  %v1786 = vadd.f32 %v1593, 1.0
  %v1787 = vadd.f32 %v1595, 1.0
  %v1788 = vadd.f32 %v1597, 1.0
  %v1789 = vadd.f32 %v1599, 1.0
  %v1790 = vadd.f32 %v1601, 1.0
  %v1791 = vadd.f32 %v1603, 1.0
  %v1792 = vadd.f32 %v1605, 1.0
  %v1793 = vadd.f32 %v1607, 1.0
  %v1794 = vadd.f32 %v1609, 1.0
  %v1795 = vadd.f32 %v1611, 1.0
  %v1796 = vadd.f32 %v1613, 1.0
  %v1797 = vadd.f32 %v1615, 1.0
  %v1798 = vadd.f32 %v1617, 1.0
  %v1799 = vadd.f32 %v1619, 1.0
  %v1800 = vadd.f32 %v1621, 1.0
  %v1801 = vadd.f32 %v1623, 1.0
  %v1802 = vadd.f32 %v1625, 1.0
  %v1803 = vadd.f32 %v1627, 1.0
  %v1804 = vadd.f32 %v1629, 1.0
  %v1805 = vadd.f32 %v1631, 1.0
  %v1806 = vadd.f32 %v1633, 1.0
  %v1807 = vadd.f32 %v1635, 1.0
  %v1808 = vadd.f32 %v1637, 1.0
  %v1809 = vadd.f32 %v1639, 1.0
  %v1810 = vadd.f32 %v1641, 1.0
  %v1811 = vadd.f32 %v1643, 1.0
  %v1812 = vadd.f32 %v1645, 1.0
  %v1813 = vadd.f32 %v1647, 1.0
  %v1814 = vadd.f32 %v1649, 1.0
  %v1815 = vadd.f32 %v1651, 1.0
  %v1816 = vadd.f32 %v1653, 1.0
  %v1817 = vadd.f32 %v1655, 1.0
  %v1818 = vadd.f32 %v1657, 1.0
  %v1819 = vadd.f32 %v1659, 1.0
  %v1820 = vrcp.pop %v1660
  %v1821 = vmul.f32 %v1660, %v1820
  %v1822 = vsub.f32 1.0, %v1821
  %v1823 = vmul.f32 %v1820, %v1822
  %v1824 = vadd.f32 %v1820, %v1823
  %vm1825 = vweird.f32 %v1660
  %vm1826 = vweird.f32 %v1820
  %vm1827 = vmor %vm1825, %vm1826
  %v1828 = vsel %vm1827, %v1820, %v1824
  %v1829 = vand.u32 2147483647, %v1660
  %vm1830 = vcmp.eq.f32.partialorder %v1829, 8.507059e+37
  %v1831 = vand.u32 %v1660, 2147483648
  %v1832 = vor.u32 1.1754944e-38, %v1831
  %v1833 = vsel %vm1830, %v1832, %v1828
  %v1834 = vmul.f32 1.0, %v1833
  %v1835 = vrcp.pop %v1661
  %v1836 = vmul.f32 %v1661, %v1835
  %v1837 = vsub.f32 1.0, %v1836
  %v1838 = vmul.f32 %v1835, %v1837
  %v1839 = vadd.f32 %v1835, %v1838
  %vm1840 = vweird.f32 %v1661
  %vm1841 = vweird.f32 %v1835
  %vm1842 = vmor %vm1840, %vm1841
  %v1843 = vsel %vm1842, %v1835, %v1839
  %v1844 = vand.u32 2147483647, %v1661
  %vm1845 = vcmp.eq.f32.partialorder %v1844, 8.507059e+37
  %v1846 = vand.u32 %v1661, 2147483648
  %v1847 = vor.u32 1.1754944e-38, %v1846
  %v1848 = vsel %vm1845, %v1847, %v1843
  %v1849 = vmul.f32 1.0, %v1848
  %v1850 = vrcp.pop %v1662
  %v1851 = vmul.f32 %v1662, %v1850
  %v1852 = vsub.f32 1.0, %v1851
  %v1853 = vmul.f32 %v1850, %v1852
  %v1854 = vadd.f32 %v1850, %v1853
  %vm1855 = vweird.f32 %v1662
  %vm1856 = vweird.f32 %v1850
  %vm1857 = vmor %vm1855, %vm1856
  %v1858 = vsel %vm1857, %v1850, %v1854
  %v1859 = vand.u32 2147483647, %v1662
  %vm1860 = vcmp.eq.f32.partialorder %v1859, 8.507059e+37
  %v1861 = vand.u32 %v1662, 2147483648
  %v1862 = vor.u32 1.1754944e-38, %v1861
  %v1863 = vsel %vm1860, %v1862, %v1858
  %v1864 = vmul.f32 1.0, %v1863
  %v1865 = vrcp.pop %v1663
  %v1866 = vmul.f32 %v1663, %v1865
  %v1867 = vsub.f32 1.0, %v1866
  %v1868 = vmul.f32 %v1865, %v1867
  %v1869 = vadd.f32 %v1865, %v1868
  %vm1870 = vweird.f32 %v1663
  %vm1871 = vweird.f32 %v1865
  %vm1872 = vmor %vm1870, %vm1871
  %v1873 = vsel %vm1872, %v1865, %v1869
  %v1874 = vand.u32 2147483647, %v1663
  %vm1875 = vcmp.eq.f32.partialorder %v1874, 8.507059e+37
  %v1876 = vand.u32 %v1663, 2147483648
  %v1877 = vor.u32 1.1754944e-38, %v1876
  %v1878 = vsel %vm1875, %v1877, %v1873
  %v1879 = vmul.f32 1.0, %v1878
  %v1880 = vrcp.pop %v1664
  %v1881 = vmul.f32 %v1664, %v1880
  %v1882 = vsub.f32 1.0, %v1881
  %v1883 = vmul.f32 %v1880, %v1882
  %v1884 = vadd.f32 %v1880, %v1883
  %vm1885 = vweird.f32 %v1664
  %vm1886 = vweird.f32 %v1880
  %vm1887 = vmor %vm1885, %vm1886
  %v1888 = vsel %vm1887, %v1880, %v1884
  %v1889 = vand.u32 2147483647, %v1664
  %vm1890 = vcmp.eq.f32.partialorder %v1889, 8.507059e+37
  %v1891 = vand.u32 %v1664, 2147483648
  %v1892 = vor.u32 1.1754944e-38, %v1891
  %v1893 = vsel %vm1890, %v1892, %v1888
  %v1894 = vmul.f32 1.0, %v1893
  %v1895 = vrcp.pop %v1665
  %v1896 = vmul.f32 %v1665, %v1895
  %v1897 = vsub.f32 1.0, %v1896
  %v1898 = vmul.f32 %v1895, %v1897
  %v1899 = vadd.f32 %v1895, %v1898
  %vm1900 = vweird.f32 %v1665
  %vm1901 = vweird.f32 %v1895
  %vm1902 = vmor %vm1900, %vm1901
  %v1903 = vsel %vm1902, %v1895, %v1899
  %v1904 = vand.u32 2147483647, %v1665
  %vm1905 = vcmp.eq.f32.partialorder %v1904, 8.507059e+37
  %v1906 = vand.u32 %v1665, 2147483648
  %v1907 = vor.u32 1.1754944e-38, %v1906
  %v1908 = vsel %vm1905, %v1907, %v1903
  %v1909 = vmul.f32 1.0, %v1908
  %v1910 = vrcp.pop %v1666
  %v1911 = vmul.f32 %v1666, %v1910
  %v1912 = vsub.f32 1.0, %v1911
  %v1913 = vmul.f32 %v1910, %v1912
  %v1914 = vadd.f32 %v1910, %v1913
  %vm1915 = vweird.f32 %v1666
  %vm1916 = vweird.f32 %v1910
  %vm1917 = vmor %vm1915, %vm1916
  %v1918 = vsel %vm1917, %v1910, %v1914
  %v1919 = vand.u32 2147483647, %v1666
  %vm1920 = vcmp.eq.f32.partialorder %v1919, 8.507059e+37
  %v1921 = vand.u32 %v1666, 2147483648
  %v1922 = vor.u32 1.1754944e-38, %v1921
  %v1923 = vsel %vm1920, %v1922, %v1918
  %v1924 = vmul.f32 1.0, %v1923
  %v1925 = vrcp.pop %v1667
  %v1926 = vmul.f32 %v1667, %v1925
  %v1927 = vsub.f32 1.0, %v1926
  %v1928 = vmul.f32 %v1925, %v1927
  %v1929 = vadd.f32 %v1925, %v1928
  %vm1930 = vweird.f32 %v1667
  %vm1931 = vweird.f32 %v1925
  %vm1932 = vmor %vm1930, %vm1931
  %v1933 = vsel %vm1932, %v1925, %v1929
  %v1934 = vand.u32 2147483647, %v1667
  %vm1935 = vcmp.eq.f32.partialorder %v1934, 8.507059e+37
  %v1936 = vand.u32 %v1667, 2147483648
  %v1937 = vor.u32 1.1754944e-38, %v1936
  %v1938 = vsel %vm1935, %v1937, %v1933
  %v1939 = vmul.f32 1.0, %v1938
  %v1940 = vrcp.pop %v1668
  %v1941 = vmul.f32 %v1668, %v1940
  %v1942 = vsub.f32 1.0, %v1941
  %v1943 = vmul.f32 %v1940, %v1942
  %v1944 = vadd.f32 %v1940, %v1943
  %vm1945 = vweird.f32 %v1668
  %vm1946 = vweird.f32 %v1940
  %vm1947 = vmor %vm1945, %vm1946
  %v1948 = vsel %vm1947, %v1940, %v1944
  %v1949 = vand.u32 2147483647, %v1668
  %vm1950 = vcmp.eq.f32.partialorder %v1949, 8.507059e+37
  %v1951 = vand.u32 %v1668, 2147483648
  %v1952 = vor.u32 1.1754944e-38, %v1951
  %v1953 = vsel %vm1950, %v1952, %v1948
  %v1954 = vmul.f32 1.0, %v1953
  %v1955 = vrcp.pop %v1669
  %v1956 = vmul.f32 %v1669, %v1955
  %v1957 = vsub.f32 1.0, %v1956
  %v1958 = vmul.f32 %v1955, %v1957
  %v1959 = vadd.f32 %v1955, %v1958
  %vm1960 = vweird.f32 %v1669
  %vm1961 = vweird.f32 %v1955
  %vm1962 = vmor %vm1960, %vm1961
  %v1963 = vsel %vm1962, %v1955, %v1959
  %v1964 = vand.u32 2147483647, %v1669
  %vm1965 = vcmp.eq.f32.partialorder %v1964, 8.507059e+37
  %v1966 = vand.u32 %v1669, 2147483648
  %v1967 = vor.u32 1.1754944e-38, %v1966
  %v1968 = vsel %vm1965, %v1967, %v1963
  %v1969 = vmul.f32 1.0, %v1968
  %v1970 = vrcp.pop %v1670
  %v1971 = vmul.f32 %v1670, %v1970
  %v1972 = vsub.f32 1.0, %v1971
  %v1973 = vmul.f32 %v1970, %v1972
  %v1974 = vadd.f32 %v1970, %v1973
  %vm1975 = vweird.f32 %v1670
  %vm1976 = vweird.f32 %v1970
  %vm1977 = vmor %vm1975, %vm1976
  %v1978 = vsel %vm1977, %v1970, %v1974
  %v1979 = vand.u32 2147483647, %v1670
  %vm1980 = vcmp.eq.f32.partialorder %v1979, 8.507059e+37
  %v1981 = vand.u32 %v1670, 2147483648
  %v1982 = vor.u32 1.1754944e-38, %v1981
  %v1983 = vsel %vm1980, %v1982, %v1978
  %v1984 = vmul.f32 1.0, %v1983
  %v1985 = vrcp.pop %v1671
  %v1986 = vmul.f32 %v1671, %v1985
  %v1987 = vsub.f32 1.0, %v1986
  %v1988 = vmul.f32 %v1985, %v1987
  %v1989 = vadd.f32 %v1985, %v1988
  %vm1990 = vweird.f32 %v1671
  %vm1991 = vweird.f32 %v1985
  %vm1992 = vmor %vm1990, %vm1991
  %v1993 = vsel %vm1992, %v1985, %v1989
  %v1994 = vand.u32 2147483647, %v1671
  %vm1995 = vcmp.eq.f32.partialorder %v1994, 8.507059e+37
  %v1996 = vand.u32 %v1671, 2147483648
  %v1997 = vor.u32 1.1754944e-38, %v1996
  %v1998 = vsel %vm1995, %v1997, %v1993
  %v1999 = vmul.f32 1.0, %v1998
  %v2000 = vrcp.pop %v1672
  %v2001 = vmul.f32 %v1672, %v2000
  %v2002 = vsub.f32 1.0, %v2001
  %v2003 = vmul.f32 %v2000, %v2002
  %v2004 = vadd.f32 %v2000, %v2003
  %vm2005 = vweird.f32 %v1672
  %vm2006 = vweird.f32 %v2000
  %vm2007 = vmor %vm2005, %vm2006
  %v2008 = vsel %vm2007, %v2000, %v2004
  %v2009 = vand.u32 2147483647, %v1672
  %vm2010 = vcmp.eq.f32.partialorder %v2009, 8.507059e+37
  %v2011 = vand.u32 %v1672, 2147483648
  %v2012 = vor.u32 1.1754944e-38, %v2011
  %v2013 = vsel %vm2010, %v2012, %v2008
  %v2014 = vmul.f32 1.0, %v2013
  %v2015 = vrcp.pop %v1673
  %v2016 = vmul.f32 %v1673, %v2015
  %v2017 = vsub.f32 1.0, %v2016
  %v2018 = vmul.f32 %v2015, %v2017
  %v2019 = vadd.f32 %v2015, %v2018
  %vm2020 = vweird.f32 %v1673
  %vm2021 = vweird.f32 %v2015
  %vm2022 = vmor %vm2020, %vm2021
  %v2023 = vsel %vm2022, %v2015, %v2019
  %v2024 = vand.u32 2147483647, %v1673
  %vm2025 = vcmp.eq.f32.partialorder %v2024, 8.507059e+37
  %v2026 = vand.u32 %v1673, 2147483648
  %v2027 = vor.u32 1.1754944e-38, %v2026
  %v2028 = vsel %vm2025, %v2027, %v2023
  %v2029 = vmul.f32 1.0, %v2028
  %v2030 = vrcp.pop %v1674
  %v2031 = vmul.f32 %v1674, %v2030
  %v2032 = vsub.f32 1.0, %v2031
  %v2033 = vmul.f32 %v2030, %v2032
  %v2034 = vadd.f32 %v2030, %v2033
  %vm2035 = vweird.f32 %v1674
  %vm2036 = vweird.f32 %v2030
  %vm2037 = vmor %vm2035, %vm2036
  %v2038 = vsel %vm2037, %v2030, %v2034
  %v2039 = vand.u32 2147483647, %v1674
  %vm2040 = vcmp.eq.f32.partialorder %v2039, 8.507059e+37
  %v2041 = vand.u32 %v1674, 2147483648
  %v2042 = vor.u32 1.1754944e-38, %v2041
  %v2043 = vsel %vm2040, %v2042, %v2038
  %v2044 = vmul.f32 1.0, %v2043
  %v2045 = vrcp.pop %v1675
  %v2046 = vmul.f32 %v1675, %v2045
  %v2047 = vsub.f32 1.0, %v2046
  %v2048 = vmul.f32 %v2045, %v2047
  %v2049 = vadd.f32 %v2045, %v2048
  %vm2050 = vweird.f32 %v1675
  %vm2051 = vweird.f32 %v2045
  %vm2052 = vmor %vm2050, %vm2051
  %v2053 = vsel %vm2052, %v2045, %v2049
  %v2054 = vand.u32 2147483647, %v1675
  %vm2055 = vcmp.eq.f32.partialorder %v2054, 8.507059e+37
  %v2056 = vand.u32 %v1675, 2147483648
  %v2057 = vor.u32 1.1754944e-38, %v2056
  %v2058 = vsel %vm2055, %v2057, %v2053
  %v2059 = vmul.f32 1.0, %v2058
  %v2060 = vrcp.pop %v1676
  %v2061 = vmul.f32 %v1676, %v2060
  %v2062 = vsub.f32 1.0, %v2061
  %v2063 = vmul.f32 %v2060, %v2062
  %v2064 = vadd.f32 %v2060, %v2063
  %vm2065 = vweird.f32 %v1676
  %vm2066 = vweird.f32 %v2060
  %vm2067 = vmor %vm2065, %vm2066
  %v2068 = vsel %vm2067, %v2060, %v2064
  %v2069 = vand.u32 2147483647, %v1676
  %vm2070 = vcmp.eq.f32.partialorder %v2069, 8.507059e+37
  %v2071 = vand.u32 %v1676, 2147483648
  %v2072 = vor.u32 1.1754944e-38, %v2071
  %v2073 = vsel %vm2070, %v2072, %v2068
  %v2074 = vmul.f32 1.0, %v2073
  %v2075 = vrcp.pop %v1677
  %v2076 = vmul.f32 %v1677, %v2075
  %v2077 = vsub.f32 1.0, %v2076
  %v2078 = vmul.f32 %v2075, %v2077
  %v2079 = vadd.f32 %v2075, %v2078
  %vm2080 = vweird.f32 %v1677
  %vm2081 = vweird.f32 %v2075
  %vm2082 = vmor %vm2080, %vm2081
  %v2083 = vsel %vm2082, %v2075, %v2079
  %v2084 = vand.u32 2147483647, %v1677
  %vm2085 = vcmp.eq.f32.partialorder %v2084, 8.507059e+37
  %v2086 = vand.u32 %v1677, 2147483648
  %v2087 = vor.u32 1.1754944e-38, %v2086
  %v2088 = vsel %vm2085, %v2087, %v2083
  %v2089 = vmul.f32 1.0, %v2088
  %v2090 = vrcp.pop %v1678
  %v2091 = vmul.f32 %v1678, %v2090
  %v2092 = vsub.f32 1.0, %v2091
  %v2093 = vmul.f32 %v2090, %v2092
  %v2094 = vadd.f32 %v2090, %v2093
  %vm2095 = vweird.f32 %v1678
  %vm2096 = vweird.f32 %v2090
  %vm2097 = vmor %vm2095, %vm2096
  %v2098 = vsel %vm2097, %v2090, %v2094
  %v2099 = vand.u32 2147483647, %v1678
  %vm2100 = vcmp.eq.f32.partialorder %v2099, 8.507059e+37
  %v2101 = vand.u32 %v1678, 2147483648
  %v2102 = vor.u32 1.1754944e-38, %v2101
  %v2103 = vsel %vm2100, %v2102, %v2098
  %v2104 = vmul.f32 1.0, %v2103
  %v2105 = vrcp.pop %v1679
  %v2106 = vmul.f32 %v1679, %v2105
  %v2107 = vsub.f32 1.0, %v2106
  %v2108 = vmul.f32 %v2105, %v2107
  %v2109 = vadd.f32 %v2105, %v2108
  %vm2110 = vweird.f32 %v1679
  %vm2111 = vweird.f32 %v2105
  %vm2112 = vmor %vm2110, %vm2111
  %v2113 = vsel %vm2112, %v2105, %v2109
  %v2114 = vand.u32 2147483647, %v1679
  %vm2115 = vcmp.eq.f32.partialorder %v2114, 8.507059e+37
  %v2116 = vand.u32 %v1679, 2147483648
  %v2117 = vor.u32 1.1754944e-38, %v2116
  %v2118 = vsel %vm2115, %v2117, %v2113
  %v2119 = vmul.f32 1.0, %v2118
  %v2120 = vrcp.pop %v1680
  %v2121 = vmul.f32 %v1680, %v2120
  %v2122 = vsub.f32 1.0, %v2121
  %v2123 = vmul.f32 %v2120, %v2122
  %v2124 = vadd.f32 %v2120, %v2123
  %vm2125 = vweird.f32 %v1680
  %vm2126 = vweird.f32 %v2120
  %vm2127 = vmor %vm2125, %vm2126
  %v2128 = vsel %vm2127, %v2120, %v2124
  %v2129 = vand.u32 2147483647, %v1680
  %vm2130 = vcmp.eq.f32.partialorder %v2129, 8.507059e+37
  %v2131 = vand.u32 %v1680, 2147483648
  %v2132 = vor.u32 1.1754944e-38, %v2131
  %v2133 = vsel %vm2130, %v2132, %v2128
  %v2134 = vmul.f32 1.0, %v2133
  %v2135 = vrcp.pop %v1681
  %v2136 = vmul.f32 %v1681, %v2135
  %v2137 = vsub.f32 1.0, %v2136
  %v2138 = vmul.f32 %v2135, %v2137
  %v2139 = vadd.f32 %v2135, %v2138
  %vm2140 = vweird.f32 %v1681
  %vm2141 = vweird.f32 %v2135
  %vm2142 = vmor %vm2140, %vm2141
  %v2143 = vsel %vm2142, %v2135, %v2139
  %v2144 = vand.u32 2147483647, %v1681
  %vm2145 = vcmp.eq.f32.partialorder %v2144, 8.507059e+37
  %v2146 = vand.u32 %v1681, 2147483648
  %v2147 = vor.u32 1.1754944e-38, %v2146
  %v2148 = vsel %vm2145, %v2147, %v2143
  %v2149 = vmul.f32 1.0, %v2148
  %v2150 = vrcp.pop %v1682
  %v2151 = vmul.f32 %v1682, %v2150
  %v2152 = vsub.f32 1.0, %v2151
  %v2153 = vmul.f32 %v2150, %v2152
  %v2154 = vadd.f32 %v2150, %v2153
  %vm2155 = vweird.f32 %v1682
  %vm2156 = vweird.f32 %v2150
  %vm2157 = vmor %vm2155, %vm2156
  %v2158 = vsel %vm2157, %v2150, %v2154
  %v2159 = vand.u32 2147483647, %v1682
  %vm2160 = vcmp.eq.f32.partialorder %v2159, 8.507059e+37
  %v2161 = vand.u32 %v1682, 2147483648
  %v2162 = vor.u32 1.1754944e-38, %v2161
  %v2163 = vsel %vm2160, %v2162, %v2158
  %v2164 = vmul.f32 1.0, %v2163
  %v2165 = vrcp.pop %v1683
  %v2166 = vmul.f32 %v1683, %v2165
  %v2167 = vsub.f32 1.0, %v2166
  %v2168 = vmul.f32 %v2165, %v2167
  %v2169 = vadd.f32 %v2165, %v2168
  %vm2170 = vweird.f32 %v1683
  %vm2171 = vweird.f32 %v2165
  %vm2172 = vmor %vm2170, %vm2171
  %v2173 = vsel %vm2172, %v2165, %v2169
  %v2174 = vand.u32 2147483647, %v1683
  %vm2175 = vcmp.eq.f32.partialorder %v2174, 8.507059e+37
  %v2176 = vand.u32 %v1683, 2147483648
  %v2177 = vor.u32 1.1754944e-38, %v2176
  %v2178 = vsel %vm2175, %v2177, %v2173
  %v2179 = vmul.f32 1.0, %v2178
  %v2180 = vrcp.pop %v1684
  %v2181 = vmul.f32 %v1684, %v2180
  %v2182 = vsub.f32 1.0, %v2181
  %v2183 = vmul.f32 %v2180, %v2182
  %v2184 = vadd.f32 %v2180, %v2183
  %vm2185 = vweird.f32 %v1684
  %vm2186 = vweird.f32 %v2180
  %vm2187 = vmor %vm2185, %vm2186
  %v2188 = vsel %vm2187, %v2180, %v2184
  %v2189 = vand.u32 2147483647, %v1684
  %vm2190 = vcmp.eq.f32.partialorder %v2189, 8.507059e+37
  %v2191 = vand.u32 %v1684, 2147483648
  %v2192 = vor.u32 1.1754944e-38, %v2191
  %v2193 = vsel %vm2190, %v2192, %v2188
  %v2194 = vmul.f32 1.0, %v2193
  %v2195 = vrcp.pop %v1685
  %v2196 = vmul.f32 %v1685, %v2195
  %v2197 = vsub.f32 1.0, %v2196
  %v2198 = vmul.f32 %v2195, %v2197
  %v2199 = vadd.f32 %v2195, %v2198
  %vm2200 = vweird.f32 %v1685
  %vm2201 = vweird.f32 %v2195
  %vm2202 = vmor %vm2200, %vm2201
  %v2203 = vsel %vm2202, %v2195, %v2199
  %v2204 = vand.u32 2147483647, %v1685
  %vm2205 = vcmp.eq.f32.partialorder %v2204, 8.507059e+37
  %v2206 = vand.u32 %v1685, 2147483648
  %v2207 = vor.u32 1.1754944e-38, %v2206
  %v2208 = vsel %vm2205, %v2207, %v2203
  %v2209 = vmul.f32 1.0, %v2208
  %v2210 = vrcp.pop %v1686
  %v2211 = vmul.f32 %v1686, %v2210
  %v2212 = vsub.f32 1.0, %v2211
  %v2213 = vmul.f32 %v2210, %v2212
  %v2214 = vadd.f32 %v2210, %v2213
  %vm2215 = vweird.f32 %v1686
  %vm2216 = vweird.f32 %v2210
  %vm2217 = vmor %vm2215, %vm2216
  %v2218 = vsel %vm2217, %v2210, %v2214
  %v2219 = vand.u32 2147483647, %v1686
  %vm2220 = vcmp.eq.f32.partialorder %v2219, 8.507059e+37
  %v2221 = vand.u32 %v1686, 2147483648
  %v2222 = vor.u32 1.1754944e-38, %v2221
  %v2223 = vsel %vm2220, %v2222, %v2218
  %v2224 = vmul.f32 1.0, %v2223
  %v2225 = vrcp.pop %v1687
  %v2226 = vmul.f32 %v1687, %v2225
  %v2227 = vsub.f32 1.0, %v2226
  %v2228 = vmul.f32 %v2225, %v2227
  %v2229 = vadd.f32 %v2225, %v2228
  %vm2230 = vweird.f32 %v1687
  %vm2231 = vweird.f32 %v2225
  %vm2232 = vmor %vm2230, %vm2231
  %v2233 = vsel %vm2232, %v2225, %v2229
  %v2234 = vand.u32 2147483647, %v1687
  %vm2235 = vcmp.eq.f32.partialorder %v2234, 8.507059e+37
  %v2236 = vand.u32 %v1687, 2147483648
  %v2237 = vor.u32 1.1754944e-38, %v2236
  %v2238 = vsel %vm2235, %v2237, %v2233
  %v2239 = vmul.f32 1.0, %v2238
  %v2240 = vrcp.pop %v1688
  %v2241 = vmul.f32 %v1688, %v2240
  %v2242 = vsub.f32 1.0, %v2241
  %v2243 = vmul.f32 %v2240, %v2242
  %v2244 = vadd.f32 %v2240, %v2243
  %vm2245 = vweird.f32 %v1688
  %vm2246 = vweird.f32 %v2240
  %vm2247 = vmor %vm2245, %vm2246
  %v2248 = vsel %vm2247, %v2240, %v2244
  %v2249 = vand.u32 2147483647, %v1688
  %vm2250 = vcmp.eq.f32.partialorder %v2249, 8.507059e+37
  %v2251 = vand.u32 %v1688, 2147483648
  %v2252 = vor.u32 1.1754944e-38, %v2251
  %v2253 = vsel %vm2250, %v2252, %v2248
  %v2254 = vmul.f32 1.0, %v2253
  %v2255 = vrcp.pop %v1689
  %v2256 = vmul.f32 %v1689, %v2255
  %v2257 = vsub.f32 1.0, %v2256
  %v2258 = vmul.f32 %v2255, %v2257
  %v2259 = vadd.f32 %v2255, %v2258
  %vm2260 = vweird.f32 %v1689
  %vm2261 = vweird.f32 %v2255
  %vm2262 = vmor %vm2260, %vm2261
  %v2263 = vsel %vm2262, %v2255, %v2259
  %v2264 = vand.u32 2147483647, %v1689
  %vm2265 = vcmp.eq.f32.partialorder %v2264, 8.507059e+37
  %v2266 = vand.u32 %v1689, 2147483648
  %v2267 = vor.u32 1.1754944e-38, %v2266
  %v2268 = vsel %vm2265, %v2267, %v2263
  %v2269 = vmul.f32 1.0, %v2268
  %v2270 = vrcp.pop %v1690
  %v2271 = vmul.f32 %v1690, %v2270
  %v2272 = vsub.f32 1.0, %v2271
  %v2273 = vmul.f32 %v2270, %v2272
  %v2274 = vadd.f32 %v2270, %v2273
  %vm2275 = vweird.f32 %v1690
  %vm2276 = vweird.f32 %v2270
  %vm2277 = vmor %vm2275, %vm2276
  %v2278 = vsel %vm2277, %v2270, %v2274
  %v2279 = vand.u32 2147483647, %v1690
  %vm2280 = vcmp.eq.f32.partialorder %v2279, 8.507059e+37
  %v2281 = vand.u32 %v1690, 2147483648
  %v2282 = vor.u32 1.1754944e-38, %v2281
  %v2283 = vsel %vm2280, %v2282, %v2278
  %v2284 = vmul.f32 1.0, %v2283
  %v2285 = vrcp.pop %v1691
  %v2286 = vmul.f32 %v1691, %v2285
  %v2287 = vsub.f32 1.0, %v2286
  %v2288 = vmul.f32 %v2285, %v2287
  %v2289 = vadd.f32 %v2285, %v2288
  %vm2290 = vweird.f32 %v1691
  %vm2291 = vweird.f32 %v2285
  %vm2292 = vmor %vm2290, %vm2291
  %v2293 = vsel %vm2292, %v2285, %v2289
  %v2294 = vand.u32 2147483647, %v1691
  %vm2295 = vcmp.eq.f32.partialorder %v2294, 8.507059e+37
  %v2296 = vand.u32 %v1691, 2147483648
  %v2297 = vor.u32 1.1754944e-38, %v2296
  %v2298 = vsel %vm2295, %v2297, %v2293
  %v2299 = vmul.f32 1.0, %v2298
  %v2300 = vrcp.pop %v1692
  %v2301 = vmul.f32 %v1692, %v2300
  %v2302 = vsub.f32 1.0, %v2301
  %v2303 = vmul.f32 %v2300, %v2302
  %v2304 = vadd.f32 %v2300, %v2303
  %vm2305 = vweird.f32 %v1692
  %vm2306 = vweird.f32 %v2300
  %vm2307 = vmor %vm2305, %vm2306
  %v2308 = vsel %vm2307, %v2300, %v2304
  %v2309 = vand.u32 2147483647, %v1692
  %vm2310 = vcmp.eq.f32.partialorder %v2309, 8.507059e+37
  %v2311 = vand.u32 %v1692, 2147483648
  %v2312 = vor.u32 1.1754944e-38, %v2311
  %v2313 = vsel %vm2310, %v2312, %v2308
  %v2314 = vmul.f32 1.0, %v2313
  %v2315 = vrcp.pop %v1693
  %v2316 = vmul.f32 %v1693, %v2315
  %v2317 = vsub.f32 1.0, %v2316
  %v2318 = vmul.f32 %v2315, %v2317
  %v2319 = vadd.f32 %v2315, %v2318
  %vm2320 = vweird.f32 %v1693
  %vm2321 = vweird.f32 %v2315
  %vm2322 = vmor %vm2320, %vm2321
  %v2323 = vsel %vm2322, %v2315, %v2319
  %v2324 = vand.u32 2147483647, %v1693
  %vm2325 = vcmp.eq.f32.partialorder %v2324, 8.507059e+37
  %v2326 = vand.u32 %v1693, 2147483648
  %v2327 = vor.u32 1.1754944e-38, %v2326
  %v2328 = vsel %vm2325, %v2327, %v2323
  %v2329 = vmul.f32 1.0, %v2328
  %v2330 = vrcp.pop %v1694
  %v2331 = vmul.f32 %v1694, %v2330
  %v2332 = vsub.f32 1.0, %v2331
  %v2333 = vmul.f32 %v2330, %v2332
  %v2334 = vadd.f32 %v2330, %v2333
  %vm2335 = vweird.f32 %v1694
  %vm2336 = vweird.f32 %v2330
  %vm2337 = vmor %vm2335, %vm2336
  %v2338 = vsel %vm2337, %v2330, %v2334
  %v2339 = vand.u32 2147483647, %v1694
  %vm2340 = vcmp.eq.f32.partialorder %v2339, 8.507059e+37
  %v2341 = vand.u32 %v1694, 2147483648
  %v2342 = vor.u32 1.1754944e-38, %v2341
  %v2343 = vsel %vm2340, %v2342, %v2338
  %v2344 = vmul.f32 1.0, %v2343
  %v2345 = vrcp.pop %v1695
  %v2346 = vmul.f32 %v1695, %v2345
  %v2347 = vsub.f32 1.0, %v2346
  %v2348 = vmul.f32 %v2345, %v2347
  %v2349 = vadd.f32 %v2345, %v2348
  %vm2350 = vweird.f32 %v1695
  %vm2351 = vweird.f32 %v2345
  %vm2352 = vmor %vm2350, %vm2351
  %v2353 = vsel %vm2352, %v2345, %v2349
  %v2354 = vand.u32 2147483647, %v1695
  %vm2355 = vcmp.eq.f32.partialorder %v2354, 8.507059e+37
  %v2356 = vand.u32 %v1695, 2147483648
  %v2357 = vor.u32 1.1754944e-38, %v2356
  %v2358 = vsel %vm2355, %v2357, %v2353
  %v2359 = vmul.f32 1.0, %v2358
  %v2360 = vrcp.pop %v1696
  %v2361 = vmul.f32 %v1696, %v2360
  %v2362 = vsub.f32 1.0, %v2361
  %v2363 = vmul.f32 %v2360, %v2362
  %v2364 = vadd.f32 %v2360, %v2363
  %vm2365 = vweird.f32 %v1696
  %vm2366 = vweird.f32 %v2360
  %vm2367 = vmor %vm2365, %vm2366
  %v2368 = vsel %vm2367, %v2360, %v2364
  %v2369 = vand.u32 2147483647, %v1696
  %vm2370 = vcmp.eq.f32.partialorder %v2369, 8.507059e+37
  %v2371 = vand.u32 %v1696, 2147483648
  %v2372 = vor.u32 1.1754944e-38, %v2371
  %v2373 = vsel %vm2370, %v2372, %v2368
  %v2374 = vmul.f32 1.0, %v2373
  %v2375 = vrcp.pop %v1697
  %v2376 = vmul.f32 %v1697, %v2375
  %v2377 = vsub.f32 1.0, %v2376
  %v2378 = vmul.f32 %v2375, %v2377
  %v2379 = vadd.f32 %v2375, %v2378
  %vm2380 = vweird.f32 %v1697
  %vm2381 = vweird.f32 %v2375
  %vm2382 = vmor %vm2380, %vm2381
  %v2383 = vsel %vm2382, %v2375, %v2379
  %v2384 = vand.u32 2147483647, %v1697
  %vm2385 = vcmp.eq.f32.partialorder %v2384, 8.507059e+37
  %v2386 = vand.u32 %v1697, 2147483648
  %v2387 = vor.u32 1.1754944e-38, %v2386
  %v2388 = vsel %vm2385, %v2387, %v2383
  %v2389 = vmul.f32 1.0, %v2388
  %v2390 = vrcp.pop %v1698
  %v2391 = vmul.f32 %v1698, %v2390
  %v2392 = vsub.f32 1.0, %v2391
  %v2393 = vmul.f32 %v2390, %v2392
  %v2394 = vadd.f32 %v2390, %v2393
  %vm2395 = vweird.f32 %v1698
  %vm2396 = vweird.f32 %v2390
  %vm2397 = vmor %vm2395, %vm2396
  %v2398 = vsel %vm2397, %v2390, %v2394
  %v2399 = vand.u32 2147483647, %v1698
  %vm2400 = vcmp.eq.f32.partialorder %v2399, 8.507059e+37
  %v2401 = vand.u32 %v1698, 2147483648
  %v2402 = vor.u32 1.1754944e-38, %v2401
  %v2403 = vsel %vm2400, %v2402, %v2398
  %v2404 = vmul.f32 1.0, %v2403
  %v2405 = vrcp.pop %v1699
  %v2406 = vmul.f32 %v1699, %v2405
  %v2407 = vsub.f32 1.0, %v2406
  %v2408 = vmul.f32 %v2405, %v2407
  %v2409 = vadd.f32 %v2405, %v2408
  %vm2410 = vweird.f32 %v1699
  %vm2411 = vweird.f32 %v2405
  %vm2412 = vmor %vm2410, %vm2411
  %v2413 = vsel %vm2412, %v2405, %v2409
  %v2414 = vand.u32 2147483647, %v1699
  %vm2415 = vcmp.eq.f32.partialorder %v2414, 8.507059e+37
  %v2416 = vand.u32 %v1699, 2147483648
  %v2417 = vor.u32 1.1754944e-38, %v2416
  %v2418 = vsel %vm2415, %v2417, %v2413
  %v2419 = vmul.f32 1.0, %v2418
  %v2420 = vrcp.pop %v1700
  %v2421 = vmul.f32 %v1700, %v2420
  %v2422 = vsub.f32 1.0, %v2421
  %v2423 = vmul.f32 %v2420, %v2422
  %v2424 = vadd.f32 %v2420, %v2423
  %vm2425 = vweird.f32 %v1700
  %vm2426 = vweird.f32 %v2420
  %vm2427 = vmor %vm2425, %vm2426
  %v2428 = vsel %vm2427, %v2420, %v2424
  %v2429 = vand.u32 2147483647, %v1700
  %vm2430 = vcmp.eq.f32.partialorder %v2429, 8.507059e+37
  %v2431 = vand.u32 %v1700, 2147483648
  %v2432 = vor.u32 1.1754944e-38, %v2431
  %v2433 = vsel %vm2430, %v2432, %v2428
  %v2434 = vmul.f32 1.0, %v2433
  %v2435 = vrcp.pop %v1701
  %v2436 = vmul.f32 %v1701, %v2435
  %v2437 = vsub.f32 1.0, %v2436
  %v2438 = vmul.f32 %v2435, %v2437
  %v2439 = vadd.f32 %v2435, %v2438
  %vm2440 = vweird.f32 %v1701
  %vm2441 = vweird.f32 %v2435
  %vm2442 = vmor %vm2440, %vm2441
  %v2443 = vsel %vm2442, %v2435, %v2439
  %v2444 = vand.u32 2147483647, %v1701
  %vm2445 = vcmp.eq.f32.partialorder %v2444, 8.507059e+37
  %v2446 = vand.u32 %v1701, 2147483648
  %v2447 = vor.u32 1.1754944e-38, %v2446
  %v2448 = vsel %vm2445, %v2447, %v2443
  %v2449 = vmul.f32 1.0, %v2448
  %v2450 = vrcp.pop %v1702
  %v2451 = vmul.f32 %v1702, %v2450
  %v2452 = vsub.f32 1.0, %v2451
  %v2453 = vmul.f32 %v2450, %v2452
  %v2454 = vadd.f32 %v2450, %v2453
  %vm2455 = vweird.f32 %v1702
  %vm2456 = vweird.f32 %v2450
  %vm2457 = vmor %vm2455, %vm2456
  %v2458 = vsel %vm2457, %v2450, %v2454
  %v2459 = vand.u32 2147483647, %v1702
  %vm2460 = vcmp.eq.f32.partialorder %v2459, 8.507059e+37
  %v2461 = vand.u32 %v1702, 2147483648
  %v2462 = vor.u32 1.1754944e-38, %v2461
  %v2463 = vsel %vm2460, %v2462, %v2458
  %v2464 = vmul.f32 1.0, %v2463
  %v2465 = vrcp.pop %v1703
  %v2466 = vmul.f32 %v1703, %v2465
  %v2467 = vsub.f32 1.0, %v2466
  %v2468 = vmul.f32 %v2465, %v2467
  %v2469 = vadd.f32 %v2465, %v2468
  %vm2470 = vweird.f32 %v1703
  %vm2471 = vweird.f32 %v2465
  %vm2472 = vmor %vm2470, %vm2471
  %v2473 = vsel %vm2472, %v2465, %v2469
  %v2474 = vand.u32 2147483647, %v1703
  %vm2475 = vcmp.eq.f32.partialorder %v2474, 8.507059e+37
  %v2476 = vand.u32 %v1703, 2147483648
  %v2477 = vor.u32 1.1754944e-38, %v2476
  %v2478 = vsel %vm2475, %v2477, %v2473
  %v2479 = vmul.f32 1.0, %v2478
  %v2480 = vrcp.pop %v1704
  %v2481 = vmul.f32 %v1704, %v2480
  %v2482 = vsub.f32 1.0, %v2481
  %v2483 = vmul.f32 %v2480, %v2482
  %v2484 = vadd.f32 %v2480, %v2483
  %vm2485 = vweird.f32 %v1704
  %vm2486 = vweird.f32 %v2480
  %vm2487 = vmor %vm2485, %vm2486
  %v2488 = vsel %vm2487, %v2480, %v2484
  %v2489 = vand.u32 2147483647, %v1704
  %vm2490 = vcmp.eq.f32.partialorder %v2489, 8.507059e+37
  %v2491 = vand.u32 %v1704, 2147483648
  %v2492 = vor.u32 1.1754944e-38, %v2491
  %v2493 = vsel %vm2490, %v2492, %v2488
  %v2494 = vmul.f32 1.0, %v2493
  %v2495 = vrcp.pop %v1705
  %v2496 = vmul.f32 %v1705, %v2495
  %v2497 = vsub.f32 1.0, %v2496
  %v2498 = vmul.f32 %v2495, %v2497
  %v2499 = vadd.f32 %v2495, %v2498
  %vm2500 = vweird.f32 %v1705
  %vm2501 = vweird.f32 %v2495
  %vm2502 = vmor %vm2500, %vm2501
  %v2503 = vsel %vm2502, %v2495, %v2499
  %v2504 = vand.u32 2147483647, %v1705
  %vm2505 = vcmp.eq.f32.partialorder %v2504, 8.507059e+37
  %v2506 = vand.u32 %v1705, 2147483648
  %v2507 = vor.u32 1.1754944e-38, %v2506
  %v2508 = vsel %vm2505, %v2507, %v2503
  %v2509 = vmul.f32 1.0, %v2508
  %v2510 = vrcp.pop %v1706
  %v2511 = vmul.f32 %v1706, %v2510
  %v2512 = vsub.f32 1.0, %v2511
  %v2513 = vmul.f32 %v2510, %v2512
  %v2514 = vadd.f32 %v2510, %v2513
  %vm2515 = vweird.f32 %v1706
  %vm2516 = vweird.f32 %v2510
  %vm2517 = vmor %vm2515, %vm2516
  %v2518 = vsel %vm2517, %v2510, %v2514
  %v2519 = vand.u32 2147483647, %v1706
  %vm2520 = vcmp.eq.f32.partialorder %v2519, 8.507059e+37
  %v2521 = vand.u32 %v1706, 2147483648
  %v2522 = vor.u32 1.1754944e-38, %v2521
  %v2523 = vsel %vm2520, %v2522, %v2518
  %v2524 = vmul.f32 1.0, %v2523
  %v2525 = vrcp.pop %v1707
  %v2526 = vmul.f32 %v1707, %v2525
  %v2527 = vsub.f32 1.0, %v2526
  %v2528 = vmul.f32 %v2525, %v2527
  %v2529 = vadd.f32 %v2525, %v2528
  %vm2530 = vweird.f32 %v1707
  %vm2531 = vweird.f32 %v2525
  %vm2532 = vmor %vm2530, %vm2531
  %v2533 = vsel %vm2532, %v2525, %v2529
  %v2534 = vand.u32 2147483647, %v1707
  %vm2535 = vcmp.eq.f32.partialorder %v2534, 8.507059e+37
  %v2536 = vand.u32 %v1707, 2147483648
  %v2537 = vor.u32 1.1754944e-38, %v2536
  %v2538 = vsel %vm2535, %v2537, %v2533
  %v2539 = vmul.f32 1.0, %v2538
  %v2540 = vrcp.pop %v1708
  %v2541 = vmul.f32 %v1708, %v2540
  %v2542 = vsub.f32 1.0, %v2541
  %v2543 = vmul.f32 %v2540, %v2542
  %v2544 = vadd.f32 %v2540, %v2543
  %vm2545 = vweird.f32 %v1708
  %vm2546 = vweird.f32 %v2540
  %vm2547 = vmor %vm2545, %vm2546
  %v2548 = vsel %vm2547, %v2540, %v2544
  %v2549 = vand.u32 2147483647, %v1708
  %vm2550 = vcmp.eq.f32.partialorder %v2549, 8.507059e+37
  %v2551 = vand.u32 %v1708, 2147483648
  %v2552 = vor.u32 1.1754944e-38, %v2551
  %v2553 = vsel %vm2550, %v2552, %v2548
  %v2554 = vmul.f32 1.0, %v2553
  %v2555 = vrcp.pop %v1709
  %v2556 = vmul.f32 %v1709, %v2555
  %v2557 = vsub.f32 1.0, %v2556
  %v2558 = vmul.f32 %v2555, %v2557
  %v2559 = vadd.f32 %v2555, %v2558
  %vm2560 = vweird.f32 %v1709
  %vm2561 = vweird.f32 %v2555
  %vm2562 = vmor %vm2560, %vm2561
  %v2563 = vsel %vm2562, %v2555, %v2559
  %v2564 = vand.u32 2147483647, %v1709
  %vm2565 = vcmp.eq.f32.partialorder %v2564, 8.507059e+37
  %v2566 = vand.u32 %v1709, 2147483648
  %v2567 = vor.u32 1.1754944e-38, %v2566
  %v2568 = vsel %vm2565, %v2567, %v2563
  %v2569 = vmul.f32 1.0, %v2568
  %v2570 = vrcp.pop %v1710
  %v2571 = vmul.f32 %v1710, %v2570
  %v2572 = vsub.f32 1.0, %v2571
  %v2573 = vmul.f32 %v2570, %v2572
  %v2574 = vadd.f32 %v2570, %v2573
  %vm2575 = vweird.f32 %v1710
  %vm2576 = vweird.f32 %v2570
  %vm2577 = vmor %vm2575, %vm2576
  %v2578 = vsel %vm2577, %v2570, %v2574
  %v2579 = vand.u32 2147483647, %v1710
  %vm2580 = vcmp.eq.f32.partialorder %v2579, 8.507059e+37
  %v2581 = vand.u32 %v1710, 2147483648
  %v2582 = vor.u32 1.1754944e-38, %v2581
  %v2583 = vsel %vm2580, %v2582, %v2578
  %v2584 = vmul.f32 1.0, %v2583
  %v2585 = vrcp.pop %v1711
  %v2586 = vmul.f32 %v1711, %v2585
  %v2587 = vsub.f32 1.0, %v2586
  %v2588 = vmul.f32 %v2585, %v2587
  %v2589 = vadd.f32 %v2585, %v2588
  %vm2590 = vweird.f32 %v1711
  %vm2591 = vweird.f32 %v2585
  %vm2592 = vmor %vm2590, %vm2591
  %v2593 = vsel %vm2592, %v2585, %v2589
  %v2594 = vand.u32 2147483647, %v1711
  %vm2595 = vcmp.eq.f32.partialorder %v2594, 8.507059e+37
  %v2596 = vand.u32 %v1711, 2147483648
  %v2597 = vor.u32 1.1754944e-38, %v2596
  %v2598 = vsel %vm2595, %v2597, %v2593
  %v2599 = vmul.f32 1.0, %v2598
  %v2600 = vrcp.pop %v1712
  %v2601 = vmul.f32 %v1712, %v2600
  %v2602 = vsub.f32 1.0, %v2601
  %v2603 = vmul.f32 %v2600, %v2602
  %v2604 = vadd.f32 %v2600, %v2603
  %vm2605 = vweird.f32 %v1712
  %vm2606 = vweird.f32 %v2600
  %vm2607 = vmor %vm2605, %vm2606
  %v2608 = vsel %vm2607, %v2600, %v2604
  %v2609 = vand.u32 2147483647, %v1712
  %vm2610 = vcmp.eq.f32.partialorder %v2609, 8.507059e+37
  %v2611 = vand.u32 %v1712, 2147483648
  %v2612 = vor.u32 1.1754944e-38, %v2611
  %v2613 = vsel %vm2610, %v2612, %v2608
  %v2614 = vmul.f32 1.0, %v2613
  %v2615 = vrcp.pop %v1713
  %v2616 = vmul.f32 %v1713, %v2615
  %v2617 = vsub.f32 1.0, %v2616
  %v2618 = vmul.f32 %v2615, %v2617
  %v2619 = vadd.f32 %v2615, %v2618
  %vm2620 = vweird.f32 %v1713
  %vm2621 = vweird.f32 %v2615
  %vm2622 = vmor %vm2620, %vm2621
  %v2623 = vsel %vm2622, %v2615, %v2619
  %v2624 = vand.u32 2147483647, %v1713
  %vm2625 = vcmp.eq.f32.partialorder %v2624, 8.507059e+37
  %v2626 = vand.u32 %v1713, 2147483648
  %v2627 = vor.u32 1.1754944e-38, %v2626
  %v2628 = vsel %vm2625, %v2627, %v2623
  %v2629 = vmul.f32 1.0, %v2628
  %v2630 = vrcp.pop %v1714
  %v2631 = vmul.f32 %v1714, %v2630
  %v2632 = vsub.f32 1.0, %v2631
  %v2633 = vmul.f32 %v2630, %v2632
  %v2634 = vadd.f32 %v2630, %v2633
  %vm2635 = vweird.f32 %v1714
  %vm2636 = vweird.f32 %v2630
  %vm2637 = vmor %vm2635, %vm2636
  %v2638 = vsel %vm2637, %v2630, %v2634
  %v2639 = vand.u32 2147483647, %v1714
  %vm2640 = vcmp.eq.f32.partialorder %v2639, 8.507059e+37
  %v2641 = vand.u32 %v1714, 2147483648
  %v2642 = vor.u32 1.1754944e-38, %v2641
  %v2643 = vsel %vm2640, %v2642, %v2638
  %v2644 = vmul.f32 1.0, %v2643
  %v2645 = vrcp.pop %v1715
  %v2646 = vmul.f32 %v1715, %v2645
  %v2647 = vsub.f32 1.0, %v2646
  %v2648 = vmul.f32 %v2645, %v2647
  %v2649 = vadd.f32 %v2645, %v2648
  %vm2650 = vweird.f32 %v1715
  %vm2651 = vweird.f32 %v2645
  %vm2652 = vmor %vm2650, %vm2651
  %v2653 = vsel %vm2652, %v2645, %v2649
  %v2654 = vand.u32 2147483647, %v1715
  %vm2655 = vcmp.eq.f32.partialorder %v2654, 8.507059e+37
  %v2656 = vand.u32 %v1715, 2147483648
  %v2657 = vor.u32 1.1754944e-38, %v2656
  %v2658 = vsel %vm2655, %v2657, %v2653
  %v2659 = vmul.f32 1.0, %v2658
  %v2660 = vrcp.pop %v1716
  %v2661 = vmul.f32 %v1716, %v2660
  %v2662 = vsub.f32 1.0, %v2661
  %v2663 = vmul.f32 %v2660, %v2662
  %v2664 = vadd.f32 %v2660, %v2663
  %vm2665 = vweird.f32 %v1716
  %vm2666 = vweird.f32 %v2660
  %vm2667 = vmor %vm2665, %vm2666
  %v2668 = vsel %vm2667, %v2660, %v2664
  %v2669 = vand.u32 2147483647, %v1716
  %vm2670 = vcmp.eq.f32.partialorder %v2669, 8.507059e+37
  %v2671 = vand.u32 %v1716, 2147483648
  %v2672 = vor.u32 1.1754944e-38, %v2671
  %v2673 = vsel %vm2670, %v2672, %v2668
  %v2674 = vmul.f32 1.0, %v2673
  %v2675 = vrcp.pop %v1717
  %v2676 = vmul.f32 %v1717, %v2675
  %v2677 = vsub.f32 1.0, %v2676
  %v2678 = vmul.f32 %v2675, %v2677
  %v2679 = vadd.f32 %v2675, %v2678
  %vm2680 = vweird.f32 %v1717
  %vm2681 = vweird.f32 %v2675
  %vm2682 = vmor %vm2680, %vm2681
  %v2683 = vsel %vm2682, %v2675, %v2679
  %v2684 = vand.u32 2147483647, %v1717
  %vm2685 = vcmp.eq.f32.partialorder %v2684, 8.507059e+37
  %v2686 = vand.u32 %v1717, 2147483648
  %v2687 = vor.u32 1.1754944e-38, %v2686
  %v2688 = vsel %vm2685, %v2687, %v2683
  %v2689 = vmul.f32 1.0, %v2688
  %v2690 = vrcp.pop %v1718
  %v2691 = vmul.f32 %v1718, %v2690
  %v2692 = vsub.f32 1.0, %v2691
  %v2693 = vmul.f32 %v2690, %v2692
  %v2694 = vadd.f32 %v2690, %v2693
  %vm2695 = vweird.f32 %v1718
  %vm2696 = vweird.f32 %v2690
  %vm2697 = vmor %vm2695, %vm2696
  %v2698 = vsel %vm2697, %v2690, %v2694
  %v2699 = vand.u32 2147483647, %v1718
  %vm2700 = vcmp.eq.f32.partialorder %v2699, 8.507059e+37
  %v2701 = vand.u32 %v1718, 2147483648
  %v2702 = vor.u32 1.1754944e-38, %v2701
  %v2703 = vsel %vm2700, %v2702, %v2698
  %v2704 = vmul.f32 1.0, %v2703
  %v2705 = vrcp.pop %v1719
  %v2706 = vmul.f32 %v1719, %v2705
  %v2707 = vsub.f32 1.0, %v2706
  %v2708 = vmul.f32 %v2705, %v2707
  %v2709 = vadd.f32 %v2705, %v2708
  %vm2710 = vweird.f32 %v1719
  %vm2711 = vweird.f32 %v2705
  %vm2712 = vmor %vm2710, %vm2711
  %v2713 = vsel %vm2712, %v2705, %v2709
  %v2714 = vand.u32 2147483647, %v1719
  %vm2715 = vcmp.eq.f32.partialorder %v2714, 8.507059e+37
  %v2716 = vand.u32 %v1719, 2147483648
  %v2717 = vor.u32 1.1754944e-38, %v2716
  %v2718 = vsel %vm2715, %v2717, %v2713
  %v2719 = vmul.f32 1.0, %v2718
  %v2720 = vrcp.pop %v1720
  %v2721 = vmul.f32 %v1720, %v2720
  %v2722 = vsub.f32 1.0, %v2721
  %v2723 = vmul.f32 %v2720, %v2722
  %v2724 = vadd.f32 %v2720, %v2723
  %vm2725 = vweird.f32 %v1720
  %vm2726 = vweird.f32 %v2720
  %vm2727 = vmor %vm2725, %vm2726
  %v2728 = vsel %vm2727, %v2720, %v2724
  %v2729 = vand.u32 2147483647, %v1720
  %vm2730 = vcmp.eq.f32.partialorder %v2729, 8.507059e+37
  %v2731 = vand.u32 %v1720, 2147483648
  %v2732 = vor.u32 1.1754944e-38, %v2731
  %v2733 = vsel %vm2730, %v2732, %v2728
  %v2734 = vmul.f32 1.0, %v2733
  %v2735 = vrcp.pop %v1721
  %v2736 = vmul.f32 %v1721, %v2735
  %v2737 = vsub.f32 1.0, %v2736
  %v2738 = vmul.f32 %v2735, %v2737
  %v2739 = vadd.f32 %v2735, %v2738
  %vm2740 = vweird.f32 %v1721
  %vm2741 = vweird.f32 %v2735
  %vm2742 = vmor %vm2740, %vm2741
  %v2743 = vsel %vm2742, %v2735, %v2739
  %v2744 = vand.u32 2147483647, %v1721
  %vm2745 = vcmp.eq.f32.partialorder %v2744, 8.507059e+37
  %v2746 = vand.u32 %v1721, 2147483648
  %v2747 = vor.u32 1.1754944e-38, %v2746
  %v2748 = vsel %vm2745, %v2747, %v2743
  %v2749 = vmul.f32 1.0, %v2748
  %v2750 = vrcp.pop %v1722
  %v2751 = vmul.f32 %v1722, %v2750
  %v2752 = vsub.f32 1.0, %v2751
  %v2753 = vmul.f32 %v2750, %v2752
  %v2754 = vadd.f32 %v2750, %v2753
  %vm2755 = vweird.f32 %v1722
  %vm2756 = vweird.f32 %v2750
  %vm2757 = vmor %vm2755, %vm2756
  %v2758 = vsel %vm2757, %v2750, %v2754
  %v2759 = vand.u32 2147483647, %v1722
  %vm2760 = vcmp.eq.f32.partialorder %v2759, 8.507059e+37
  %v2761 = vand.u32 %v1722, 2147483648
  %v2762 = vor.u32 1.1754944e-38, %v2761
  %v2763 = vsel %vm2760, %v2762, %v2758
  %v2764 = vmul.f32 1.0, %v2763
  %v2765 = vrcp.pop %v1723
  %v2766 = vmul.f32 %v1723, %v2765
  %v2767 = vsub.f32 1.0, %v2766
  %v2768 = vmul.f32 %v2765, %v2767
  %v2769 = vadd.f32 %v2765, %v2768
  %vm2770 = vweird.f32 %v1723
  %vm2771 = vweird.f32 %v2765
  %vm2772 = vmor %vm2770, %vm2771
  %v2773 = vsel %vm2772, %v2765, %v2769
  %v2774 = vand.u32 2147483647, %v1723
  %vm2775 = vcmp.eq.f32.partialorder %v2774, 8.507059e+37
  %v2776 = vand.u32 %v1723, 2147483648
  %v2777 = vor.u32 1.1754944e-38, %v2776
  %v2778 = vsel %vm2775, %v2777, %v2773
  %v2779 = vmul.f32 1.0, %v2778
  %v2780 = vrcp.pop %v1724
  %v2781 = vmul.f32 %v1724, %v2780
  %v2782 = vsub.f32 1.0, %v2781
  %v2783 = vmul.f32 %v2780, %v2782
  %v2784 = vadd.f32 %v2780, %v2783
  %vm2785 = vweird.f32 %v1724
  %vm2786 = vweird.f32 %v2780
  %vm2787 = vmor %vm2785, %vm2786
  %v2788 = vsel %vm2787, %v2780, %v2784
  %v2789 = vand.u32 2147483647, %v1724
  %vm2790 = vcmp.eq.f32.partialorder %v2789, 8.507059e+37
  %v2791 = vand.u32 %v1724, 2147483648
  %v2792 = vor.u32 1.1754944e-38, %v2791
  %v2793 = vsel %vm2790, %v2792, %v2788
  %v2794 = vmul.f32 1.0, %v2793
  %v2795 = vrcp.pop %v1725
  %v2796 = vmul.f32 %v1725, %v2795
  %v2797 = vsub.f32 1.0, %v2796
  %v2798 = vmul.f32 %v2795, %v2797
  %v2799 = vadd.f32 %v2795, %v2798
  %vm2800 = vweird.f32 %v1725
  %vm2801 = vweird.f32 %v2795
  %vm2802 = vmor %vm2800, %vm2801
  %v2803 = vsel %vm2802, %v2795, %v2799
  %v2804 = vand.u32 2147483647, %v1725
  %vm2805 = vcmp.eq.f32.partialorder %v2804, 8.507059e+37
  %v2806 = vand.u32 %v1725, 2147483648
  %v2807 = vor.u32 1.1754944e-38, %v2806
  %v2808 = vsel %vm2805, %v2807, %v2803
  %v2809 = vmul.f32 1.0, %v2808
  %v2810 = vrcp.pop %v1726
  %v2811 = vmul.f32 %v1726, %v2810
  %v2812 = vsub.f32 1.0, %v2811
  %v2813 = vmul.f32 %v2810, %v2812
  %v2814 = vadd.f32 %v2810, %v2813
  %vm2815 = vweird.f32 %v1726
  %vm2816 = vweird.f32 %v2810
  %vm2817 = vmor %vm2815, %vm2816
  %v2818 = vsel %vm2817, %v2810, %v2814
  %v2819 = vand.u32 2147483647, %v1726
  %vm2820 = vcmp.eq.f32.partialorder %v2819, 8.507059e+37
  %v2821 = vand.u32 %v1726, 2147483648
  %v2822 = vor.u32 1.1754944e-38, %v2821
  %v2823 = vsel %vm2820, %v2822, %v2818
  %v2824 = vmul.f32 1.0, %v2823
  %v2825 = vrcp.pop %v1727
  %v2826 = vmul.f32 %v1727, %v2825
  %v2827 = vsub.f32 1.0, %v2826
  %v2828 = vmul.f32 %v2825, %v2827
  %v2829 = vadd.f32 %v2825, %v2828
  %vm2830 = vweird.f32 %v1727
  %vm2831 = vweird.f32 %v2825
  %vm2832 = vmor %vm2830, %vm2831
  %v2833 = vsel %vm2832, %v2825, %v2829
  %v2834 = vand.u32 2147483647, %v1727
  %vm2835 = vcmp.eq.f32.partialorder %v2834, 8.507059e+37
  %v2836 = vand.u32 %v1727, 2147483648
  %v2837 = vor.u32 1.1754944e-38, %v2836
  %v2838 = vsel %vm2835, %v2837, %v2833
  %v2839 = vmul.f32 1.0, %v2838
  %v2840 = vrcp.pop %v1728
  %v2841 = vmul.f32 %v1728, %v2840
  %v2842 = vsub.f32 1.0, %v2841
  %v2843 = vmul.f32 %v2840, %v2842
  %v2844 = vadd.f32 %v2840, %v2843
  %vm2845 = vweird.f32 %v1728
  %vm2846 = vweird.f32 %v2840
  %vm2847 = vmor %vm2845, %vm2846
  %v2848 = vsel %vm2847, %v2840, %v2844
  %v2849 = vand.u32 2147483647, %v1728
  %vm2850 = vcmp.eq.f32.partialorder %v2849, 8.507059e+37
  %v2851 = vand.u32 %v1728, 2147483648
  %v2852 = vor.u32 1.1754944e-38, %v2851
  %v2853 = vsel %vm2850, %v2852, %v2848
  %v2854 = vmul.f32 1.0, %v2853
  %v2855 = vrcp.pop %v1729
  %v2856 = vmul.f32 %v1729, %v2855
  %v2857 = vsub.f32 1.0, %v2856
  %v2858 = vmul.f32 %v2855, %v2857
  %v2859 = vadd.f32 %v2855, %v2858
  %vm2860 = vweird.f32 %v1729
  %vm2861 = vweird.f32 %v2855
  %vm2862 = vmor %vm2860, %vm2861
  %v2863 = vsel %vm2862, %v2855, %v2859
  %v2864 = vand.u32 2147483647, %v1729
  %vm2865 = vcmp.eq.f32.partialorder %v2864, 8.507059e+37
  %v2866 = vand.u32 %v1729, 2147483648
  %v2867 = vor.u32 1.1754944e-38, %v2866
  %v2868 = vsel %vm2865, %v2867, %v2863
  %v2869 = vmul.f32 1.0, %v2868
  %v2870 = vrcp.pop %v1730
  %v2871 = vmul.f32 %v1730, %v2870
  %v2872 = vsub.f32 1.0, %v2871
  %v2873 = vmul.f32 %v2870, %v2872
  %v2874 = vadd.f32 %v2870, %v2873
  %vm2875 = vweird.f32 %v1730
  %vm2876 = vweird.f32 %v2870
  %vm2877 = vmor %vm2875, %vm2876
  %v2878 = vsel %vm2877, %v2870, %v2874
  %v2879 = vand.u32 2147483647, %v1730
  %vm2880 = vcmp.eq.f32.partialorder %v2879, 8.507059e+37
  %v2881 = vand.u32 %v1730, 2147483648
  %v2882 = vor.u32 1.1754944e-38, %v2881
  %v2883 = vsel %vm2880, %v2882, %v2878
  %v2884 = vmul.f32 1.0, %v2883
  %v2885 = vrcp.pop %v1731
  %v2886 = vmul.f32 %v1731, %v2885
  %v2887 = vsub.f32 1.0, %v2886
  %v2888 = vmul.f32 %v2885, %v2887
  %v2889 = vadd.f32 %v2885, %v2888
  %vm2890 = vweird.f32 %v1731
  %vm2891 = vweird.f32 %v2885
  %vm2892 = vmor %vm2890, %vm2891
  %v2893 = vsel %vm2892, %v2885, %v2889
  %v2894 = vand.u32 2147483647, %v1731
  %vm2895 = vcmp.eq.f32.partialorder %v2894, 8.507059e+37
  %v2896 = vand.u32 %v1731, 2147483648
  %v2897 = vor.u32 1.1754944e-38, %v2896
  %v2898 = vsel %vm2895, %v2897, %v2893
  %v2899 = vmul.f32 1.0, %v2898
  %v2900 = vrcp.pop %v1732
  %v2901 = vmul.f32 %v1732, %v2900
  %v2902 = vsub.f32 1.0, %v2901
  %v2903 = vmul.f32 %v2900, %v2902
  %v2904 = vadd.f32 %v2900, %v2903
  %vm2905 = vweird.f32 %v1732
  %vm2906 = vweird.f32 %v2900
  %vm2907 = vmor %vm2905, %vm2906
  %v2908 = vsel %vm2907, %v2900, %v2904
  %v2909 = vand.u32 2147483647, %v1732
  %vm2910 = vcmp.eq.f32.partialorder %v2909, 8.507059e+37
  %v2911 = vand.u32 %v1732, 2147483648
  %v2912 = vor.u32 1.1754944e-38, %v2911
  %v2913 = vsel %vm2910, %v2912, %v2908
  %v2914 = vmul.f32 1.0, %v2913
  %v2915 = vrcp.pop %v1733
  %v2916 = vmul.f32 %v1733, %v2915
  %v2917 = vsub.f32 1.0, %v2916
  %v2918 = vmul.f32 %v2915, %v2917
  %v2919 = vadd.f32 %v2915, %v2918
  %vm2920 = vweird.f32 %v1733
  %vm2921 = vweird.f32 %v2915
  %vm2922 = vmor %vm2920, %vm2921
  %v2923 = vsel %vm2922, %v2915, %v2919
  %v2924 = vand.u32 2147483647, %v1733
  %vm2925 = vcmp.eq.f32.partialorder %v2924, 8.507059e+37
  %v2926 = vand.u32 %v1733, 2147483648
  %v2927 = vor.u32 1.1754944e-38, %v2926
  %v2928 = vsel %vm2925, %v2927, %v2923
  %v2929 = vmul.f32 1.0, %v2928
  %v2930 = vrcp.pop %v1734
  %v2931 = vmul.f32 %v1734, %v2930
  %v2932 = vsub.f32 1.0, %v2931
  %v2933 = vmul.f32 %v2930, %v2932
  %v2934 = vadd.f32 %v2930, %v2933
  %vm2935 = vweird.f32 %v1734
  %vm2936 = vweird.f32 %v2930
  %vm2937 = vmor %vm2935, %vm2936
  %v2938 = vsel %vm2937, %v2930, %v2934
  %v2939 = vand.u32 2147483647, %v1734
  %vm2940 = vcmp.eq.f32.partialorder %v2939, 8.507059e+37
  %v2941 = vand.u32 %v1734, 2147483648
  %v2942 = vor.u32 1.1754944e-38, %v2941
  %v2943 = vsel %vm2940, %v2942, %v2938
  %v2944 = vmul.f32 1.0, %v2943
  %v2945 = vrcp.pop %v1735
  %v2946 = vmul.f32 %v1735, %v2945
  %v2947 = vsub.f32 1.0, %v2946
  %v2948 = vmul.f32 %v2945, %v2947
  %v2949 = vadd.f32 %v2945, %v2948
  %vm2950 = vweird.f32 %v1735
  %vm2951 = vweird.f32 %v2945
  %vm2952 = vmor %vm2950, %vm2951
  %v2953 = vsel %vm2952, %v2945, %v2949
  %v2954 = vand.u32 2147483647, %v1735
  %vm2955 = vcmp.eq.f32.partialorder %v2954, 8.507059e+37
  %v2956 = vand.u32 %v1735, 2147483648
  %v2957 = vor.u32 1.1754944e-38, %v2956
  %v2958 = vsel %vm2955, %v2957, %v2953
  %v2959 = vmul.f32 1.0, %v2958
  %v2960 = vrcp.pop %v1736
  %v2961 = vmul.f32 %v1736, %v2960
  %v2962 = vsub.f32 1.0, %v2961
  %v2963 = vmul.f32 %v2960, %v2962
  %v2964 = vadd.f32 %v2960, %v2963
  %vm2965 = vweird.f32 %v1736
  %vm2966 = vweird.f32 %v2960
  %vm2967 = vmor %vm2965, %vm2966
  %v2968 = vsel %vm2967, %v2960, %v2964
  %v2969 = vand.u32 2147483647, %v1736
  %vm2970 = vcmp.eq.f32.partialorder %v2969, 8.507059e+37
  %v2971 = vand.u32 %v1736, 2147483648
  %v2972 = vor.u32 1.1754944e-38, %v2971
  %v2973 = vsel %vm2970, %v2972, %v2968
  %v2974 = vmul.f32 1.0, %v2973
  %v2975 = vrcp.pop %v1737
  %v2976 = vmul.f32 %v1737, %v2975
  %v2977 = vsub.f32 1.0, %v2976
  %v2978 = vmul.f32 %v2975, %v2977
  %v2979 = vadd.f32 %v2975, %v2978
  %vm2980 = vweird.f32 %v1737
  %vm2981 = vweird.f32 %v2975
  %vm2982 = vmor %vm2980, %vm2981
  %v2983 = vsel %vm2982, %v2975, %v2979
  %v2984 = vand.u32 2147483647, %v1737
  %vm2985 = vcmp.eq.f32.partialorder %v2984, 8.507059e+37
  %v2986 = vand.u32 %v1737, 2147483648
  %v2987 = vor.u32 1.1754944e-38, %v2986
  %v2988 = vsel %vm2985, %v2987, %v2983
  %v2989 = vmul.f32 1.0, %v2988
  %v2990 = vrcp.pop %v1738
  %v2991 = vmul.f32 %v1738, %v2990
  %v2992 = vsub.f32 1.0, %v2991
  %v2993 = vmul.f32 %v2990, %v2992
  %v2994 = vadd.f32 %v2990, %v2993
  %vm2995 = vweird.f32 %v1738
  %vm2996 = vweird.f32 %v2990
  %vm2997 = vmor %vm2995, %vm2996
  %v2998 = vsel %vm2997, %v2990, %v2994
  %v2999 = vand.u32 2147483647, %v1738
  %vm3000 = vcmp.eq.f32.partialorder %v2999, 8.507059e+37
  %v3001 = vand.u32 %v1738, 2147483648
  %v3002 = vor.u32 1.1754944e-38, %v3001
  %v3003 = vsel %vm3000, %v3002, %v2998
  %v3004 = vmul.f32 1.0, %v3003
  %v3005 = vrcp.pop %v1739
  %v3006 = vmul.f32 %v1739, %v3005
  %v3007 = vsub.f32 1.0, %v3006
  %v3008 = vmul.f32 %v3005, %v3007
  %v3009 = vadd.f32 %v3005, %v3008
  %vm3010 = vweird.f32 %v1739
  %vm3011 = vweird.f32 %v3005
  %vm3012 = vmor %vm3010, %vm3011
  %v3013 = vsel %vm3012, %v3005, %v3009
  %v3014 = vand.u32 2147483647, %v1739
  %vm3015 = vcmp.eq.f32.partialorder %v3014, 8.507059e+37
  %v3016 = vand.u32 %v1739, 2147483648
  %v3017 = vor.u32 1.1754944e-38, %v3016
  %v3018 = vsel %vm3015, %v3017, %v3013
  %v3019 = vmul.f32 1.0, %v3018
  %v3020 = vrcp.pop %v1740
  %v3021 = vmul.f32 %v1740, %v3020
  %v3022 = vsub.f32 1.0, %v3021
  %v3023 = vmul.f32 %v3020, %v3022
  %v3024 = vadd.f32 %v3020, %v3023
  %vm3025 = vweird.f32 %v1740
  %vm3026 = vweird.f32 %v3020
  %vm3027 = vmor %vm3025, %vm3026
  %v3028 = vsel %vm3027, %v3020, %v3024
  %v3029 = vand.u32 2147483647, %v1740
  %vm3030 = vcmp.eq.f32.partialorder %v3029, 8.507059e+37
  %v3031 = vand.u32 %v1740, 2147483648
  %v3032 = vor.u32 1.1754944e-38, %v3031
  %v3033 = vsel %vm3030, %v3032, %v3028
  %v3034 = vmul.f32 1.0, %v3033
  %v3035 = vrcp.pop %v1741
  %v3036 = vmul.f32 %v1741, %v3035
  %v3037 = vsub.f32 1.0, %v3036
  %v3038 = vmul.f32 %v3035, %v3037
  %v3039 = vadd.f32 %v3035, %v3038
  %vm3040 = vweird.f32 %v1741
  %vm3041 = vweird.f32 %v3035
  %vm3042 = vmor %vm3040, %vm3041
  %v3043 = vsel %vm3042, %v3035, %v3039
  %v3044 = vand.u32 2147483647, %v1741
  %vm3045 = vcmp.eq.f32.partialorder %v3044, 8.507059e+37
  %v3046 = vand.u32 %v1741, 2147483648
  %v3047 = vor.u32 1.1754944e-38, %v3046
  %v3048 = vsel %vm3045, %v3047, %v3043
  %v3049 = vmul.f32 1.0, %v3048
  %v3050 = vrcp.pop %v1742
  %v3051 = vmul.f32 %v1742, %v3050
  %v3052 = vsub.f32 1.0, %v3051
  %v3053 = vmul.f32 %v3050, %v3052
  %v3054 = vadd.f32 %v3050, %v3053
  %vm3055 = vweird.f32 %v1742
  %vm3056 = vweird.f32 %v3050
  %vm3057 = vmor %vm3055, %vm3056
  %v3058 = vsel %vm3057, %v3050, %v3054
  %v3059 = vand.u32 2147483647, %v1742
  %vm3060 = vcmp.eq.f32.partialorder %v3059, 8.507059e+37
  %v3061 = vand.u32 %v1742, 2147483648
  %v3062 = vor.u32 1.1754944e-38, %v3061
  %v3063 = vsel %vm3060, %v3062, %v3058
  %v3064 = vmul.f32 1.0, %v3063
  %v3065 = vrcp.pop %v1743
  %v3066 = vmul.f32 %v1743, %v3065
  %v3067 = vsub.f32 1.0, %v3066
  %v3068 = vmul.f32 %v3065, %v3067
  %v3069 = vadd.f32 %v3065, %v3068
  %vm3070 = vweird.f32 %v1743
  %vm3071 = vweird.f32 %v3065
  %vm3072 = vmor %vm3070, %vm3071
  %v3073 = vsel %vm3072, %v3065, %v3069
  %v3074 = vand.u32 2147483647, %v1743
  %vm3075 = vcmp.eq.f32.partialorder %v3074, 8.507059e+37
  %v3076 = vand.u32 %v1743, 2147483648
  %v3077 = vor.u32 1.1754944e-38, %v3076
  %v3078 = vsel %vm3075, %v3077, %v3073
  %v3079 = vmul.f32 1.0, %v3078
  %v3080 = vrcp.pop %v1744
  %v3081 = vmul.f32 %v1744, %v3080
  %v3082 = vsub.f32 1.0, %v3081
  %v3083 = vmul.f32 %v3080, %v3082
  %v3084 = vadd.f32 %v3080, %v3083
  %vm3085 = vweird.f32 %v1744
  %vm3086 = vweird.f32 %v3080
  %vm3087 = vmor %vm3085, %vm3086
  %v3088 = vsel %vm3087, %v3080, %v3084
  %v3089 = vand.u32 2147483647, %v1744
  %vm3090 = vcmp.eq.f32.partialorder %v3089, 8.507059e+37
  %v3091 = vand.u32 %v1744, 2147483648
  %v3092 = vor.u32 1.1754944e-38, %v3091
  %v3093 = vsel %vm3090, %v3092, %v3088
  %v3094 = vmul.f32 1.0, %v3093
  %v3095 = vrcp.pop %v1745
  %v3096 = vmul.f32 %v1745, %v3095
  %v3097 = vsub.f32 1.0, %v3096
  %v3098 = vmul.f32 %v3095, %v3097
  %v3099 = vadd.f32 %v3095, %v3098
  %vm3100 = vweird.f32 %v1745
  %vm3101 = vweird.f32 %v3095
  %vm3102 = vmor %vm3100, %vm3101
  %v3103 = vsel %vm3102, %v3095, %v3099
  %v3104 = vand.u32 2147483647, %v1745
  %vm3105 = vcmp.eq.f32.partialorder %v3104, 8.507059e+37
  %v3106 = vand.u32 %v1745, 2147483648
  %v3107 = vor.u32 1.1754944e-38, %v3106
  %v3108 = vsel %vm3105, %v3107, %v3103
  %v3109 = vmul.f32 1.0, %v3108
  %v3110 = vrcp.pop %v1746
  %v3111 = vmul.f32 %v1746, %v3110
  %v3112 = vsub.f32 1.0, %v3111
  %v3113 = vmul.f32 %v3110, %v3112
  %v3114 = vadd.f32 %v3110, %v3113
  %vm3115 = vweird.f32 %v1746
  %vm3116 = vweird.f32 %v3110
  %vm3117 = vmor %vm3115, %vm3116
  %v3118 = vsel %vm3117, %v3110, %v3114
  %v3119 = vand.u32 2147483647, %v1746
  %vm3120 = vcmp.eq.f32.partialorder %v3119, 8.507059e+37
  %v3121 = vand.u32 %v1746, 2147483648
  %v3122 = vor.u32 1.1754944e-38, %v3121
  %v3123 = vsel %vm3120, %v3122, %v3118
  %v3124 = vmul.f32 1.0, %v3123
  %v3125 = vrcp.pop %v1747
  %v3126 = vmul.f32 %v1747, %v3125
  %v3127 = vsub.f32 1.0, %v3126
  %v3128 = vmul.f32 %v3125, %v3127
  %v3129 = vadd.f32 %v3125, %v3128
  %vm3130 = vweird.f32 %v1747
  %vm3131 = vweird.f32 %v3125
  %vm3132 = vmor %vm3130, %vm3131
  %v3133 = vsel %vm3132, %v3125, %v3129
  %v3134 = vand.u32 2147483647, %v1747
  %vm3135 = vcmp.eq.f32.partialorder %v3134, 8.507059e+37
  %v3136 = vand.u32 %v1747, 2147483648
  %v3137 = vor.u32 1.1754944e-38, %v3136
  %v3138 = vsel %vm3135, %v3137, %v3133
  %v3139 = vmul.f32 1.0, %v3138
  %v3140 = vrcp.pop %v1748
  %v3141 = vmul.f32 %v1748, %v3140
  %v3142 = vsub.f32 1.0, %v3141
  %v3143 = vmul.f32 %v3140, %v3142
  %v3144 = vadd.f32 %v3140, %v3143
  %vm3145 = vweird.f32 %v1748
  %vm3146 = vweird.f32 %v3140
  %vm3147 = vmor %vm3145, %vm3146
  %v3148 = vsel %vm3147, %v3140, %v3144
  %v3149 = vand.u32 2147483647, %v1748
  %vm3150 = vcmp.eq.f32.partialorder %v3149, 8.507059e+37
  %v3151 = vand.u32 %v1748, 2147483648
  %v3152 = vor.u32 1.1754944e-38, %v3151
  %v3153 = vsel %vm3150, %v3152, %v3148
  %v3154 = vmul.f32 1.0, %v3153
  %v3155 = vrcp.pop %v1749
  %v3156 = vmul.f32 %v1749, %v3155
  %v3157 = vsub.f32 1.0, %v3156
  %v3158 = vmul.f32 %v3155, %v3157
  %v3159 = vadd.f32 %v3155, %v3158
  %vm3160 = vweird.f32 %v1749
  %vm3161 = vweird.f32 %v3155
  %vm3162 = vmor %vm3160, %vm3161
  %v3163 = vsel %vm3162, %v3155, %v3159
  %v3164 = vand.u32 2147483647, %v1749
  %vm3165 = vcmp.eq.f32.partialorder %v3164, 8.507059e+37
  %v3166 = vand.u32 %v1749, 2147483648
  %v3167 = vor.u32 1.1754944e-38, %v3166
  %v3168 = vsel %vm3165, %v3167, %v3163
  %v3169 = vmul.f32 1.0, %v3168
  %v3170 = vrcp.pop %v1750
  %v3171 = vmul.f32 %v1750, %v3170
  %v3172 = vsub.f32 1.0, %v3171
  %v3173 = vmul.f32 %v3170, %v3172
  %v3174 = vadd.f32 %v3170, %v3173
  %vm3175 = vweird.f32 %v1750
  %vm3176 = vweird.f32 %v3170
  %vm3177 = vmor %vm3175, %vm3176
  %v3178 = vsel %vm3177, %v3170, %v3174
  %v3179 = vand.u32 2147483647, %v1750
  %vm3180 = vcmp.eq.f32.partialorder %v3179, 8.507059e+37
  %v3181 = vand.u32 %v1750, 2147483648
  %v3182 = vor.u32 1.1754944e-38, %v3181
  %v3183 = vsel %vm3180, %v3182, %v3178
  %v3184 = vmul.f32 1.0, %v3183
  %v3185 = vrcp.pop %v1751
  %v3186 = vmul.f32 %v1751, %v3185
  %v3187 = vsub.f32 1.0, %v3186
  %v3188 = vmul.f32 %v3185, %v3187
  %v3189 = vadd.f32 %v3185, %v3188
  %vm3190 = vweird.f32 %v1751
  %vm3191 = vweird.f32 %v3185
  %vm3192 = vmor %vm3190, %vm3191
  %v3193 = vsel %vm3192, %v3185, %v3189
  %v3194 = vand.u32 2147483647, %v1751
  %vm3195 = vcmp.eq.f32.partialorder %v3194, 8.507059e+37
  %v3196 = vand.u32 %v1751, 2147483648
  %v3197 = vor.u32 1.1754944e-38, %v3196
  %v3198 = vsel %vm3195, %v3197, %v3193
  %v3199 = vmul.f32 1.0, %v3198
  %v3200 = vrcp.pop %v1752
  %v3201 = vmul.f32 %v1752, %v3200
  %v3202 = vsub.f32 1.0, %v3201
  %v3203 = vmul.f32 %v3200, %v3202
  %v3204 = vadd.f32 %v3200, %v3203
  %vm3205 = vweird.f32 %v1752
  %vm3206 = vweird.f32 %v3200
  %vm3207 = vmor %vm3205, %vm3206
  %v3208 = vsel %vm3207, %v3200, %v3204
  %v3209 = vand.u32 2147483647, %v1752
  %vm3210 = vcmp.eq.f32.partialorder %v3209, 8.507059e+37
  %v3211 = vand.u32 %v1752, 2147483648
  %v3212 = vor.u32 1.1754944e-38, %v3211
  %v3213 = vsel %vm3210, %v3212, %v3208
  %v3214 = vmul.f32 1.0, %v3213
  %v3215 = vrcp.pop %v1753
  %v3216 = vmul.f32 %v1753, %v3215
  %v3217 = vsub.f32 1.0, %v3216
  %v3218 = vmul.f32 %v3215, %v3217
  %v3219 = vadd.f32 %v3215, %v3218
  %vm3220 = vweird.f32 %v1753
  %vm3221 = vweird.f32 %v3215
  %vm3222 = vmor %vm3220, %vm3221
  %v3223 = vsel %vm3222, %v3215, %v3219
  %v3224 = vand.u32 2147483647, %v1753
  %vm3225 = vcmp.eq.f32.partialorder %v3224, 8.507059e+37
  %v3226 = vand.u32 %v1753, 2147483648
  %v3227 = vor.u32 1.1754944e-38, %v3226
  %v3228 = vsel %vm3225, %v3227, %v3223
  %v3229 = vmul.f32 1.0, %v3228
  %v3230 = vrcp.pop %v1754
  %v3231 = vmul.f32 %v1754, %v3230
  %v3232 = vsub.f32 1.0, %v3231
  %v3233 = vmul.f32 %v3230, %v3232
  %v3234 = vadd.f32 %v3230, %v3233
  %vm3235 = vweird.f32 %v1754
  %vm3236 = vweird.f32 %v3230
  %vm3237 = vmor %vm3235, %vm3236
  %v3238 = vsel %vm3237, %v3230, %v3234
  %v3239 = vand.u32 2147483647, %v1754
  %vm3240 = vcmp.eq.f32.partialorder %v3239, 8.507059e+37
  %v3241 = vand.u32 %v1754, 2147483648
  %v3242 = vor.u32 1.1754944e-38, %v3241
  %v3243 = vsel %vm3240, %v3242, %v3238
  %v3244 = vmul.f32 1.0, %v3243
  %v3245 = vrcp.pop %v1755
  %v3246 = vmul.f32 %v1755, %v3245
  %v3247 = vsub.f32 1.0, %v3246
  %v3248 = vmul.f32 %v3245, %v3247
  %v3249 = vadd.f32 %v3245, %v3248
  %vm3250 = vweird.f32 %v1755
  %vm3251 = vweird.f32 %v3245
  %vm3252 = vmor %vm3250, %vm3251
  %v3253 = vsel %vm3252, %v3245, %v3249
  %v3254 = vand.u32 2147483647, %v1755
  %vm3255 = vcmp.eq.f32.partialorder %v3254, 8.507059e+37
  %v3256 = vand.u32 %v1755, 2147483648
  %v3257 = vor.u32 1.1754944e-38, %v3256
  %v3258 = vsel %vm3255, %v3257, %v3253
  %v3259 = vmul.f32 1.0, %v3258
  %v3260 = vrcp.pop %v1756
  %v3261 = vmul.f32 %v1756, %v3260
  %v3262 = vsub.f32 1.0, %v3261
  %v3263 = vmul.f32 %v3260, %v3262
  %v3264 = vadd.f32 %v3260, %v3263
  %vm3265 = vweird.f32 %v1756
  %vm3266 = vweird.f32 %v3260
  %vm3267 = vmor %vm3265, %vm3266
  %v3268 = vsel %vm3267, %v3260, %v3264
  %v3269 = vand.u32 2147483647, %v1756
  %vm3270 = vcmp.eq.f32.partialorder %v3269, 8.507059e+37
  %v3271 = vand.u32 %v1756, 2147483648
  %v3272 = vor.u32 1.1754944e-38, %v3271
  %v3273 = vsel %vm3270, %v3272, %v3268
  %v3274 = vmul.f32 1.0, %v3273
  %v3275 = vrcp.pop %v1757
  %v3276 = vmul.f32 %v1757, %v3275
  %v3277 = vsub.f32 1.0, %v3276
  %v3278 = vmul.f32 %v3275, %v3277
  %v3279 = vadd.f32 %v3275, %v3278
  %vm3280 = vweird.f32 %v1757
  %vm3281 = vweird.f32 %v3275
  %vm3282 = vmor %vm3280, %vm3281
  %v3283 = vsel %vm3282, %v3275, %v3279
  %v3284 = vand.u32 2147483647, %v1757
  %vm3285 = vcmp.eq.f32.partialorder %v3284, 8.507059e+37
  %v3286 = vand.u32 %v1757, 2147483648
  %v3287 = vor.u32 1.1754944e-38, %v3286
  %v3288 = vsel %vm3285, %v3287, %v3283
  %v3289 = vmul.f32 1.0, %v3288
  %v3290 = vrcp.pop %v1758
  %v3291 = vmul.f32 %v1758, %v3290
  %v3292 = vsub.f32 1.0, %v3291
  %v3293 = vmul.f32 %v3290, %v3292
  %v3294 = vadd.f32 %v3290, %v3293
  %vm3295 = vweird.f32 %v1758
  %vm3296 = vweird.f32 %v3290
  %vm3297 = vmor %vm3295, %vm3296
  %v3298 = vsel %vm3297, %v3290, %v3294
  %v3299 = vand.u32 2147483647, %v1758
  %vm3300 = vcmp.eq.f32.partialorder %v3299, 8.507059e+37
  %v3301 = vand.u32 %v1758, 2147483648
  %v3302 = vor.u32 1.1754944e-38, %v3301
  %v3303 = vsel %vm3300, %v3302, %v3298
  %v3304 = vmul.f32 1.0, %v3303
  %v3305 = vrcp.pop %v1759
  %v3306 = vmul.f32 %v1759, %v3305
  %v3307 = vsub.f32 1.0, %v3306
  %v3308 = vmul.f32 %v3305, %v3307
  %v3309 = vadd.f32 %v3305, %v3308
  %vm3310 = vweird.f32 %v1759
  %vm3311 = vweird.f32 %v3305
  %vm3312 = vmor %vm3310, %vm3311
  %v3313 = vsel %vm3312, %v3305, %v3309
  %v3314 = vand.u32 2147483647, %v1759
  %vm3315 = vcmp.eq.f32.partialorder %v3314, 8.507059e+37
  %v3316 = vand.u32 %v1759, 2147483648
  %v3317 = vor.u32 1.1754944e-38, %v3316
  %v3318 = vsel %vm3315, %v3317, %v3313
  %v3319 = vmul.f32 1.0, %v3318
  %v3320 = vrcp.pop %v1760
  %v3321 = vmul.f32 %v1760, %v3320
  %v3322 = vsub.f32 1.0, %v3321
  %v3323 = vmul.f32 %v3320, %v3322
  %v3324 = vadd.f32 %v3320, %v3323
  %vm3325 = vweird.f32 %v1760
  %vm3326 = vweird.f32 %v3320
  %vm3327 = vmor %vm3325, %vm3326
  %v3328 = vsel %vm3327, %v3320, %v3324
  %v3329 = vand.u32 2147483647, %v1760
  %vm3330 = vcmp.eq.f32.partialorder %v3329, 8.507059e+37
  %v3331 = vand.u32 %v1760, 2147483648
  %v3332 = vor.u32 1.1754944e-38, %v3331
  %v3333 = vsel %vm3330, %v3332, %v3328
  %v3334 = vmul.f32 1.0, %v3333
  %v3335 = vrcp.pop %v1761
  %v3336 = vmul.f32 %v1761, %v3335
  %v3337 = vsub.f32 1.0, %v3336
  %v3338 = vmul.f32 %v3335, %v3337
  %v3339 = vadd.f32 %v3335, %v3338
  %vm3340 = vweird.f32 %v1761
  %vm3341 = vweird.f32 %v3335
  %vm3342 = vmor %vm3340, %vm3341
  %v3343 = vsel %vm3342, %v3335, %v3339
  %v3344 = vand.u32 2147483647, %v1761
  %vm3345 = vcmp.eq.f32.partialorder %v3344, 8.507059e+37
  %v3346 = vand.u32 %v1761, 2147483648
  %v3347 = vor.u32 1.1754944e-38, %v3346
  %v3348 = vsel %vm3345, %v3347, %v3343
  %v3349 = vmul.f32 1.0, %v3348
  %v3350 = vrcp.pop %v1762
  %v3351 = vmul.f32 %v1762, %v3350
  %v3352 = vsub.f32 1.0, %v3351
  %v3353 = vmul.f32 %v3350, %v3352
  %v3354 = vadd.f32 %v3350, %v3353
  %vm3355 = vweird.f32 %v1762
  %vm3356 = vweird.f32 %v3350
  %vm3357 = vmor %vm3355, %vm3356
  %v3358 = vsel %vm3357, %v3350, %v3354
  %v3359 = vand.u32 2147483647, %v1762
  %vm3360 = vcmp.eq.f32.partialorder %v3359, 8.507059e+37
  %v3361 = vand.u32 %v1762, 2147483648
  %v3362 = vor.u32 1.1754944e-38, %v3361
  %v3363 = vsel %vm3360, %v3362, %v3358
  %v3364 = vmul.f32 1.0, %v3363
  %v3365 = vrcp.pop %v1763
  %v3366 = vmul.f32 %v1763, %v3365
  %v3367 = vsub.f32 1.0, %v3366
  %v3368 = vmul.f32 %v3365, %v3367
  %v3369 = vadd.f32 %v3365, %v3368
  %vm3370 = vweird.f32 %v1763
  %vm3371 = vweird.f32 %v3365
  %vm3372 = vmor %vm3370, %vm3371
  %v3373 = vsel %vm3372, %v3365, %v3369
  %v3374 = vand.u32 2147483647, %v1763
  %vm3375 = vcmp.eq.f32.partialorder %v3374, 8.507059e+37
  %v3376 = vand.u32 %v1763, 2147483648
  %v3377 = vor.u32 1.1754944e-38, %v3376
  %v3378 = vsel %vm3375, %v3377, %v3373
  %v3379 = vmul.f32 1.0, %v3378
  %v3380 = vrcp.pop %v1764
  %v3381 = vmul.f32 %v1764, %v3380
  %v3382 = vsub.f32 1.0, %v3381
  %v3383 = vmul.f32 %v3380, %v3382
  %v3384 = vadd.f32 %v3380, %v3383
  %vm3385 = vweird.f32 %v1764
  %vm3386 = vweird.f32 %v3380
  %vm3387 = vmor %vm3385, %vm3386
  %v3388 = vsel %vm3387, %v3380, %v3384
  %v3389 = vand.u32 2147483647, %v1764
  %vm3390 = vcmp.eq.f32.partialorder %v3389, 8.507059e+37
  %v3391 = vand.u32 %v1764, 2147483648
  %v3392 = vor.u32 1.1754944e-38, %v3391
  %v3393 = vsel %vm3390, %v3392, %v3388
  %v3394 = vmul.f32 1.0, %v3393
  %v3395 = vrcp.pop %v1765
  %v3396 = vmul.f32 %v1765, %v3395
  %v3397 = vsub.f32 1.0, %v3396
  %v3398 = vmul.f32 %v3395, %v3397
  %v3399 = vadd.f32 %v3395, %v3398
  %vm3400 = vweird.f32 %v1765
  %vm3401 = vweird.f32 %v3395
  %vm3402 = vmor %vm3400, %vm3401
  %v3403 = vsel %vm3402, %v3395, %v3399
  %v3404 = vand.u32 2147483647, %v1765
  %vm3405 = vcmp.eq.f32.partialorder %v3404, 8.507059e+37
  %v3406 = vand.u32 %v1765, 2147483648
  %v3407 = vor.u32 1.1754944e-38, %v3406
  %v3408 = vsel %vm3405, %v3407, %v3403
  %v3409 = vmul.f32 1.0, %v3408
  %v3410 = vrcp.pop %v1766
  %v3411 = vmul.f32 %v1766, %v3410
  %v3412 = vsub.f32 1.0, %v3411
  %v3413 = vmul.f32 %v3410, %v3412
  %v3414 = vadd.f32 %v3410, %v3413
  %vm3415 = vweird.f32 %v1766
  %vm3416 = vweird.f32 %v3410
  %vm3417 = vmor %vm3415, %vm3416
  %v3418 = vsel %vm3417, %v3410, %v3414
  %v3419 = vand.u32 2147483647, %v1766
  %vm3420 = vcmp.eq.f32.partialorder %v3419, 8.507059e+37
  %v3421 = vand.u32 %v1766, 2147483648
  %v3422 = vor.u32 1.1754944e-38, %v3421
  %v3423 = vsel %vm3420, %v3422, %v3418
  %v3424 = vmul.f32 1.0, %v3423
  %v3425 = vrcp.pop %v1767
  %v3426 = vmul.f32 %v1767, %v3425
  %v3427 = vsub.f32 1.0, %v3426
  %v3428 = vmul.f32 %v3425, %v3427
  %v3429 = vadd.f32 %v3425, %v3428
  %vm3430 = vweird.f32 %v1767
  %vm3431 = vweird.f32 %v3425
  %vm3432 = vmor %vm3430, %vm3431
  %v3433 = vsel %vm3432, %v3425, %v3429
  %v3434 = vand.u32 2147483647, %v1767
  %vm3435 = vcmp.eq.f32.partialorder %v3434, 8.507059e+37
  %v3436 = vand.u32 %v1767, 2147483648
  %v3437 = vor.u32 1.1754944e-38, %v3436
  %v3438 = vsel %vm3435, %v3437, %v3433
  %v3439 = vmul.f32 1.0, %v3438
  %v3440 = vrcp.pop %v1768
  %v3441 = vmul.f32 %v1768, %v3440
  %v3442 = vsub.f32 1.0, %v3441
  %v3443 = vmul.f32 %v3440, %v3442
  %v3444 = vadd.f32 %v3440, %v3443
  %vm3445 = vweird.f32 %v1768
  %vm3446 = vweird.f32 %v3440
  %vm3447 = vmor %vm3445, %vm3446
  %v3448 = vsel %vm3447, %v3440, %v3444
  %v3449 = vand.u32 2147483647, %v1768
  %vm3450 = vcmp.eq.f32.partialorder %v3449, 8.507059e+37
  %v3451 = vand.u32 %v1768, 2147483648
  %v3452 = vor.u32 1.1754944e-38, %v3451
  %v3453 = vsel %vm3450, %v3452, %v3448
  %v3454 = vmul.f32 1.0, %v3453
  %v3455 = vrcp.pop %v1769
  %v3456 = vmul.f32 %v1769, %v3455
  %v3457 = vsub.f32 1.0, %v3456
  %v3458 = vmul.f32 %v3455, %v3457
  %v3459 = vadd.f32 %v3455, %v3458
  %vm3460 = vweird.f32 %v1769
  %vm3461 = vweird.f32 %v3455
  %vm3462 = vmor %vm3460, %vm3461
  %v3463 = vsel %vm3462, %v3455, %v3459
  %v3464 = vand.u32 2147483647, %v1769
  %vm3465 = vcmp.eq.f32.partialorder %v3464, 8.507059e+37
  %v3466 = vand.u32 %v1769, 2147483648
  %v3467 = vor.u32 1.1754944e-38, %v3466
  %v3468 = vsel %vm3465, %v3467, %v3463
  %v3469 = vmul.f32 1.0, %v3468
  %v3470 = vrcp.pop %v1770
  %v3471 = vmul.f32 %v1770, %v3470
  %v3472 = vsub.f32 1.0, %v3471
  %v3473 = vmul.f32 %v3470, %v3472
  %v3474 = vadd.f32 %v3470, %v3473
  %vm3475 = vweird.f32 %v1770
  %vm3476 = vweird.f32 %v3470
  %vm3477 = vmor %vm3475, %vm3476
  %v3478 = vsel %vm3477, %v3470, %v3474
  %v3479 = vand.u32 2147483647, %v1770
  %vm3480 = vcmp.eq.f32.partialorder %v3479, 8.507059e+37
  %v3481 = vand.u32 %v1770, 2147483648
  %v3482 = vor.u32 1.1754944e-38, %v3481
  %v3483 = vsel %vm3480, %v3482, %v3478
  %v3484 = vmul.f32 1.0, %v3483
  %v3485 = vrcp.pop %v1771
  %v3486 = vmul.f32 %v1771, %v3485
  %v3487 = vsub.f32 1.0, %v3486
  %v3488 = vmul.f32 %v3485, %v3487
  %v3489 = vadd.f32 %v3485, %v3488
  %vm3490 = vweird.f32 %v1771
  %vm3491 = vweird.f32 %v3485
  %vm3492 = vmor %vm3490, %vm3491
  %v3493 = vsel %vm3492, %v3485, %v3489
  %v3494 = vand.u32 2147483647, %v1771
  %vm3495 = vcmp.eq.f32.partialorder %v3494, 8.507059e+37
  %v3496 = vand.u32 %v1771, 2147483648
  %v3497 = vor.u32 1.1754944e-38, %v3496
  %v3498 = vsel %vm3495, %v3497, %v3493
  %v3499 = vmul.f32 1.0, %v3498
  %v3500 = vrcp.pop %v1772
  %v3501 = vmul.f32 %v1772, %v3500
  %v3502 = vsub.f32 1.0, %v3501
  %v3503 = vmul.f32 %v3500, %v3502
  %v3504 = vadd.f32 %v3500, %v3503
  %vm3505 = vweird.f32 %v1772
  %vm3506 = vweird.f32 %v3500
  %vm3507 = vmor %vm3505, %vm3506
  %v3508 = vsel %vm3507, %v3500, %v3504
  %v3509 = vand.u32 2147483647, %v1772
  %vm3510 = vcmp.eq.f32.partialorder %v3509, 8.507059e+37
  %v3511 = vand.u32 %v1772, 2147483648
  %v3512 = vor.u32 1.1754944e-38, %v3511
  %v3513 = vsel %vm3510, %v3512, %v3508
  %v3514 = vmul.f32 1.0, %v3513
  %v3515 = vrcp.pop %v1773
  %v3516 = vmul.f32 %v1773, %v3515
  %v3517 = vsub.f32 1.0, %v3516
  %v3518 = vmul.f32 %v3515, %v3517
  %v3519 = vadd.f32 %v3515, %v3518
  %vm3520 = vweird.f32 %v1773
  %vm3521 = vweird.f32 %v3515
  %vm3522 = vmor %vm3520, %vm3521
  %v3523 = vsel %vm3522, %v3515, %v3519
  %v3524 = vand.u32 2147483647, %v1773
  %vm3525 = vcmp.eq.f32.partialorder %v3524, 8.507059e+37
  %v3526 = vand.u32 %v1773, 2147483648
  %v3527 = vor.u32 1.1754944e-38, %v3526
  %v3528 = vsel %vm3525, %v3527, %v3523
  %v3529 = vmul.f32 1.0, %v3528
  %v3530 = vrcp.pop %v1774
  %v3531 = vmul.f32 %v1774, %v3530
  %v3532 = vsub.f32 1.0, %v3531
  %v3533 = vmul.f32 %v3530, %v3532
  %v3534 = vadd.f32 %v3530, %v3533
  %vm3535 = vweird.f32 %v1774
  %vm3536 = vweird.f32 %v3530
  %vm3537 = vmor %vm3535, %vm3536
  %v3538 = vsel %vm3537, %v3530, %v3534
  %v3539 = vand.u32 2147483647, %v1774
  %vm3540 = vcmp.eq.f32.partialorder %v3539, 8.507059e+37
  %v3541 = vand.u32 %v1774, 2147483648
  %v3542 = vor.u32 1.1754944e-38, %v3541
  %v3543 = vsel %vm3540, %v3542, %v3538
  %v3544 = vmul.f32 1.0, %v3543
  %v3545 = vrcp.pop %v1775
  %v3546 = vmul.f32 %v1775, %v3545
  %v3547 = vsub.f32 1.0, %v3546
  %v3548 = vmul.f32 %v3545, %v3547
  %v3549 = vadd.f32 %v3545, %v3548
  %vm3550 = vweird.f32 %v1775
  %vm3551 = vweird.f32 %v3545
  %vm3552 = vmor %vm3550, %vm3551
  %v3553 = vsel %vm3552, %v3545, %v3549
  %v3554 = vand.u32 2147483647, %v1775
  %vm3555 = vcmp.eq.f32.partialorder %v3554, 8.507059e+37
  %v3556 = vand.u32 %v1775, 2147483648
  %v3557 = vor.u32 1.1754944e-38, %v3556
  %v3558 = vsel %vm3555, %v3557, %v3553
  %v3559 = vmul.f32 1.0, %v3558
  %v3560 = vrcp.pop %v1776
  %v3561 = vmul.f32 %v1776, %v3560
  %v3562 = vsub.f32 1.0, %v3561
  %v3563 = vmul.f32 %v3560, %v3562
  %v3564 = vadd.f32 %v3560, %v3563
  %vm3565 = vweird.f32 %v1776
  %vm3566 = vweird.f32 %v3560
  %vm3567 = vmor %vm3565, %vm3566
  %v3568 = vsel %vm3567, %v3560, %v3564
  %v3569 = vand.u32 2147483647, %v1776
  %vm3570 = vcmp.eq.f32.partialorder %v3569, 8.507059e+37
  %v3571 = vand.u32 %v1776, 2147483648
  %v3572 = vor.u32 1.1754944e-38, %v3571
  %v3573 = vsel %vm3570, %v3572, %v3568
  %v3574 = vmul.f32 1.0, %v3573
  %v3575 = vrcp.pop %v1777
  %v3576 = vmul.f32 %v1777, %v3575
  %v3577 = vsub.f32 1.0, %v3576
  %v3578 = vmul.f32 %v3575, %v3577
  %v3579 = vadd.f32 %v3575, %v3578
  %vm3580 = vweird.f32 %v1777
  %vm3581 = vweird.f32 %v3575
  %vm3582 = vmor %vm3580, %vm3581
  %v3583 = vsel %vm3582, %v3575, %v3579
  %v3584 = vand.u32 2147483647, %v1777
  %vm3585 = vcmp.eq.f32.partialorder %v3584, 8.507059e+37
  %v3586 = vand.u32 %v1777, 2147483648
  %v3587 = vor.u32 1.1754944e-38, %v3586
  %v3588 = vsel %vm3585, %v3587, %v3583
  %v3589 = vmul.f32 1.0, %v3588
  %v3590 = vrcp.pop %v1778
  %v3591 = vmul.f32 %v1778, %v3590
  %v3592 = vsub.f32 1.0, %v3591
  %v3593 = vmul.f32 %v3590, %v3592
  %v3594 = vadd.f32 %v3590, %v3593
  %vm3595 = vweird.f32 %v1778
  %vm3596 = vweird.f32 %v3590
  %vm3597 = vmor %vm3595, %vm3596
  %v3598 = vsel %vm3597, %v3590, %v3594
  %v3599 = vand.u32 2147483647, %v1778
  %vm3600 = vcmp.eq.f32.partialorder %v3599, 8.507059e+37
  %v3601 = vand.u32 %v1778, 2147483648
  %v3602 = vor.u32 1.1754944e-38, %v3601
  %v3603 = vsel %vm3600, %v3602, %v3598
  %v3604 = vmul.f32 1.0, %v3603
  %v3605 = vrcp.pop %v1779
  %v3606 = vmul.f32 %v1779, %v3605
  %v3607 = vsub.f32 1.0, %v3606
  %v3608 = vmul.f32 %v3605, %v3607
  %v3609 = vadd.f32 %v3605, %v3608
  %vm3610 = vweird.f32 %v1779
  %vm3611 = vweird.f32 %v3605
  %vm3612 = vmor %vm3610, %vm3611
  %v3613 = vsel %vm3612, %v3605, %v3609
  %v3614 = vand.u32 2147483647, %v1779
  %vm3615 = vcmp.eq.f32.partialorder %v3614, 8.507059e+37
  %v3616 = vand.u32 %v1779, 2147483648
  %v3617 = vor.u32 1.1754944e-38, %v3616
  %v3618 = vsel %vm3615, %v3617, %v3613
  %v3619 = vmul.f32 1.0, %v3618
  %v3620 = vrcp.pop %v1780
  %v3621 = vmul.f32 %v1780, %v3620
  %v3622 = vsub.f32 1.0, %v3621
  %v3623 = vmul.f32 %v3620, %v3622
  %v3624 = vadd.f32 %v3620, %v3623
  %vm3625 = vweird.f32 %v1780
  %vm3626 = vweird.f32 %v3620
  %vm3627 = vmor %vm3625, %vm3626
  %v3628 = vsel %vm3627, %v3620, %v3624
  %v3629 = vand.u32 2147483647, %v1780
  %vm3630 = vcmp.eq.f32.partialorder %v3629, 8.507059e+37
  %v3631 = vand.u32 %v1780, 2147483648
  %v3632 = vor.u32 1.1754944e-38, %v3631
  %v3633 = vsel %vm3630, %v3632, %v3628
  %v3634 = vmul.f32 1.0, %v3633
  %v3635 = vrcp.pop %v1781
  %v3636 = vmul.f32 %v1781, %v3635
  %v3637 = vsub.f32 1.0, %v3636
  %v3638 = vmul.f32 %v3635, %v3637
  %v3639 = vadd.f32 %v3635, %v3638
  %vm3640 = vweird.f32 %v1781
  %vm3641 = vweird.f32 %v3635
  %vm3642 = vmor %vm3640, %vm3641
  %v3643 = vsel %vm3642, %v3635, %v3639
  %v3644 = vand.u32 2147483647, %v1781
  %vm3645 = vcmp.eq.f32.partialorder %v3644, 8.507059e+37
  %v3646 = vand.u32 %v1781, 2147483648
  %v3647 = vor.u32 1.1754944e-38, %v3646
  %v3648 = vsel %vm3645, %v3647, %v3643
  %v3649 = vmul.f32 1.0, %v3648
  %v3650 = vrcp.pop %v1782
  %v3651 = vmul.f32 %v1782, %v3650
  %v3652 = vsub.f32 1.0, %v3651
  %v3653 = vmul.f32 %v3650, %v3652
  %v3654 = vadd.f32 %v3650, %v3653
  %vm3655 = vweird.f32 %v1782
  %vm3656 = vweird.f32 %v3650
  %vm3657 = vmor %vm3655, %vm3656
  %v3658 = vsel %vm3657, %v3650, %v3654
  %v3659 = vand.u32 2147483647, %v1782
  %vm3660 = vcmp.eq.f32.partialorder %v3659, 8.507059e+37
  %v3661 = vand.u32 %v1782, 2147483648
  %v3662 = vor.u32 1.1754944e-38, %v3661
  %v3663 = vsel %vm3660, %v3662, %v3658
  %v3664 = vmul.f32 1.0, %v3663
  %v3665 = vrcp.pop %v1783
  %v3666 = vmul.f32 %v1783, %v3665
  %v3667 = vsub.f32 1.0, %v3666
  %v3668 = vmul.f32 %v3665, %v3667
  %v3669 = vadd.f32 %v3665, %v3668
  %vm3670 = vweird.f32 %v1783
  %vm3671 = vweird.f32 %v3665
  %vm3672 = vmor %vm3670, %vm3671
  %v3673 = vsel %vm3672, %v3665, %v3669
  %v3674 = vand.u32 2147483647, %v1783
  %vm3675 = vcmp.eq.f32.partialorder %v3674, 8.507059e+37
  %v3676 = vand.u32 %v1783, 2147483648
  %v3677 = vor.u32 1.1754944e-38, %v3676
  %v3678 = vsel %vm3675, %v3677, %v3673
  %v3679 = vmul.f32 1.0, %v3678
  %v3680 = vrcp.pop %v1784
  %v3681 = vmul.f32 %v1784, %v3680
  %v3682 = vsub.f32 1.0, %v3681
  %v3683 = vmul.f32 %v3680, %v3682
  %v3684 = vadd.f32 %v3680, %v3683
  %vm3685 = vweird.f32 %v1784
  %vm3686 = vweird.f32 %v3680
  %vm3687 = vmor %vm3685, %vm3686
  %v3688 = vsel %vm3687, %v3680, %v3684
  %v3689 = vand.u32 2147483647, %v1784
  %vm3690 = vcmp.eq.f32.partialorder %v3689, 8.507059e+37
  %v3691 = vand.u32 %v1784, 2147483648
  %v3692 = vor.u32 1.1754944e-38, %v3691
  %v3693 = vsel %vm3690, %v3692, %v3688
  %v3694 = vmul.f32 1.0, %v3693
  %v3695 = vrcp.pop %v1785
  %v3696 = vmul.f32 %v1785, %v3695
  %v3697 = vsub.f32 1.0, %v3696
  %v3698 = vmul.f32 %v3695, %v3697
  %v3699 = vadd.f32 %v3695, %v3698
  %vm3700 = vweird.f32 %v1785
  %vm3701 = vweird.f32 %v3695
  %vm3702 = vmor %vm3700, %vm3701
  %v3703 = vsel %vm3702, %v3695, %v3699
  %v3704 = vand.u32 2147483647, %v1785
  %vm3705 = vcmp.eq.f32.partialorder %v3704, 8.507059e+37
  %v3706 = vand.u32 %v1785, 2147483648
  %v3707 = vor.u32 1.1754944e-38, %v3706
  %v3708 = vsel %vm3705, %v3707, %v3703
  %v3709 = vmul.f32 1.0, %v3708
  %v3710 = vrcp.pop %v1786
  %v3711 = vmul.f32 %v1786, %v3710
  %v3712 = vsub.f32 1.0, %v3711
  %v3713 = vmul.f32 %v3710, %v3712
  %v3714 = vadd.f32 %v3710, %v3713
  %vm3715 = vweird.f32 %v1786
  %vm3716 = vweird.f32 %v3710
  %vm3717 = vmor %vm3715, %vm3716
  %v3718 = vsel %vm3717, %v3710, %v3714
  %v3719 = vand.u32 2147483647, %v1786
  %vm3720 = vcmp.eq.f32.partialorder %v3719, 8.507059e+37
  %v3721 = vand.u32 %v1786, 2147483648
  %v3722 = vor.u32 1.1754944e-38, %v3721
  %v3723 = vsel %vm3720, %v3722, %v3718
  %v3724 = vmul.f32 1.0, %v3723
  %v3725 = vrcp.pop %v1787
  %v3726 = vmul.f32 %v1787, %v3725
  %v3727 = vsub.f32 1.0, %v3726
  %v3728 = vmul.f32 %v3725, %v3727
  %v3729 = vadd.f32 %v3725, %v3728
  %vm3730 = vweird.f32 %v1787
  %vm3731 = vweird.f32 %v3725
  %vm3732 = vmor %vm3730, %vm3731
  %v3733 = vsel %vm3732, %v3725, %v3729
  %v3734 = vand.u32 2147483647, %v1787
  %vm3735 = vcmp.eq.f32.partialorder %v3734, 8.507059e+37
  %v3736 = vand.u32 %v1787, 2147483648
  %v3737 = vor.u32 1.1754944e-38, %v3736
  %v3738 = vsel %vm3735, %v3737, %v3733
  %v3739 = vmul.f32 1.0, %v3738
  %v3740 = vrcp.pop %v1788
  %v3741 = vmul.f32 %v1788, %v3740
  %v3742 = vsub.f32 1.0, %v3741
  %v3743 = vmul.f32 %v3740, %v3742
  %v3744 = vadd.f32 %v3740, %v3743
  %vm3745 = vweird.f32 %v1788
  %vm3746 = vweird.f32 %v3740
  %vm3747 = vmor %vm3745, %vm3746
  %v3748 = vsel %vm3747, %v3740, %v3744
  %v3749 = vand.u32 2147483647, %v1788
  %vm3750 = vcmp.eq.f32.partialorder %v3749, 8.507059e+37
  %v3751 = vand.u32 %v1788, 2147483648
  %v3752 = vor.u32 1.1754944e-38, %v3751
  %v3753 = vsel %vm3750, %v3752, %v3748
  %v3754 = vmul.f32 1.0, %v3753
  %v3755 = vrcp.pop %v1789
  %v3756 = vmul.f32 %v1789, %v3755
  %v3757 = vsub.f32 1.0, %v3756
  %v3758 = vmul.f32 %v3755, %v3757
  %v3759 = vadd.f32 %v3755, %v3758
  %vm3760 = vweird.f32 %v1789
  %vm3761 = vweird.f32 %v3755
  %vm3762 = vmor %vm3760, %vm3761
  %v3763 = vsel %vm3762, %v3755, %v3759
  %v3764 = vand.u32 2147483647, %v1789
  %vm3765 = vcmp.eq.f32.partialorder %v3764, 8.507059e+37
  %v3766 = vand.u32 %v1789, 2147483648
  %v3767 = vor.u32 1.1754944e-38, %v3766
  %v3768 = vsel %vm3765, %v3767, %v3763
  %v3769 = vmul.f32 1.0, %v3768
  %v3770 = vrcp.pop %v1790
  %v3771 = vmul.f32 %v1790, %v3770
  %v3772 = vsub.f32 1.0, %v3771
  %v3773 = vmul.f32 %v3770, %v3772
  %v3774 = vadd.f32 %v3770, %v3773
  %vm3775 = vweird.f32 %v1790
  %vm3776 = vweird.f32 %v3770
  %vm3777 = vmor %vm3775, %vm3776
  %v3778 = vsel %vm3777, %v3770, %v3774
  %v3779 = vand.u32 2147483647, %v1790
  %vm3780 = vcmp.eq.f32.partialorder %v3779, 8.507059e+37
  %v3781 = vand.u32 %v1790, 2147483648
  %v3782 = vor.u32 1.1754944e-38, %v3781
  %v3783 = vsel %vm3780, %v3782, %v3778
  %v3784 = vmul.f32 1.0, %v3783
  %v3785 = vrcp.pop %v1791
  %v3786 = vmul.f32 %v1791, %v3785
  %v3787 = vsub.f32 1.0, %v3786
  %v3788 = vmul.f32 %v3785, %v3787
  %v3789 = vadd.f32 %v3785, %v3788
  %vm3790 = vweird.f32 %v1791
  %vm3791 = vweird.f32 %v3785
  %vm3792 = vmor %vm3790, %vm3791
  %v3793 = vsel %vm3792, %v3785, %v3789
  %v3794 = vand.u32 2147483647, %v1791
  %vm3795 = vcmp.eq.f32.partialorder %v3794, 8.507059e+37
  %v3796 = vand.u32 %v1791, 2147483648
  %v3797 = vor.u32 1.1754944e-38, %v3796
  %v3798 = vsel %vm3795, %v3797, %v3793
  %v3799 = vmul.f32 1.0, %v3798
  %v3800 = vrcp.pop %v1792
  %v3801 = vmul.f32 %v1792, %v3800
  %v3802 = vsub.f32 1.0, %v3801
  %v3803 = vmul.f32 %v3800, %v3802
  %v3804 = vadd.f32 %v3800, %v3803
  %vm3805 = vweird.f32 %v1792
  %vm3806 = vweird.f32 %v3800
  %vm3807 = vmor %vm3805, %vm3806
  %v3808 = vsel %vm3807, %v3800, %v3804
  %v3809 = vand.u32 2147483647, %v1792
  %vm3810 = vcmp.eq.f32.partialorder %v3809, 8.507059e+37
  %v3811 = vand.u32 %v1792, 2147483648
  %v3812 = vor.u32 1.1754944e-38, %v3811
  %v3813 = vsel %vm3810, %v3812, %v3808
  %v3814 = vmul.f32 1.0, %v3813
  %v3815 = vrcp.pop %v1793
  %v3816 = vmul.f32 %v1793, %v3815
  %v3817 = vsub.f32 1.0, %v3816
  %v3818 = vmul.f32 %v3815, %v3817
  %v3819 = vadd.f32 %v3815, %v3818
  %vm3820 = vweird.f32 %v1793
  %vm3821 = vweird.f32 %v3815
  %vm3822 = vmor %vm3820, %vm3821
  %v3823 = vsel %vm3822, %v3815, %v3819
  %v3824 = vand.u32 2147483647, %v1793
  %vm3825 = vcmp.eq.f32.partialorder %v3824, 8.507059e+37
  %v3826 = vand.u32 %v1793, 2147483648
  %v3827 = vor.u32 1.1754944e-38, %v3826
  %v3828 = vsel %vm3825, %v3827, %v3823
  %v3829 = vmul.f32 1.0, %v3828
  %v3830 = vrcp.pop %v1794
  %v3831 = vmul.f32 %v1794, %v3830
  %v3832 = vsub.f32 1.0, %v3831
  %v3833 = vmul.f32 %v3830, %v3832
  %v3834 = vadd.f32 %v3830, %v3833
  %vm3835 = vweird.f32 %v1794
  %vm3836 = vweird.f32 %v3830
  %vm3837 = vmor %vm3835, %vm3836
  %v3838 = vsel %vm3837, %v3830, %v3834
  %v3839 = vand.u32 2147483647, %v1794
  %vm3840 = vcmp.eq.f32.partialorder %v3839, 8.507059e+37
  %v3841 = vand.u32 %v1794, 2147483648
  %v3842 = vor.u32 1.1754944e-38, %v3841
  %v3843 = vsel %vm3840, %v3842, %v3838
  %v3844 = vmul.f32 1.0, %v3843
  %v3845 = vrcp.pop %v1795
  %v3846 = vmul.f32 %v1795, %v3845
  %v3847 = vsub.f32 1.0, %v3846
  %v3848 = vmul.f32 %v3845, %v3847
  %v3849 = vadd.f32 %v3845, %v3848
  %vm3850 = vweird.f32 %v1795
  %vm3851 = vweird.f32 %v3845
  %vm3852 = vmor %vm3850, %vm3851
  %v3853 = vsel %vm3852, %v3845, %v3849
  %v3854 = vand.u32 2147483647, %v1795
  %vm3855 = vcmp.eq.f32.partialorder %v3854, 8.507059e+37
  %v3856 = vand.u32 %v1795, 2147483648
  %v3857 = vor.u32 1.1754944e-38, %v3856
  %v3858 = vsel %vm3855, %v3857, %v3853
  %v3859 = vmul.f32 1.0, %v3858
  %v3860 = vrcp.pop %v1796
  %v3861 = vmul.f32 %v1796, %v3860
  %v3862 = vsub.f32 1.0, %v3861
  %v3863 = vmul.f32 %v3860, %v3862
  %v3864 = vadd.f32 %v3860, %v3863
  %vm3865 = vweird.f32 %v1796
  %vm3866 = vweird.f32 %v3860
  %vm3867 = vmor %vm3865, %vm3866
  %v3868 = vsel %vm3867, %v3860, %v3864
  %v3869 = vand.u32 2147483647, %v1796
  %vm3870 = vcmp.eq.f32.partialorder %v3869, 8.507059e+37
  %v3871 = vand.u32 %v1796, 2147483648
  %v3872 = vor.u32 1.1754944e-38, %v3871
  %v3873 = vsel %vm3870, %v3872, %v3868
  %v3874 = vmul.f32 1.0, %v3873
  %v3875 = vrcp.pop %v1797
  %v3876 = vmul.f32 %v1797, %v3875
  %v3877 = vsub.f32 1.0, %v3876
  %v3878 = vmul.f32 %v3875, %v3877
  %v3879 = vadd.f32 %v3875, %v3878
  %vm3880 = vweird.f32 %v1797
  %vm3881 = vweird.f32 %v3875
  %vm3882 = vmor %vm3880, %vm3881
  %v3883 = vsel %vm3882, %v3875, %v3879
  %v3884 = vand.u32 2147483647, %v1797
  %vm3885 = vcmp.eq.f32.partialorder %v3884, 8.507059e+37
  %v3886 = vand.u32 %v1797, 2147483648
  %v3887 = vor.u32 1.1754944e-38, %v3886
  %v3888 = vsel %vm3885, %v3887, %v3883
  %v3889 = vmul.f32 1.0, %v3888
  %v3890 = vrcp.pop %v1798
  %v3891 = vmul.f32 %v1798, %v3890
  %v3892 = vsub.f32 1.0, %v3891
  %v3893 = vmul.f32 %v3890, %v3892
  %v3894 = vadd.f32 %v3890, %v3893
  %vm3895 = vweird.f32 %v1798
  %vm3896 = vweird.f32 %v3890
  %vm3897 = vmor %vm3895, %vm3896
  %v3898 = vsel %vm3897, %v3890, %v3894
  %v3899 = vand.u32 2147483647, %v1798
  %vm3900 = vcmp.eq.f32.partialorder %v3899, 8.507059e+37
  %v3901 = vand.u32 %v1798, 2147483648
  %v3902 = vor.u32 1.1754944e-38, %v3901
  %v3903 = vsel %vm3900, %v3902, %v3898
  %v3904 = vmul.f32 1.0, %v3903
  %v3905 = vrcp.pop %v1799
  %v3906 = vmul.f32 %v1799, %v3905
  %v3907 = vsub.f32 1.0, %v3906
  %v3908 = vmul.f32 %v3905, %v3907
  %v3909 = vadd.f32 %v3905, %v3908
  %vm3910 = vweird.f32 %v1799
  %vm3911 = vweird.f32 %v3905
  %vm3912 = vmor %vm3910, %vm3911
  %v3913 = vsel %vm3912, %v3905, %v3909
  %v3914 = vand.u32 2147483647, %v1799
  %vm3915 = vcmp.eq.f32.partialorder %v3914, 8.507059e+37
  %v3916 = vand.u32 %v1799, 2147483648
  %v3917 = vor.u32 1.1754944e-38, %v3916
  %v3918 = vsel %vm3915, %v3917, %v3913
  %v3919 = vmul.f32 1.0, %v3918
  %v3920 = vrcp.pop %v1800
  %v3921 = vmul.f32 %v1800, %v3920
  %v3922 = vsub.f32 1.0, %v3921
  %v3923 = vmul.f32 %v3920, %v3922
  %v3924 = vadd.f32 %v3920, %v3923
  %vm3925 = vweird.f32 %v1800
  %vm3926 = vweird.f32 %v3920
  %vm3927 = vmor %vm3925, %vm3926
  %v3928 = vsel %vm3927, %v3920, %v3924
  %v3929 = vand.u32 2147483647, %v1800
  %vm3930 = vcmp.eq.f32.partialorder %v3929, 8.507059e+37
  %v3931 = vand.u32 %v1800, 2147483648
  %v3932 = vor.u32 1.1754944e-38, %v3931
  %v3933 = vsel %vm3930, %v3932, %v3928
  %v3934 = vmul.f32 1.0, %v3933
  %v3935 = vrcp.pop %v1801
  %v3936 = vmul.f32 %v1801, %v3935
  %v3937 = vsub.f32 1.0, %v3936
  %v3938 = vmul.f32 %v3935, %v3937
  %v3939 = vadd.f32 %v3935, %v3938
  %vm3940 = vweird.f32 %v1801
  %vm3941 = vweird.f32 %v3935
  %vm3942 = vmor %vm3940, %vm3941
  %v3943 = vsel %vm3942, %v3935, %v3939
  %v3944 = vand.u32 2147483647, %v1801
  %vm3945 = vcmp.eq.f32.partialorder %v3944, 8.507059e+37
  %v3946 = vand.u32 %v1801, 2147483648
  %v3947 = vor.u32 1.1754944e-38, %v3946
  %v3948 = vsel %vm3945, %v3947, %v3943
  %v3949 = vmul.f32 1.0, %v3948
  %v3950 = vrcp.pop %v1802
  %v3951 = vmul.f32 %v1802, %v3950
  %v3952 = vsub.f32 1.0, %v3951
  %v3953 = vmul.f32 %v3950, %v3952
  %v3954 = vadd.f32 %v3950, %v3953
  %vm3955 = vweird.f32 %v1802
  %vm3956 = vweird.f32 %v3950
  %vm3957 = vmor %vm3955, %vm3956
  %v3958 = vsel %vm3957, %v3950, %v3954
  %v3959 = vand.u32 2147483647, %v1802
  %vm3960 = vcmp.eq.f32.partialorder %v3959, 8.507059e+37
  %v3961 = vand.u32 %v1802, 2147483648
  %v3962 = vor.u32 1.1754944e-38, %v3961
  %v3963 = vsel %vm3960, %v3962, %v3958
  %v3964 = vmul.f32 1.0, %v3963
  %v3965 = vrcp.pop %v1803
  %v3966 = vmul.f32 %v1803, %v3965
  %v3967 = vsub.f32 1.0, %v3966
  %v3968 = vmul.f32 %v3965, %v3967
  %v3969 = vadd.f32 %v3965, %v3968
  %vm3970 = vweird.f32 %v1803
  %vm3971 = vweird.f32 %v3965
  %vm3972 = vmor %vm3970, %vm3971
  %v3973 = vsel %vm3972, %v3965, %v3969
  %v3974 = vand.u32 2147483647, %v1803
  %vm3975 = vcmp.eq.f32.partialorder %v3974, 8.507059e+37
  %v3976 = vand.u32 %v1803, 2147483648
  %v3977 = vor.u32 1.1754944e-38, %v3976
  %v3978 = vsel %vm3975, %v3977, %v3973
  %v3979 = vmul.f32 1.0, %v3978
  %v3980 = vrcp.pop %v1804
  %v3981 = vmul.f32 %v1804, %v3980
  %v3982 = vsub.f32 1.0, %v3981
  %v3983 = vmul.f32 %v3980, %v3982
  %v3984 = vadd.f32 %v3980, %v3983
  %vm3985 = vweird.f32 %v1804
  %vm3986 = vweird.f32 %v3980
  %vm3987 = vmor %vm3985, %vm3986
  %v3988 = vsel %vm3987, %v3980, %v3984
  %v3989 = vand.u32 2147483647, %v1804
  %vm3990 = vcmp.eq.f32.partialorder %v3989, 8.507059e+37
  %v3991 = vand.u32 %v1804, 2147483648
  %v3992 = vor.u32 1.1754944e-38, %v3991
  %v3993 = vsel %vm3990, %v3992, %v3988
  %v3994 = vmul.f32 1.0, %v3993
  %v3995 = vrcp.pop %v1805
  %v3996 = vmul.f32 %v1805, %v3995
  %v3997 = vsub.f32 1.0, %v3996
  %v3998 = vmul.f32 %v3995, %v3997
  %v3999 = vadd.f32 %v3995, %v3998
  %vm4000 = vweird.f32 %v1805
  %vm4001 = vweird.f32 %v3995
  %vm4002 = vmor %vm4000, %vm4001
  %v4003 = vsel %vm4002, %v3995, %v3999
  %v4004 = vand.u32 2147483647, %v1805
  %vm4005 = vcmp.eq.f32.partialorder %v4004, 8.507059e+37
  %v4006 = vand.u32 %v1805, 2147483648
  %v4007 = vor.u32 1.1754944e-38, %v4006
  %v4008 = vsel %vm4005, %v4007, %v4003
  %v4009 = vmul.f32 1.0, %v4008
  %v4010 = vrcp.pop %v1806
  %v4011 = vmul.f32 %v1806, %v4010
  %v4012 = vsub.f32 1.0, %v4011
  %v4013 = vmul.f32 %v4010, %v4012
  %v4014 = vadd.f32 %v4010, %v4013
  %vm4015 = vweird.f32 %v1806
  %vm4016 = vweird.f32 %v4010
  %vm4017 = vmor %vm4015, %vm4016
  %v4018 = vsel %vm4017, %v4010, %v4014
  %v4019 = vand.u32 2147483647, %v1806
  %vm4020 = vcmp.eq.f32.partialorder %v4019, 8.507059e+37
  %v4021 = vand.u32 %v1806, 2147483648
  %v4022 = vor.u32 1.1754944e-38, %v4021
  %v4023 = vsel %vm4020, %v4022, %v4018
  %v4024 = vmul.f32 1.0, %v4023
  %v4025 = vrcp.pop %v1807
  %v4026 = vmul.f32 %v1807, %v4025
  %v4027 = vsub.f32 1.0, %v4026
  %v4028 = vmul.f32 %v4025, %v4027
  %v4029 = vadd.f32 %v4025, %v4028
  %vm4030 = vweird.f32 %v1807
  %vm4031 = vweird.f32 %v4025
  %vm4032 = vmor %vm4030, %vm4031
  %v4033 = vsel %vm4032, %v4025, %v4029
  %v4034 = vand.u32 2147483647, %v1807
  %vm4035 = vcmp.eq.f32.partialorder %v4034, 8.507059e+37
  %v4036 = vand.u32 %v1807, 2147483648
  %v4037 = vor.u32 1.1754944e-38, %v4036
  %v4038 = vsel %vm4035, %v4037, %v4033
  %v4039 = vmul.f32 1.0, %v4038
  %v4040 = vrcp.pop %v1808
  %v4041 = vmul.f32 %v1808, %v4040
  %v4042 = vsub.f32 1.0, %v4041
  %v4043 = vmul.f32 %v4040, %v4042
  %v4044 = vadd.f32 %v4040, %v4043
  %vm4045 = vweird.f32 %v1808
  %vm4046 = vweird.f32 %v4040
  %vm4047 = vmor %vm4045, %vm4046
  %v4048 = vsel %vm4047, %v4040, %v4044
  %v4049 = vand.u32 2147483647, %v1808
  %vm4050 = vcmp.eq.f32.partialorder %v4049, 8.507059e+37
  %v4051 = vand.u32 %v1808, 2147483648
  %v4052 = vor.u32 1.1754944e-38, %v4051
  %v4053 = vsel %vm4050, %v4052, %v4048
  %v4054 = vmul.f32 1.0, %v4053
  %v4055 = vrcp.pop %v1809
  %v4056 = vmul.f32 %v1809, %v4055
  %v4057 = vsub.f32 1.0, %v4056
  %v4058 = vmul.f32 %v4055, %v4057
  %v4059 = vadd.f32 %v4055, %v4058
  %vm4060 = vweird.f32 %v1809
  %vm4061 = vweird.f32 %v4055
  %vm4062 = vmor %vm4060, %vm4061
  %v4063 = vsel %vm4062, %v4055, %v4059
  %v4064 = vand.u32 2147483647, %v1809
  %vm4065 = vcmp.eq.f32.partialorder %v4064, 8.507059e+37
  %v4066 = vand.u32 %v1809, 2147483648
  %v4067 = vor.u32 1.1754944e-38, %v4066
  %v4068 = vsel %vm4065, %v4067, %v4063
  %v4069 = vmul.f32 1.0, %v4068
  %v4070 = vrcp.pop %v1810
  %v4071 = vmul.f32 %v1810, %v4070
  %v4072 = vsub.f32 1.0, %v4071
  %v4073 = vmul.f32 %v4070, %v4072
  %v4074 = vadd.f32 %v4070, %v4073
  %vm4075 = vweird.f32 %v1810
  %vm4076 = vweird.f32 %v4070
  %vm4077 = vmor %vm4075, %vm4076
  %v4078 = vsel %vm4077, %v4070, %v4074
  %v4079 = vand.u32 2147483647, %v1810
  %vm4080 = vcmp.eq.f32.partialorder %v4079, 8.507059e+37
  %v4081 = vand.u32 %v1810, 2147483648
  %v4082 = vor.u32 1.1754944e-38, %v4081
  %v4083 = vsel %vm4080, %v4082, %v4078
  %v4084 = vmul.f32 1.0, %v4083
  %v4085 = vrcp.pop %v1811
  %v4086 = vmul.f32 %v1811, %v4085
  %v4087 = vsub.f32 1.0, %v4086
  %v4088 = vmul.f32 %v4085, %v4087
  %v4089 = vadd.f32 %v4085, %v4088
  %vm4090 = vweird.f32 %v1811
  %vm4091 = vweird.f32 %v4085
  %vm4092 = vmor %vm4090, %vm4091
  %v4093 = vsel %vm4092, %v4085, %v4089
  %v4094 = vand.u32 2147483647, %v1811
  %vm4095 = vcmp.eq.f32.partialorder %v4094, 8.507059e+37
  %v4096 = vand.u32 %v1811, 2147483648
  %v4097 = vor.u32 1.1754944e-38, %v4096
  %v4098 = vsel %vm4095, %v4097, %v4093
  %v4099 = vmul.f32 1.0, %v4098
  %v4100 = vrcp.pop %v1812
  %v4101 = vmul.f32 %v1812, %v4100
  %v4102 = vsub.f32 1.0, %v4101
  %v4103 = vmul.f32 %v4100, %v4102
  %v4104 = vadd.f32 %v4100, %v4103
  %vm4105 = vweird.f32 %v1812
  %vm4106 = vweird.f32 %v4100
  %vm4107 = vmor %vm4105, %vm4106
  %v4108 = vsel %vm4107, %v4100, %v4104
  %v4109 = vand.u32 2147483647, %v1812
  %vm4110 = vcmp.eq.f32.partialorder %v4109, 8.507059e+37
  %v4111 = vand.u32 %v1812, 2147483648
  %v4112 = vor.u32 1.1754944e-38, %v4111
  %v4113 = vsel %vm4110, %v4112, %v4108
  %v4114 = vmul.f32 1.0, %v4113
  %v4115 = vrcp.pop %v1813
  %v4116 = vmul.f32 %v1813, %v4115
  %v4117 = vsub.f32 1.0, %v4116
  %v4118 = vmul.f32 %v4115, %v4117
  %v4119 = vadd.f32 %v4115, %v4118
  %vm4120 = vweird.f32 %v1813
  %vm4121 = vweird.f32 %v4115
  %vm4122 = vmor %vm4120, %vm4121
  %v4123 = vsel %vm4122, %v4115, %v4119
  %v4124 = vand.u32 2147483647, %v1813
  %vm4125 = vcmp.eq.f32.partialorder %v4124, 8.507059e+37
  %v4126 = vand.u32 %v1813, 2147483648
  %v4127 = vor.u32 1.1754944e-38, %v4126
  %v4128 = vsel %vm4125, %v4127, %v4123
  %v4129 = vmul.f32 1.0, %v4128
  %v4130 = vrcp.pop %v1814
  %v4131 = vmul.f32 %v1814, %v4130
  %v4132 = vsub.f32 1.0, %v4131
  %v4133 = vmul.f32 %v4130, %v4132
  %v4134 = vadd.f32 %v4130, %v4133
  %vm4135 = vweird.f32 %v1814
  %vm4136 = vweird.f32 %v4130
  %vm4137 = vmor %vm4135, %vm4136
  %v4138 = vsel %vm4137, %v4130, %v4134
  %v4139 = vand.u32 2147483647, %v1814
  %vm4140 = vcmp.eq.f32.partialorder %v4139, 8.507059e+37
  %v4141 = vand.u32 %v1814, 2147483648
  %v4142 = vor.u32 1.1754944e-38, %v4141
  %v4143 = vsel %vm4140, %v4142, %v4138
  %v4144 = vmul.f32 1.0, %v4143
  %v4145 = vrcp.pop %v1815
  %v4146 = vmul.f32 %v1815, %v4145
  %v4147 = vsub.f32 1.0, %v4146
  %v4148 = vmul.f32 %v4145, %v4147
  %v4149 = vadd.f32 %v4145, %v4148
  %vm4150 = vweird.f32 %v1815
  %vm4151 = vweird.f32 %v4145
  %vm4152 = vmor %vm4150, %vm4151
  %v4153 = vsel %vm4152, %v4145, %v4149
  %v4154 = vand.u32 2147483647, %v1815
  %vm4155 = vcmp.eq.f32.partialorder %v4154, 8.507059e+37
  %v4156 = vand.u32 %v1815, 2147483648
  %v4157 = vor.u32 1.1754944e-38, %v4156
  %v4158 = vsel %vm4155, %v4157, %v4153
  %v4159 = vmul.f32 1.0, %v4158
  %v4160 = vrcp.pop %v1816
  %v4161 = vmul.f32 %v1816, %v4160
  %v4162 = vsub.f32 1.0, %v4161
  %v4163 = vmul.f32 %v4160, %v4162
  %v4164 = vadd.f32 %v4160, %v4163
  %vm4165 = vweird.f32 %v1816
  %vm4166 = vweird.f32 %v4160
  %vm4167 = vmor %vm4165, %vm4166
  %v4168 = vsel %vm4167, %v4160, %v4164
  %v4169 = vand.u32 2147483647, %v1816
  %vm4170 = vcmp.eq.f32.partialorder %v4169, 8.507059e+37
  %v4171 = vand.u32 %v1816, 2147483648
  %v4172 = vor.u32 1.1754944e-38, %v4171
  %v4173 = vsel %vm4170, %v4172, %v4168
  %v4174 = vmul.f32 1.0, %v4173
  %v4175 = vrcp.pop %v1817
  %v4176 = vmul.f32 %v1817, %v4175
  %v4177 = vsub.f32 1.0, %v4176
  %v4178 = vmul.f32 %v4175, %v4177
  %v4179 = vadd.f32 %v4175, %v4178
  %vm4180 = vweird.f32 %v1817
  %vm4181 = vweird.f32 %v4175
  %vm4182 = vmor %vm4180, %vm4181
  %v4183 = vsel %vm4182, %v4175, %v4179
  %v4184 = vand.u32 2147483647, %v1817
  %vm4185 = vcmp.eq.f32.partialorder %v4184, 8.507059e+37
  %v4186 = vand.u32 %v1817, 2147483648
  %v4187 = vor.u32 1.1754944e-38, %v4186
  %v4188 = vsel %vm4185, %v4187, %v4183
  %v4189 = vmul.f32 1.0, %v4188
  %v4190 = vrcp.pop %v1818
  %v4191 = vmul.f32 %v1818, %v4190
  %v4192 = vsub.f32 1.0, %v4191
  %v4193 = vmul.f32 %v4190, %v4192
  %v4194 = vadd.f32 %v4190, %v4193
  %vm4195 = vweird.f32 %v1818
  %vm4196 = vweird.f32 %v4190
  %vm4197 = vmor %vm4195, %vm4196
  %v4198 = vsel %vm4197, %v4190, %v4194
  %v4199 = vand.u32 2147483647, %v1818
  %vm4200 = vcmp.eq.f32.partialorder %v4199, 8.507059e+37
  %v4201 = vand.u32 %v1818, 2147483648
  %v4202 = vor.u32 1.1754944e-38, %v4201
  %v4203 = vsel %vm4200, %v4202, %v4198
  %v4204 = vmul.f32 1.0, %v4203
  %v4205 = vrcp.pop %v1819
  %v4206 = vmul.f32 %v1819, %v4205
  %v4207 = vsub.f32 1.0, %v4206
  %v4208 = vmul.f32 %v4205, %v4207
  %v4209 = vadd.f32 %v4205, %v4208
  %vm4210 = vweird.f32 %v1819
  %vm4211 = vweird.f32 %v4205
  %vm4212 = vmor %vm4210, %vm4211
  %v4213 = vsel %vm4212, %v4205, %v4209
  %v4214 = vand.u32 2147483647, %v1819
  %vm4215 = vcmp.eq.f32.partialorder %v4214, 8.507059e+37
  %v4216 = vand.u32 %v1819, 2147483648
  %v4217 = vor.u32 1.1754944e-38, %v4216
  %v4218 = vsel %vm4215, %v4217, %v4213
  %v4219 = vmul.f32 1.0, %v4218
  %v4220 = vmul.f32 %v700, %v1834
  %v4221 = vmul.f32 %v749, %v1849
  %v4222 = vmul.f32 %v798, %v1864
  %v4223 = vmul.f32 %v847, %v1879
  %v4224 = vmul.f32 %v896, %v1894
  %v4225 = vmul.f32 %v945, %v1909
  %v4226 = vmul.f32 %v994, %v1924
  %v4227 = vmul.f32 %v1043, %v1939
  %v4228 = vmul.f32 %v1092, %v1954
  %v4229 = vmul.f32 %v1141, %v1969
  %v4230 = vmul.f32 %v702, %v1984
  %v4231 = vmul.f32 %v751, %v1999
  %v4232 = vmul.f32 %v800, %v2014
  %v4233 = vmul.f32 %v849, %v2029
  %v4234 = vmul.f32 %v898, %v2044
  %v4235 = vmul.f32 %v947, %v2059
  %v4236 = vmul.f32 %v996, %v2074
  %v4237 = vmul.f32 %v1045, %v2089
  %v4238 = vmul.f32 %v1094, %v2104
  %v4239 = vmul.f32 %v1143, %v2119
  %v4240 = vmul.f32 %v705, %v2134
  %v4241 = vmul.f32 %v754, %v2149
  %v4242 = vmul.f32 %v803, %v2164
  %v4243 = vmul.f32 %v852, %v2179
  %v4244 = vmul.f32 %v901, %v2194
  %v4245 = vmul.f32 %v950, %v2209
  %v4246 = vmul.f32 %v999, %v2224
  %v4247 = vmul.f32 %v1048, %v2239
  %v4248 = vmul.f32 %v1097, %v2254
  %v4249 = vmul.f32 %v1146, %v2269
  %v4250 = vmul.f32 %v707, %v2284
  %v4251 = vmul.f32 %v756, %v2299
  %v4252 = vmul.f32 %v805, %v2314
  %v4253 = vmul.f32 %v854, %v2329
  %v4254 = vmul.f32 %v903, %v2344
  %v4255 = vmul.f32 %v952, %v2359
  %v4256 = vmul.f32 %v1001, %v2374
  %v4257 = vmul.f32 %v1050, %v2389
  %v4258 = vmul.f32 %v1099, %v2404
  %v4259 = vmul.f32 %v1148, %v2419
  %v4260 = vmul.f32 %v710, %v2434
  %v4261 = vmul.f32 %v759, %v2449
  %v4262 = vmul.f32 %v808, %v2464
  %v4263 = vmul.f32 %v857, %v2479
  %v4264 = vmul.f32 %v906, %v2494
  %v4265 = vmul.f32 %v955, %v2509
  %v4266 = vmul.f32 %v1004, %v2524
  %v4267 = vmul.f32 %v1053, %v2539
  %v4268 = vmul.f32 %v1102, %v2554
  %v4269 = vmul.f32 %v1151, %v2569
  %v4270 = vmul.f32 %v712, %v2584
  %v4271 = vmul.f32 %v761, %v2599
  %v4272 = vmul.f32 %v810, %v2614
  %v4273 = vmul.f32 %v859, %v2629
  %v4274 = vmul.f32 %v908, %v2644
  %v4275 = vmul.f32 %v957, %v2659
  %v4276 = vmul.f32 %v1006, %v2674
  %v4277 = vmul.f32 %v1055, %v2689
  %v4278 = vmul.f32 %v1104, %v2704
  %v4279 = vmul.f32 %v1153, %v2719
  %v4280 = vmul.f32 %v715, %v2734
  %v4281 = vmul.f32 %v764, %v2749
  %v4282 = vmul.f32 %v813, %v2764
  %v4283 = vmul.f32 %v862, %v2779
  %v4284 = vmul.f32 %v911, %v2794
  %v4285 = vmul.f32 %v960, %v2809
  %v4286 = vmul.f32 %v1009, %v2824
  %v4287 = vmul.f32 %v1058, %v2839
  %v4288 = vmul.f32 %v1107, %v2854
  %v4289 = vmul.f32 %v1156, %v2869
  %v4290 = vmul.f32 %v717, %v2884
  %v4291 = vmul.f32 %v766, %v2899
  %v4292 = vmul.f32 %v815, %v2914
  %v4293 = vmul.f32 %v864, %v2929
  %v4294 = vmul.f32 %v913, %v2944
  %v4295 = vmul.f32 %v962, %v2959
  %v4296 = vmul.f32 %v1011, %v2974
  %v4297 = vmul.f32 %v1060, %v2989
  %v4298 = vmul.f32 %v1109, %v3004
  %v4299 = vmul.f32 %v1158, %v3019
  %v4300 = vmul.f32 %v720, %v3034
  %v4301 = vmul.f32 %v769, %v3049
  %v4302 = vmul.f32 %v818, %v3064
  %v4303 = vmul.f32 %v867, %v3079
  %v4304 = vmul.f32 %v916, %v3094
  %v4305 = vmul.f32 %v965, %v3109
  %v4306 = vmul.f32 %v1014, %v3124
  %v4307 = vmul.f32 %v1063, %v3139
  %v4308 = vmul.f32 %v1112, %v3154
  %v4309 = vmul.f32 %v1161, %v3169
  %v4310 = vmul.f32 %v722, %v3184
  %v4311 = vmul.f32 %v771, %v3199
  %v4312 = vmul.f32 %v820, %v3214
  %v4313 = vmul.f32 %v869, %v3229
  %v4314 = vmul.f32 %v918, %v3244
  %v4315 = vmul.f32 %v967, %v3259
  %v4316 = vmul.f32 %v1016, %v3274
  %v4317 = vmul.f32 %v1065, %v3289
  %v4318 = vmul.f32 %v1114, %v3304
  %v4319 = vmul.f32 %v1163, %v3319
  %v4320 = vmul.f32 %v725, %v3334
  %v4321 = vmul.f32 %v774, %v3349
  %v4322 = vmul.f32 %v823, %v3364
  %v4323 = vmul.f32 %v872, %v3379
  %v4324 = vmul.f32 %v921, %v3394
  %v4325 = vmul.f32 %v970, %v3409
  %v4326 = vmul.f32 %v1019, %v3424
  %v4327 = vmul.f32 %v1068, %v3439
  %v4328 = vmul.f32 %v1117, %v3454
  %v4329 = vmul.f32 %v1166, %v3469
  %v4330 = vmul.f32 %v727, %v3484
  %v4331 = vmul.f32 %v776, %v3499
  %v4332 = vmul.f32 %v825, %v3514
  %v4333 = vmul.f32 %v874, %v3529
  %v4334 = vmul.f32 %v923, %v3544
  %v4335 = vmul.f32 %v972, %v3559
  %v4336 = vmul.f32 %v1021, %v3574
  %v4337 = vmul.f32 %v1070, %v3589
  %v4338 = vmul.f32 %v1119, %v3604
  %v4339 = vmul.f32 %v1168, %v3619
  %v4340 = vmul.f32 %v730, %v3634
  %v4341 = vmul.f32 %v779, %v3649
  %v4342 = vmul.f32 %v828, %v3664
  %v4343 = vmul.f32 %v877, %v3679
  %v4344 = vmul.f32 %v926, %v3694
  %v4345 = vmul.f32 %v975, %v3709
  %v4346 = vmul.f32 %v1024, %v3724
  %v4347 = vmul.f32 %v1073, %v3739
  %v4348 = vmul.f32 %v1122, %v3754
  %v4349 = vmul.f32 %v1171, %v3769
  %v4350 = vmul.f32 %v732, %v3784
  %v4351 = vmul.f32 %v781, %v3799
  %v4352 = vmul.f32 %v830, %v3814
  %v4353 = vmul.f32 %v879, %v3829
  %v4354 = vmul.f32 %v928, %v3844
  %v4355 = vmul.f32 %v977, %v3859
  %v4356 = vmul.f32 %v1026, %v3874
  %v4357 = vmul.f32 %v1075, %v3889
  %v4358 = vmul.f32 %v1124, %v3904
  %v4359 = vmul.f32 %v1173, %v3919
  %v4360 = vmul.f32 %v735, %v3934
  %v4361 = vmul.f32 %v784, %v3949
  %v4362 = vmul.f32 %v833, %v3964
  %v4363 = vmul.f32 %v882, %v3979
  %v4364 = vmul.f32 %v931, %v3994
  %v4365 = vmul.f32 %v980, %v4009
  %v4366 = vmul.f32 %v1029, %v4024
  %v4367 = vmul.f32 %v1078, %v4039
  %v4368 = vmul.f32 %v1127, %v4054
  %v4369 = vmul.f32 %v1176, %v4069
  %v4370 = vmul.f32 %v737, %v4084
  %v4371 = vmul.f32 %v786, %v4099
  %v4372 = vmul.f32 %v835, %v4114
  %v4373 = vmul.f32 %v884, %v4129
  %v4374 = vmul.f32 %v933, %v4144
  %v4375 = vmul.f32 %v982, %v4159
  %v4376 = vmul.f32 %v1031, %v4174
  %v4377 = vmul.f32 %v1080, %v4189
  %v4378 = vmul.f32 %v1129, %v4204
  %v4379 = vmul.f32 %v1178, %v4219
  %v4380 = vld [vmem:[%s5] sm:$0x3]
  %4381 = vmatpush.msra.mxu0 %v4370
  %4382 = vmatpush.msra.mxu0 %v4360
  %4383 = vmatpush.msra.mxu0 %v4350
  %4384 = vmatpush.msra.mxu0 %v4340
  %4385 = vmatpush.msra.mxu0 %v4330
  %4386 = vmatpush.msra.mxu0 %v4320
  %4387 = vmatpush.msra.mxu0 %v4310
  %4388 = vmatpush.msra.mxu0 %v4300
  %4389 = vmatpush.msra.mxu0 %v4290
  %4390 = vmatpush.msra.mxu0 %v4280
  %4391 = vmatpush.msra.mxu0 %v4270
  %4392 = vmatpush.msra.mxu0 %v4260
  %4393 = vmatpush.msra.mxu0 %v4250
  %4394 = vmatpush.msra.mxu0 %v4240
  %4395 = vmatpush.msra.mxu0 %v4230
  %4396 = vmatpush.msra.mxu0 %v4220
  %4397 = vmatmul.f32.gmra.mxu0 %v4380
  %v4398 = vpop.f32.mrf.mxu0
  %v4399 = vadd.f32 0.0, %v4398
  %4400 = vdwg.mxu0
  %4401 = vmatpush.msra.mxu0 %v4371
  %4402 = vmatpush.msra.mxu0 %v4361
  %4403 = vmatpush.msra.mxu0 %v4351
  %4404 = vmatpush.msra.mxu0 %v4341
  %4405 = vmatpush.msra.mxu0 %v4331
  %4406 = vmatpush.msra.mxu0 %v4321
  %4407 = vmatpush.msra.mxu0 %v4311
  %4408 = vmatpush.msra.mxu0 %v4301
  %4409 = vmatpush.msra.mxu0 %v4291
  %4410 = vmatpush.msra.mxu0 %v4281
  %4411 = vmatpush.msra.mxu0 %v4271
  %4412 = vmatpush.msra.mxu0 %v4261
  %4413 = vmatpush.msra.mxu0 %v4251
  %4414 = vmatpush.msra.mxu0 %v4241
  %4415 = vmatpush.msra.mxu0 %v4231
  %4416 = vmatpush.msra.mxu0 %v4221
  %4417 = vmatmul.f32.gmra.mxu0 %v4380
  %v4418 = vpop.f32.mrf.mxu0
  %v4419 = vadd.f32 0.0, %v4418
  %4420 = vdwg.mxu0
  %4421 = vmatpush.msra.mxu0 %v4372
  %4422 = vmatpush.msra.mxu0 %v4362
  %4423 = vmatpush.msra.mxu0 %v4352
  %4424 = vmatpush.msra.mxu0 %v4342
  %4425 = vmatpush.msra.mxu0 %v4332
  %4426 = vmatpush.msra.mxu0 %v4322
  %4427 = vmatpush.msra.mxu0 %v4312
  %4428 = vmatpush.msra.mxu0 %v4302
  %4429 = vmatpush.msra.mxu0 %v4292
  %4430 = vmatpush.msra.mxu0 %v4282
  %4431 = vmatpush.msra.mxu0 %v4272
  %4432 = vmatpush.msra.mxu0 %v4262
  %4433 = vmatpush.msra.mxu0 %v4252
  %4434 = vmatpush.msra.mxu0 %v4242
  %4435 = vmatpush.msra.mxu0 %v4232
  %4436 = vmatpush.msra.mxu0 %v4222
  %4437 = vmatmul.f32.gmra.mxu0 %v4380
  %v4438 = vpop.f32.mrf.mxu0
  %v4439 = vadd.f32 0.0, %v4438
  %4440 = vdwg.mxu0
  %4441 = vmatpush.msra.mxu0 %v4373
  %4442 = vmatpush.msra.mxu0 %v4363
  %4443 = vmatpush.msra.mxu0 %v4353
  %4444 = vmatpush.msra.mxu0 %v4343
  %4445 = vmatpush.msra.mxu0 %v4333
  %4446 = vmatpush.msra.mxu0 %v4323
  %4447 = vmatpush.msra.mxu0 %v4313
  %4448 = vmatpush.msra.mxu0 %v4303
  %4449 = vmatpush.msra.mxu0 %v4293
  %4450 = vmatpush.msra.mxu0 %v4283
  %4451 = vmatpush.msra.mxu0 %v4273
  %4452 = vmatpush.msra.mxu0 %v4263
  %4453 = vmatpush.msra.mxu0 %v4253
  %4454 = vmatpush.msra.mxu0 %v4243
  %4455 = vmatpush.msra.mxu0 %v4233
  %4456 = vmatpush.msra.mxu0 %v4223
  %4457 = vmatmul.f32.gmra.mxu0 %v4380
  %v4458 = vpop.f32.mrf.mxu0
  %v4459 = vadd.f32 0.0, %v4458
  %4460 = vdwg.mxu0
  %4461 = vmatpush.msra.mxu0 %v4374
  %4462 = vmatpush.msra.mxu0 %v4364
  %4463 = vmatpush.msra.mxu0 %v4354
  %4464 = vmatpush.msra.mxu0 %v4344
  %4465 = vmatpush.msra.mxu0 %v4334
  %4466 = vmatpush.msra.mxu0 %v4324
  %4467 = vmatpush.msra.mxu0 %v4314
  %4468 = vmatpush.msra.mxu0 %v4304
  %4469 = vmatpush.msra.mxu0 %v4294
  %4470 = vmatpush.msra.mxu0 %v4284
  %4471 = vmatpush.msra.mxu0 %v4274
  %4472 = vmatpush.msra.mxu0 %v4264
  %4473 = vmatpush.msra.mxu0 %v4254
  %4474 = vmatpush.msra.mxu0 %v4244
  %4475 = vmatpush.msra.mxu0 %v4234
  %4476 = vmatpush.msra.mxu0 %v4224
  %4477 = vmatmul.f32.gmra.mxu0 %v4380
  %v4478 = vpop.f32.mrf.mxu0
  %v4479 = vadd.f32 0.0, %v4478
  %4480 = vdwg.mxu0
  %4481 = vmatpush.msra.mxu0 %v4375
  %4482 = vmatpush.msra.mxu0 %v4365
  %4483 = vmatpush.msra.mxu0 %v4355
  %4484 = vmatpush.msra.mxu0 %v4345
  %4485 = vmatpush.msra.mxu0 %v4335
  %4486 = vmatpush.msra.mxu0 %v4325
  %4487 = vmatpush.msra.mxu0 %v4315
  %4488 = vmatpush.msra.mxu0 %v4305
  %4489 = vmatpush.msra.mxu0 %v4295
  %4490 = vmatpush.msra.mxu0 %v4285
  %4491 = vmatpush.msra.mxu0 %v4275
  %4492 = vmatpush.msra.mxu0 %v4265
  %4493 = vmatpush.msra.mxu0 %v4255
  %4494 = vmatpush.msra.mxu0 %v4245
  %4495 = vmatpush.msra.mxu0 %v4235
  %4496 = vmatpush.msra.mxu0 %v4225
  %4497 = vmatmul.f32.gmra.mxu0 %v4380
  %v4498 = vpop.f32.mrf.mxu0
  %v4499 = vadd.f32 0.0, %v4498
  %4500 = vdwg.mxu0
  %4501 = vmatpush.msra.mxu0 %v4376
  %4502 = vmatpush.msra.mxu0 %v4366
  %4503 = vmatpush.msra.mxu0 %v4356
  %4504 = vmatpush.msra.mxu0 %v4346
  %4505 = vmatpush.msra.mxu0 %v4336
  %4506 = vmatpush.msra.mxu0 %v4326
  %4507 = vmatpush.msra.mxu0 %v4316
  %4508 = vmatpush.msra.mxu0 %v4306
  %4509 = vmatpush.msra.mxu0 %v4296
  %4510 = vmatpush.msra.mxu0 %v4286
  %4511 = vmatpush.msra.mxu0 %v4276
  %4512 = vmatpush.msra.mxu0 %v4266
  %4513 = vmatpush.msra.mxu0 %v4256
  %4514 = vmatpush.msra.mxu0 %v4246
  %4515 = vmatpush.msra.mxu0 %v4236
  %4516 = vmatpush.msra.mxu0 %v4226
  %4517 = vmatmul.f32.gmra.mxu0 %v4380
  %v4518 = vpop.f32.mrf.mxu0
  %v4519 = vadd.f32 0.0, %v4518
  %4520 = vdwg.mxu0
  %4521 = vmatpush.msra.mxu0 %v4377
  %4522 = vmatpush.msra.mxu0 %v4367
  %4523 = vmatpush.msra.mxu0 %v4357
  %4524 = vmatpush.msra.mxu0 %v4347
  %4525 = vmatpush.msra.mxu0 %v4337
  %4526 = vmatpush.msra.mxu0 %v4327
  %4527 = vmatpush.msra.mxu0 %v4317
  %4528 = vmatpush.msra.mxu0 %v4307
  %4529 = vmatpush.msra.mxu0 %v4297
  %4530 = vmatpush.msra.mxu0 %v4287
  %4531 = vmatpush.msra.mxu0 %v4277
  %4532 = vmatpush.msra.mxu0 %v4267
  %4533 = vmatpush.msra.mxu0 %v4257
  %4534 = vmatpush.msra.mxu0 %v4247
  %4535 = vmatpush.msra.mxu0 %v4237
  %4536 = vmatpush.msra.mxu0 %v4227
  %4537 = vmatmul.f32.gmra.mxu0 %v4380
  %v4538 = vpop.f32.mrf.mxu0
  %v4539 = vadd.f32 0.0, %v4538
  %4540 = vdwg.mxu0
  %4541 = vmatpush.msra.mxu0 %v4378
  %4542 = vmatpush.msra.mxu0 %v4368
  %4543 = vmatpush.msra.mxu0 %v4358
  %4544 = vmatpush.msra.mxu0 %v4348
  %4545 = vmatpush.msra.mxu0 %v4338
  %4546 = vmatpush.msra.mxu0 %v4328
  %4547 = vmatpush.msra.mxu0 %v4318
  %4548 = vmatpush.msra.mxu0 %v4308
  %4549 = vmatpush.msra.mxu0 %v4298
  %4550 = vmatpush.msra.mxu0 %v4288
  %4551 = vmatpush.msra.mxu0 %v4278
  %4552 = vmatpush.msra.mxu0 %v4268
  %4553 = vmatpush.msra.mxu0 %v4258
  %4554 = vmatpush.msra.mxu0 %v4248
  %4555 = vmatpush.msra.mxu0 %v4238
  %4556 = vmatpush.msra.mxu0 %v4228
  %4557 = vmatmul.f32.gmra.mxu0 %v4380
  %v4558 = vpop.f32.mrf.mxu0
  %v4559 = vadd.f32 0.0, %v4558
  %4560 = vdwg.mxu0
  %4561 = vmatpush.msra.mxu0 %v4379
  %4562 = vmatpush.msra.mxu0 %v4369
  %4563 = vmatpush.msra.mxu0 %v4359
  %4564 = vmatpush.msra.mxu0 %v4349
  %4565 = vmatpush.msra.mxu0 %v4339
  %4566 = vmatpush.msra.mxu0 %v4329
  %4567 = vmatpush.msra.mxu0 %v4319
  %4568 = vmatpush.msra.mxu0 %v4309
  %4569 = vmatpush.msra.mxu0 %v4299
  %4570 = vmatpush.msra.mxu0 %v4289
  %4571 = vmatpush.msra.mxu0 %v4279
  %4572 = vmatpush.msra.mxu0 %v4269
  %4573 = vmatpush.msra.mxu0 %v4259
  %4574 = vmatpush.msra.mxu0 %v4249
  %4575 = vmatpush.msra.mxu0 %v4239
  %4576 = vmatpush.msra.mxu0 %v4229
  %4577 = vmatmul.f32.gmra.mxu0 %v4380
  %v4578 = vpop.f32.mrf.mxu0
  %v4579 = vadd.f32 0.0, %v4578
  %4580 = vdwg.mxu0
  %v4581 = vpack.c.bf16 %v4399, %v4399
  %v4582 = vpack.c.bf16 %v4419, %v4419
  %v4583 = vpack.c.bf16 %v4439, %v4439
  %v4584 = vpack.c.bf16 %v4459, %v4459
  %v4585 = vpack.c.bf16 %v4479, %v4479
  %v4586 = vpack.c.bf16 %v4499, %v4499
  %v4587 = vpack.c.bf16 %v4519, %v4519
  %v4588 = vpack.c.bf16 %v4539, %v4539
  %v4589 = vpack.c.bf16 %v4559, %v4559
  %v4590 = vpack.c.bf16 %v4579, %v4579
  %v4591 = vld [vmem:[%s6] sm:$0xf]
  %v4592 = vld [vmem:[%s6 + $0x4] sm:$0xf]
  %v4593 = vld [vmem:[%s6 + $0x8] sm:$0xf]
  %v4594 = vld [vmem:[%s6 + $0xc] sm:$0xf]
  %v4595 = vld [vmem:[%s6 + $0x10] sm:$0xf]
  %v4596 = vld [vmem:[%s6 + $0x14] sm:$0xf]
  %v4597 = vld [vmem:[%s6 + $0x18] sm:$0xf]
  %v4598 = vld [vmem:[%s6 + $0x1c] sm:$0xf]
  %v4599 = vld [vmem:[%s6 + $0x20] sm:$0xf]
  %v4600 = vld [vmem:[%s6 + $0x24] sm:$0xf]
  %v4601 = vld [vmem:[%s6 + $0x28] sm:$0xf]
  %v4602 = vld [vmem:[%s6 + $0x2c] sm:$0xf]
  %v4603 = vld [vmem:[%s6 + $0x30] sm:$0xf]
  %v4604 = vld [vmem:[%s6 + $0x34] sm:$0xf]
  %v4605 = vld [vmem:[%s6 + $0x38] sm:$0xf]
  %v4606 = vld [vmem:[%s6 + $0x3c] sm:$0xf]
  %v4607 = vld [vmem:[%s6 + $0x40] sm:$0xf]
  %v4608 = vld [vmem:[%s6 + $0x44] sm:$0xf]
  %v4609 = vld [vmem:[%s6 + $0x48] sm:$0xf]
  %v4610 = vld [vmem:[%s6 + $0x4c] sm:$0xf]
  %v4611 = vld [vmem:[%s6 + $0x50] sm:$0xf]
  %v4612 = vld [vmem:[%s6 + $0x54] sm:$0xf]
  %v4613 = vld [vmem:[%s6 + $0x58] sm:$0xf]
  %v4614 = vld [vmem:[%s6 + $0x5c] sm:$0xf]
  %v4615 = vld [vmem:[%s6 + $0x60] sm:$0xf]
  %v4616 = vld [vmem:[%s6 + $0x64] sm:$0xf]
  %v4617 = vld [vmem:[%s6 + $0x68] sm:$0xf]
  %v4618 = vld [vmem:[%s6 + $0x6c] sm:$0xf]
  %v4619 = vld [vmem:[%s6 + $0x70] sm:$0xf]
  %v4620 = vld [vmem:[%s6 + $0x74] sm:$0xf]
  %v4621 = vld [vmem:[%s6 + $0x78] sm:$0xf]
  %v4622 = vld [vmem:[%s6 + $0x7c] sm:$0xf]
  %v4623 = vld [vmem:[%s6 + $0x80] sm:$0xf]
  %v4624 = vld [vmem:[%s6 + $0x84] sm:$0xf]
  %v4625 = vld [vmem:[%s6 + $0x88] sm:$0xf]
  %v4626 = vld [vmem:[%s6 + $0x8c] sm:$0xf]
  %v4627 = vld [vmem:[%s6 + $0x90] sm:$0xf]
  %v4628 = vld [vmem:[%s6 + $0x94] sm:$0xf]
  %v4629 = vld [vmem:[%s6 + $0x98] sm:$0xf]
  %v4630 = vld [vmem:[%s6 + $0x9c] sm:$0xf]
  %v4631 = vld [vmem:[%s6 + $0xa0] sm:$0xf]
  %v4632 = vld [vmem:[%s6 + $0xa4] sm:$0xf]
  %v4633 = vld [vmem:[%s6 + $0xa8] sm:$0xf]
  %v4634 = vld [vmem:[%s6 + $0xac] sm:$0xf]
  %v4635 = vld [vmem:[%s6 + $0xb0] sm:$0xf]
  %v4636 = vld [vmem:[%s6 + $0xb4] sm:$0xf]
  %v4637 = vld [vmem:[%s6 + $0xb8] sm:$0xf]
  %v4638 = vld [vmem:[%s6 + $0xbc] sm:$0xf]
  %v4639 = vld [vmem:[%s6 + $0xc0] sm:$0xf]
  %v4640 = vld [vmem:[%s6 + $0xc4] sm:$0xf]
  %v4641 = vld [vmem:[%s6 + $0xc8] sm:$0xf]
  %v4642 = vld [vmem:[%s6 + $0xcc] sm:$0xf]
  %v4643 = vld [vmem:[%s6 + $0xd0] sm:$0xf]
  %v4644 = vld [vmem:[%s6 + $0xd4] sm:$0xf]
  %v4645 = vld [vmem:[%s6 + $0xd8] sm:$0xf]
  %v4646 = vld [vmem:[%s6 + $0xdc] sm:$0xf]
  %v4647 = vld [vmem:[%s6 + $0xe0] sm:$0xf]
  %v4648 = vld [vmem:[%s6 + $0xe4] sm:$0xf]
  %v4649 = vld [vmem:[%s6 + $0xe8] sm:$0xf]
  %v4650 = vld [vmem:[%s6 + $0xec] sm:$0xf]
  %v4651 = vld [vmem:[%s6 + $0xf0] sm:$0xf]
  %v4652 = vld [vmem:[%s6 + $0xf4] sm:$0xf]
  %v4653 = vld [vmem:[%s6 + $0xf8] sm:$0xf]
  %v4654 = vld [vmem:[%s6 + $0xfc] sm:$0xf]
  %v4655 = vld [vmem:[%s6 + $0x100] sm:$0xf]
  %v4656 = vld [vmem:[%s6 + $0x104] sm:$0xf]
  %v4657 = vld [vmem:[%s6 + $0x108] sm:$0xf]
  %v4658 = vld [vmem:[%s6 + $0x10c] sm:$0xf]
  %v4659 = vld [vmem:[%s6 + $0x110] sm:$0xf]
  %v4660 = vld [vmem:[%s6 + $0x114] sm:$0xf]
  %v4661 = vld [vmem:[%s6 + $0x118] sm:$0xf]
  %v4662 = vld [vmem:[%s6 + $0x11c] sm:$0xf]
  %v4663 = vld [vmem:[%s6 + $0x120] sm:$0xf]
  %v4664 = vld [vmem:[%s6 + $0x124] sm:$0xf]
  %v4665 = vld [vmem:[%s6 + $0x128] sm:$0xf]
  %v4666 = vld [vmem:[%s6 + $0x12c] sm:$0xf]
  %v4667 = vld [vmem:[%s6 + $0x130] sm:$0xf]
  %v4668 = vld [vmem:[%s6 + $0x134] sm:$0xf]
  %v4669 = vld [vmem:[%s6 + $0x138] sm:$0xf]
  %v4670 = vld [vmem:[%s6 + $0x13c] sm:$0xf]
  %v4671 = vld [vmem:[%s6 + $0x140] sm:$0xf]
  %v4672 = vld [vmem:[%s6 + $0x144] sm:$0xf]
  %v4673 = vld [vmem:[%s6 + $0x148] sm:$0xf]
  %v4674 = vld [vmem:[%s6 + $0x14c] sm:$0xf]
  %v4675 = vld [vmem:[%s6 + $0x150] sm:$0xf]
  %v4676 = vld [vmem:[%s6 + $0x154] sm:$0xf]
  %v4677 = vld [vmem:[%s6 + $0x158] sm:$0xf]
  %v4678 = vld [vmem:[%s6 + $0x15c] sm:$0xf]
  %v4679 = vld [vmem:[%s6 + $0x160] sm:$0xf]
  %v4680 = vld [vmem:[%s6 + $0x164] sm:$0xf]
  %v4681 = vld [vmem:[%s6 + $0x168] sm:$0xf]
  %v4682 = vld [vmem:[%s6 + $0x16c] sm:$0xf]
  %v4683 = vld [vmem:[%s6 + $0x170] sm:$0xf]
  %v4684 = vld [vmem:[%s6 + $0x174] sm:$0xf]
  %v4685 = vld [vmem:[%s6 + $0x178] sm:$0xf]
  %v4686 = vld [vmem:[%s6 + $0x17c] sm:$0xf]
  %v4687 = vld [vmem:[%s6 + $0x180] sm:$0xf]
  %v4688 = vld [vmem:[%s6 + $0x184] sm:$0xf]
  %v4689 = vld [vmem:[%s6 + $0x188] sm:$0xf]
  %v4690 = vld [vmem:[%s6 + $0x18c] sm:$0xf]
  %v4691 = vld [vmem:[%s6 + $0x190] sm:$0xf]
  %v4692 = vld [vmem:[%s6 + $0x194] sm:$0xf]
  %v4693 = vld [vmem:[%s6 + $0x198] sm:$0xf]
  %v4694 = vld [vmem:[%s6 + $0x19c] sm:$0xf]
  %v4695 = vld [vmem:[%s6 + $0x1a0] sm:$0xf]
  %v4696 = vld [vmem:[%s6 + $0x1a4] sm:$0xf]
  %v4697 = vld [vmem:[%s6 + $0x1a8] sm:$0xf]
  %v4698 = vld [vmem:[%s6 + $0x1ac] sm:$0xf]
  %v4699 = vld [vmem:[%s6 + $0x1b0] sm:$0xf]
  %v4700 = vld [vmem:[%s6 + $0x1b4] sm:$0xf]
  %v4701 = vld [vmem:[%s6 + $0x1b8] sm:$0xf]
  %v4702 = vld [vmem:[%s6 + $0x1bc] sm:$0xf]
  %v4703 = vld [vmem:[%s6 + $0x1c0] sm:$0xf]
  %v4704 = vld [vmem:[%s6 + $0x1c4] sm:$0xf]
  %v4705 = vld [vmem:[%s6 + $0x1c8] sm:$0xf]
  %v4706 = vld [vmem:[%s6 + $0x1cc] sm:$0xf]
  %v4707 = vld [vmem:[%s6 + $0x1d0] sm:$0xf]
  %v4708 = vld [vmem:[%s6 + $0x1d4] sm:$0xf]
  %v4709 = vld [vmem:[%s6 + $0x1d8] sm:$0xf]
  %v4710 = vld [vmem:[%s6 + $0x1dc] sm:$0xf]
  %v4711 = vld [vmem:[%s6 + $0x1e0] sm:$0xf]
  %v4712 = vld [vmem:[%s6 + $0x1e4] sm:$0xf]
  %v4713 = vld [vmem:[%s6 + $0x1e8] sm:$0xf]
  %v4714 = vld [vmem:[%s6 + $0x1ec] sm:$0xf]
  %v4715 = vld [vmem:[%s6 + $0x1f0] sm:$0xf]
  %v4716 = vld [vmem:[%s6 + $0x1f4] sm:$0xf]
  %v4717 = vld [vmem:[%s6 + $0x1f8] sm:$0xf]
  %v4718 = vld [vmem:[%s6 + $0x1fc] sm:$0xf]
  %v4719 = vld [vmem:[%s6 + $0x200] sm:$0xf]
  %v4720 = vld [vmem:[%s6 + $0x204] sm:$0xf]
  %v4721 = vld [vmem:[%s6 + $0x208] sm:$0xf]
  %v4722 = vld [vmem:[%s6 + $0x20c] sm:$0xf]
  %v4723 = vld [vmem:[%s6 + $0x210] sm:$0xf]
  %v4724 = vld [vmem:[%s6 + $0x214] sm:$0xf]
  %v4725 = vld [vmem:[%s6 + $0x218] sm:$0xf]
  %v4726 = vld [vmem:[%s6 + $0x21c] sm:$0xf]
  %v4727 = vld [vmem:[%s6 + $0x220] sm:$0xf]
  %v4728 = vld [vmem:[%s6 + $0x224] sm:$0xf]
  %v4729 = vld [vmem:[%s6 + $0x228] sm:$0xf]
  %v4730 = vld [vmem:[%s6 + $0x22c] sm:$0xf]
  %v4731 = vld [vmem:[%s6 + $0x230] sm:$0xf]
  %v4732 = vld [vmem:[%s6 + $0x234] sm:$0xf]
  %v4733 = vld [vmem:[%s6 + $0x238] sm:$0xf]
  %v4734 = vld [vmem:[%s6 + $0x23c] sm:$0xf]
  %v4735 = vld [vmem:[%s6 + $0x240] sm:$0xf]
  %v4736 = vld [vmem:[%s6 + $0x244] sm:$0xf]
  %v4737 = vld [vmem:[%s6 + $0x248] sm:$0xf]
  %v4738 = vld [vmem:[%s6 + $0x24c] sm:$0xf]
  %v4739 = vld [vmem:[%s6 + $0x250] sm:$0xf]
  %v4740 = vld [vmem:[%s6 + $0x254] sm:$0xf]
  %v4741 = vld [vmem:[%s6 + $0x258] sm:$0xf]
  %v4742 = vld [vmem:[%s6 + $0x25c] sm:$0xf]
  %v4743 = vld [vmem:[%s6 + $0x260] sm:$0xf]
  %v4744 = vld [vmem:[%s6 + $0x264] sm:$0xf]
  %v4745 = vld [vmem:[%s6 + $0x268] sm:$0xf]
  %v4746 = vld [vmem:[%s6 + $0x26c] sm:$0xf]
  %v4747 = vld [vmem:[%s6 + $0x270] sm:$0xf]
  %v4748 = vld [vmem:[%s6 + $0x274] sm:$0xf]
  %v4749 = vld [vmem:[%s6 + $0x278] sm:$0xf]
  %v4750 = vld [vmem:[%s6 + $0x27c] sm:$0xf]
  %v4751 = vld [vmem:[%s7] sm:$0x1]
  %v4753 = vperm.slane %v4751, 0
  %v4915 = vunpack.c.l.b16 %v4591
  %v4916 = vunpack.c.l.b16 %v4592
  %v4917 = vunpack.c.l.b16 %v4593
  %v4918 = vunpack.c.l.b16 %v4594
  %v4919 = vunpack.c.l.b16 %v4595
  %v4920 = vunpack.c.l.b16 %v4596
  %v4921 = vunpack.c.l.b16 %v4597
  %v4922 = vunpack.c.l.b16 %v4598
  %v4923 = vunpack.c.l.b16 %v4599
  %v4924 = vunpack.c.l.b16 %v4600
  %v4925 = vunpack.c.l.b16 %v4601
  %v4926 = vunpack.c.l.b16 %v4602
  %v4927 = vunpack.c.l.b16 %v4603
  %v4928 = vunpack.c.l.b16 %v4604
  %v4929 = vunpack.c.l.b16 %v4605
  %v4930 = vunpack.c.l.b16 %v4606
  %v4931 = vunpack.c.l.b16 %v4607
  %v4932 = vunpack.c.l.b16 %v4608
  %v4933 = vunpack.c.l.b16 %v4609
  %v4934 = vunpack.c.l.b16 %v4610
  %v4935 = vunpack.c.l.b16 %v4611
  %v4936 = vunpack.c.l.b16 %v4612
  %v4937 = vunpack.c.l.b16 %v4613
  %v4938 = vunpack.c.l.b16 %v4614
  %v4939 = vunpack.c.l.b16 %v4615
  %v4940 = vunpack.c.l.b16 %v4616
  %v4941 = vunpack.c.l.b16 %v4617
  %v4942 = vunpack.c.l.b16 %v4618
  %v4943 = vunpack.c.l.b16 %v4619
  %v4944 = vunpack.c.l.b16 %v4620
  %v4945 = vunpack.c.l.b16 %v4621
  %v4946 = vunpack.c.l.b16 %v4622
  %v4947 = vunpack.c.l.b16 %v4623
  %v4948 = vunpack.c.l.b16 %v4624
  %v4949 = vunpack.c.l.b16 %v4625
  %v4950 = vunpack.c.l.b16 %v4626
  %v4951 = vunpack.c.l.b16 %v4627
  %v4952 = vunpack.c.l.b16 %v4628
  %v4953 = vunpack.c.l.b16 %v4629
  %v4954 = vunpack.c.l.b16 %v4630
  %v4955 = vunpack.c.l.b16 %v4631
  %v4956 = vunpack.c.l.b16 %v4632
  %v4957 = vunpack.c.l.b16 %v4633
  %v4958 = vunpack.c.l.b16 %v4634
  %v4959 = vunpack.c.l.b16 %v4635
  %v4960 = vunpack.c.l.b16 %v4636
  %v4961 = vunpack.c.l.b16 %v4637
  %v4962 = vunpack.c.l.b16 %v4638
  %v4963 = vunpack.c.l.b16 %v4639
  %v4964 = vunpack.c.l.b16 %v4640
  %v4965 = vunpack.c.l.b16 %v4641
  %v4966 = vunpack.c.l.b16 %v4642
  %v4967 = vunpack.c.l.b16 %v4643
  %v4968 = vunpack.c.l.b16 %v4644
  %v4969 = vunpack.c.l.b16 %v4645
  %v4970 = vunpack.c.l.b16 %v4646
  %v4971 = vunpack.c.l.b16 %v4647
  %v4972 = vunpack.c.l.b16 %v4648
  %v4973 = vunpack.c.l.b16 %v4649
  %v4974 = vunpack.c.l.b16 %v4650
  %v4975 = vunpack.c.l.b16 %v4651
  %v4976 = vunpack.c.l.b16 %v4652
  %v4977 = vunpack.c.l.b16 %v4653
  %v4978 = vunpack.c.l.b16 %v4654
  %v4979 = vunpack.c.l.b16 %v4655
  %v4980 = vunpack.c.l.b16 %v4656
  %v4981 = vunpack.c.l.b16 %v4657
  %v4982 = vunpack.c.l.b16 %v4658
  %v4983 = vunpack.c.l.b16 %v4659
  %v4984 = vunpack.c.l.b16 %v4660
  %v4985 = vunpack.c.l.b16 %v4661
  %v4986 = vunpack.c.l.b16 %v4662
  %v4987 = vunpack.c.l.b16 %v4663
  %v4988 = vunpack.c.l.b16 %v4664
  %v4989 = vunpack.c.l.b16 %v4665
  %v4990 = vunpack.c.l.b16 %v4666
  %v4991 = vunpack.c.l.b16 %v4667
  %v4992 = vunpack.c.l.b16 %v4668
  %v4993 = vunpack.c.l.b16 %v4669
  %v4994 = vunpack.c.l.b16 %v4670
  %v4995 = vunpack.c.l.b16 %v4671
  %v4996 = vunpack.c.l.b16 %v4672
  %v4997 = vunpack.c.l.b16 %v4673
  %v4998 = vunpack.c.l.b16 %v4674
  %v4999 = vunpack.c.l.b16 %v4675
  %v5000 = vunpack.c.l.b16 %v4676
  %v5001 = vunpack.c.l.b16 %v4677
  %v5002 = vunpack.c.l.b16 %v4678
  %v5003 = vunpack.c.l.b16 %v4679
  %v5004 = vunpack.c.l.b16 %v4680
  %v5005 = vunpack.c.l.b16 %v4681
  %v5006 = vunpack.c.l.b16 %v4682
  %v5007 = vunpack.c.l.b16 %v4683
  %v5008 = vunpack.c.l.b16 %v4684
  %v5009 = vunpack.c.l.b16 %v4685
  %v5010 = vunpack.c.l.b16 %v4686
  %v5011 = vunpack.c.l.b16 %v4687
  %v5012 = vunpack.c.l.b16 %v4688
  %v5013 = vunpack.c.l.b16 %v4689
  %v5014 = vunpack.c.l.b16 %v4690
  %v5015 = vunpack.c.l.b16 %v4691
  %v5016 = vunpack.c.l.b16 %v4692
  %v5017 = vunpack.c.l.b16 %v4693
  %v5018 = vunpack.c.l.b16 %v4694
  %v5019 = vunpack.c.l.b16 %v4695
  %v5020 = vunpack.c.l.b16 %v4696
  %v5021 = vunpack.c.l.b16 %v4697
  %v5022 = vunpack.c.l.b16 %v4698
  %v5023 = vunpack.c.l.b16 %v4699
  %v5024 = vunpack.c.l.b16 %v4700
  %v5025 = vunpack.c.l.b16 %v4701
  %v5026 = vunpack.c.l.b16 %v4702
  %v5027 = vunpack.c.l.b16 %v4703
  %v5028 = vunpack.c.l.b16 %v4704
  %v5029 = vunpack.c.l.b16 %v4705
  %v5030 = vunpack.c.l.b16 %v4706
  %v5031 = vunpack.c.l.b16 %v4707
  %v5032 = vunpack.c.l.b16 %v4708
  %v5033 = vunpack.c.l.b16 %v4709
  %v5034 = vunpack.c.l.b16 %v4710
  %v5035 = vunpack.c.l.b16 %v4711
  %v5036 = vunpack.c.l.b16 %v4712
  %v5037 = vunpack.c.l.b16 %v4713
  %v5038 = vunpack.c.l.b16 %v4714
  %v5039 = vunpack.c.l.b16 %v4715
  %v5040 = vunpack.c.l.b16 %v4716
  %v5041 = vunpack.c.l.b16 %v4717
  %v5042 = vunpack.c.l.b16 %v4718
  %v5043 = vunpack.c.l.b16 %v4719
  %v5044 = vunpack.c.l.b16 %v4720
  %v5045 = vunpack.c.l.b16 %v4721
  %v5046 = vunpack.c.l.b16 %v4722
  %v5047 = vunpack.c.l.b16 %v4723
  %v5048 = vunpack.c.l.b16 %v4724
  %v5049 = vunpack.c.l.b16 %v4725
  %v5050 = vunpack.c.l.b16 %v4726
  %v5051 = vunpack.c.l.b16 %v4727
  %v5052 = vunpack.c.l.b16 %v4728
  %v5053 = vunpack.c.l.b16 %v4729
  %v5054 = vunpack.c.l.b16 %v4730
  %v5055 = vunpack.c.l.b16 %v4731
  %v5056 = vunpack.c.l.b16 %v4732
  %v5057 = vunpack.c.l.b16 %v4733
  %v5058 = vunpack.c.l.b16 %v4734
  %v5059 = vunpack.c.l.b16 %v4735
  %v5060 = vunpack.c.l.b16 %v4736
  %v5061 = vunpack.c.l.b16 %v4737
  %v5062 = vunpack.c.l.b16 %v4738
  %v5063 = vunpack.c.l.b16 %v4739
  %v5064 = vunpack.c.l.b16 %v4740
  %v5065 = vunpack.c.l.b16 %v4741
  %v5066 = vunpack.c.l.b16 %v4742
  %v5067 = vunpack.c.l.b16 %v4743
  %v5068 = vunpack.c.l.b16 %v4744
  %v5069 = vunpack.c.l.b16 %v4745
  %v5070 = vunpack.c.l.b16 %v4746
  %v5071 = vunpack.c.l.b16 %v4747
  %v5072 = vunpack.c.l.b16 %v4748
  %v5073 = vunpack.c.l.b16 %v4749
  %v5074 = vunpack.c.l.b16 %v4750
  %v5075 = vpack.c.b16 %v4916, %v4915
  %v5076 = vpack.c.b16 %v4918, %v4917
  %v5077 = vpack.c.b16 %v4920, %v4919
  %v5078 = vpack.c.b16 %v4922, %v4921
  %v5079 = vpack.c.b16 %v4924, %v4923
  %v5080 = vpack.c.b16 %v4926, %v4925
  %v5081 = vpack.c.b16 %v4928, %v4927
  %v5082 = vpack.c.b16 %v4930, %v4929
  %v5083 = vpack.c.b16 %v4932, %v4931
  %v5084 = vpack.c.b16 %v4934, %v4933
  %v5085 = vpack.c.b16 %v4936, %v4935
  %v5086 = vpack.c.b16 %v4938, %v4937
  %v5087 = vpack.c.b16 %v4940, %v4939
  %v5088 = vpack.c.b16 %v4942, %v4941
  %v5089 = vpack.c.b16 %v4944, %v4943
  %v5090 = vpack.c.b16 %v4946, %v4945
  %v5091 = vpack.c.b16 %v4948, %v4947
  %v5092 = vpack.c.b16 %v4950, %v4949
  %v5093 = vpack.c.b16 %v4952, %v4951
  %v5094 = vpack.c.b16 %v4954, %v4953
  %v5095 = vpack.c.b16 %v4956, %v4955
  %v5096 = vpack.c.b16 %v4958, %v4957
  %v5097 = vpack.c.b16 %v4960, %v4959
  %v5098 = vpack.c.b16 %v4962, %v4961
  %v5099 = vpack.c.b16 %v4964, %v4963
  %v5100 = vpack.c.b16 %v4966, %v4965
  %v5101 = vpack.c.b16 %v4968, %v4967
  %v5102 = vpack.c.b16 %v4970, %v4969
  %v5103 = vpack.c.b16 %v4972, %v4971
  %v5104 = vpack.c.b16 %v4974, %v4973
  %v5105 = vpack.c.b16 %v4976, %v4975
  %v5106 = vpack.c.b16 %v4978, %v4977
  %v5107 = vpack.c.b16 %v4980, %v4979
  %v5108 = vpack.c.b16 %v4982, %v4981
  %v5109 = vpack.c.b16 %v4984, %v4983
  %v5110 = vpack.c.b16 %v4986, %v4985
  %v5111 = vpack.c.b16 %v4988, %v4987
  %v5112 = vpack.c.b16 %v4990, %v4989
  %v5113 = vpack.c.b16 %v4992, %v4991
  %v5114 = vpack.c.b16 %v4994, %v4993
  %v5115 = vpack.c.b16 %v4996, %v4995
  %v5116 = vpack.c.b16 %v4998, %v4997
  %v5117 = vpack.c.b16 %v5000, %v4999
  %v5118 = vpack.c.b16 %v5002, %v5001
  %v5119 = vpack.c.b16 %v5004, %v5003
  %v5120 = vpack.c.b16 %v5006, %v5005
  %v5121 = vpack.c.b16 %v5008, %v5007
  %v5122 = vpack.c.b16 %v5010, %v5009
  %v5123 = vpack.c.b16 %v5012, %v5011
  %v5124 = vpack.c.b16 %v5014, %v5013
  %v5125 = vpack.c.b16 %v5016, %v5015
  %v5126 = vpack.c.b16 %v5018, %v5017
  %v5127 = vpack.c.b16 %v5020, %v5019
  %v5128 = vpack.c.b16 %v5022, %v5021
  %v5129 = vpack.c.b16 %v5024, %v5023
  %v5130 = vpack.c.b16 %v5026, %v5025
  %v5131 = vpack.c.b16 %v5028, %v5027
  %v5132 = vpack.c.b16 %v5030, %v5029
  %v5133 = vpack.c.b16 %v5032, %v5031
  %v5134 = vpack.c.b16 %v5034, %v5033
  %v5135 = vpack.c.b16 %v5036, %v5035
  %v5136 = vpack.c.b16 %v5038, %v5037
  %v5137 = vpack.c.b16 %v5040, %v5039
  %v5138 = vpack.c.b16 %v5042, %v5041
  %v5139 = vpack.c.b16 %v5044, %v5043
  %v5140 = vpack.c.b16 %v5046, %v5045
  %v5141 = vpack.c.b16 %v5048, %v5047
  %v5142 = vpack.c.b16 %v5050, %v5049
  %v5143 = vpack.c.b16 %v5052, %v5051
  %v5144 = vpack.c.b16 %v5054, %v5053
  %v5145 = vpack.c.b16 %v5056, %v5055
  %v5146 = vpack.c.b16 %v5058, %v5057
  %v5147 = vpack.c.b16 %v5060, %v5059
  %v5148 = vpack.c.b16 %v5062, %v5061
  %v5149 = vpack.c.b16 %v5064, %v5063
  %v5150 = vpack.c.b16 %v5066, %v5065
  %v5151 = vpack.c.b16 %v5068, %v5067
  %v5152 = vpack.c.b16 %v5070, %v5069
  %v5153 = vpack.c.b16 %v5072, %v5071
  %v5154 = vpack.c.b16 %v5074, %v5073
  %5235 = vmatpush.bf16.msra.mxu0 %v5082
  %5236 = vmatpush.bf16.msra.mxu0 %v5081
  %5237 = vmatpush.bf16.msra.mxu0 %v5080
  %5238 = vmatpush.bf16.msra.mxu0 %v5079
  %5239 = vmatpush.bf16.msra.mxu0 %v5078
  %5240 = vmatpush.bf16.msra.mxu0 %v5077
  %5241 = vmatpush.bf16.msra.mxu0 %v5076
  %5242 = vmatpush.bf16.msra.mxu0 %v5075
  %5243 = vmatmul.bf16.gmra.mxu0 %v4581
  %v5244 = vpop.f32.mrf.mxu0
  %v5245 = vadd.f32 %v4753, %v5244
  %v5246 = vpop.f32.mrf.mxu0
  %5247 = vdwg.mxu0
  %5248 = vmatpush.bf16.msra.mxu0 %v5090
  %5249 = vmatpush.bf16.msra.mxu0 %v5089
  %5250 = vmatpush.bf16.msra.mxu0 %v5088
  %5251 = vmatpush.bf16.msra.mxu0 %v5087
  %5252 = vmatpush.bf16.msra.mxu0 %v5086
  %5253 = vmatpush.bf16.msra.mxu0 %v5085
  %5254 = vmatpush.bf16.msra.mxu0 %v5084
  %5255 = vmatpush.bf16.msra.mxu0 %v5083
  %5256 = vmatmul.bf16.gmra.mxu0 %v4582
  %v5257 = vpop.f32.mrf.mxu0
  %v5258 = vadd.f32 %v5245, %v5257
  %v5259 = vpop.f32.mrf.mxu0
  %5260 = vdwg.mxu0
  %5261 = vmatpush.bf16.msra.mxu0 %v5098
  %5262 = vmatpush.bf16.msra.mxu0 %v5097
  %5263 = vmatpush.bf16.msra.mxu0 %v5096
  %5264 = vmatpush.bf16.msra.mxu0 %v5095
  %5265 = vmatpush.bf16.msra.mxu0 %v5094
  %5266 = vmatpush.bf16.msra.mxu0 %v5093
  %5267 = vmatpush.bf16.msra.mxu0 %v5092
  %5268 = vmatpush.bf16.msra.mxu0 %v5091
  %5269 = vmatmul.bf16.gmra.mxu0 %v4583
  %v5270 = vpop.f32.mrf.mxu0
  %v5271 = vadd.f32 %v5258, %v5270
  %v5272 = vpop.f32.mrf.mxu0
  %5273 = vdwg.mxu0
  %5274 = vmatpush.bf16.msra.mxu0 %v5106
  %5275 = vmatpush.bf16.msra.mxu0 %v5105
  %5276 = vmatpush.bf16.msra.mxu0 %v5104
  %5277 = vmatpush.bf16.msra.mxu0 %v5103
  %5278 = vmatpush.bf16.msra.mxu0 %v5102
  %5279 = vmatpush.bf16.msra.mxu0 %v5101
  %5280 = vmatpush.bf16.msra.mxu0 %v5100
  %5281 = vmatpush.bf16.msra.mxu0 %v5099
  %5282 = vmatmul.bf16.gmra.mxu0 %v4584
  %v5283 = vpop.f32.mrf.mxu0
  %v5284 = vadd.f32 %v5271, %v5283
  %v5285 = vpop.f32.mrf.mxu0
  %5286 = vdwg.mxu0
  %5287 = vmatpush.bf16.msra.mxu0 %v5114
  %5288 = vmatpush.bf16.msra.mxu0 %v5113
  %5289 = vmatpush.bf16.msra.mxu0 %v5112
  %5290 = vmatpush.bf16.msra.mxu0 %v5111
  %5291 = vmatpush.bf16.msra.mxu0 %v5110
  %5292 = vmatpush.bf16.msra.mxu0 %v5109
  %5293 = vmatpush.bf16.msra.mxu0 %v5108
  %5294 = vmatpush.bf16.msra.mxu0 %v5107
  %5295 = vmatmul.bf16.gmra.mxu0 %v4585
  %v5296 = vpop.f32.mrf.mxu0
  %v5297 = vadd.f32 %v5284, %v5296
  %v5298 = vpop.f32.mrf.mxu0
  %5299 = vdwg.mxu0
  %5300 = vmatpush.bf16.msra.mxu0 %v5122
  %5301 = vmatpush.bf16.msra.mxu0 %v5121
  %5302 = vmatpush.bf16.msra.mxu0 %v5120
  %5303 = vmatpush.bf16.msra.mxu0 %v5119
  %5304 = vmatpush.bf16.msra.mxu0 %v5118
  %5305 = vmatpush.bf16.msra.mxu0 %v5117
  %5306 = vmatpush.bf16.msra.mxu0 %v5116
  %5307 = vmatpush.bf16.msra.mxu0 %v5115
  %5308 = vmatmul.bf16.gmra.mxu0 %v4586
  %v5309 = vpop.f32.mrf.mxu0
  %v5310 = vadd.f32 %v5297, %v5309
  %v5311 = vpop.f32.mrf.mxu0
  %5312 = vdwg.mxu0
  %5313 = vmatpush.bf16.msra.mxu0 %v5130
  %5314 = vmatpush.bf16.msra.mxu0 %v5129
  %5315 = vmatpush.bf16.msra.mxu0 %v5128
  %5316 = vmatpush.bf16.msra.mxu0 %v5127
  %5317 = vmatpush.bf16.msra.mxu0 %v5126
  %5318 = vmatpush.bf16.msra.mxu0 %v5125
  %5319 = vmatpush.bf16.msra.mxu0 %v5124
  %5320 = vmatpush.bf16.msra.mxu0 %v5123
  %5321 = vmatmul.bf16.gmra.mxu0 %v4587
  %v5322 = vpop.f32.mrf.mxu0
  %v5323 = vadd.f32 %v5310, %v5322
  %v5324 = vpop.f32.mrf.mxu0
  %5325 = vdwg.mxu0
  %5326 = vmatpush.bf16.msra.mxu0 %v5138
  %5327 = vmatpush.bf16.msra.mxu0 %v5137
  %5328 = vmatpush.bf16.msra.mxu0 %v5136
  %5329 = vmatpush.bf16.msra.mxu0 %v5135
  %5330 = vmatpush.bf16.msra.mxu0 %v5134
  %5331 = vmatpush.bf16.msra.mxu0 %v5133
  %5332 = vmatpush.bf16.msra.mxu0 %v5132
  %5333 = vmatpush.bf16.msra.mxu0 %v5131
  %5334 = vmatmul.bf16.gmra.mxu0 %v4588
  %v5335 = vpop.f32.mrf.mxu0
  %v5336 = vadd.f32 %v5323, %v5335
  %v5337 = vpop.f32.mrf.mxu0
  %5338 = vdwg.mxu0
  %5339 = vmatpush.bf16.msra.mxu0 %v5146
  %5340 = vmatpush.bf16.msra.mxu0 %v5145
  %5341 = vmatpush.bf16.msra.mxu0 %v5144
  %5342 = vmatpush.bf16.msra.mxu0 %v5143
  %5343 = vmatpush.bf16.msra.mxu0 %v5142
  %5344 = vmatpush.bf16.msra.mxu0 %v5141
  %5345 = vmatpush.bf16.msra.mxu0 %v5140
  %5346 = vmatpush.bf16.msra.mxu0 %v5139
  %5347 = vmatmul.bf16.gmra.mxu0 %v4589
  %v5348 = vpop.f32.mrf.mxu0
  %v5349 = vadd.f32 %v5336, %v5348
  %v5350 = vpop.f32.mrf.mxu0
  %5351 = vdwg.mxu0
  %5352 = vmatpush.bf16.msra.mxu0 %v5154
  %5353 = vmatpush.bf16.msra.mxu0 %v5153
  %5354 = vmatpush.bf16.msra.mxu0 %v5152
  %5355 = vmatpush.bf16.msra.mxu0 %v5151
  %5356 = vmatpush.bf16.msra.mxu0 %v5150
  %5357 = vmatpush.bf16.msra.mxu0 %v5149
  %5358 = vmatpush.bf16.msra.mxu0 %v5148
  %5359 = vmatpush.bf16.msra.mxu0 %v5147
  %5360 = vmatmul.bf16.gmra.mxu0 %v4590
  %v5361 = vpop.f32.mrf.mxu0
  %v5362 = vadd.f32 %v5349, %v5361
  %v5363 = vpop.f32.mrf.mxu0
  %5364 = vdwg.mxu0
  %v5365 = vld [vmem:[%s9] sm:$0x1]
  %v5367 = vperm.slane %v5365, 0
  %v5369 = vmul.f32 %v5362, %v5367
  %vm5370 = vcmask 1041408
  %v5371 = vsel %vm5370, %v5369, 0.0
  %5372 = vadd.xlane.f32.xlu0 %v5371
  %v5373 = vpop.xlane.xlu0 %5372
  %v5374 = vld [vmem:[%s8] sm:$0x3]
  %v5375 = vld [vmem:[%s10] sm:$0x1]
  %v5377 = vperm.slane %v5375, 0
  %v5379 = vmul.f32 %v5374, %v5377
  %vm5380 = vcmask 91136
  %v5381 = vsel %vm5380, %v5379, 0.0
  %5382 = vadd.xlane.f32.xlu0 %v5381
  %v5383 = vpop.xlane.xlu0 %5382
  %v5384 = vadd.f32 %v5373, %v5383
  %v5385 = vld [vmem:[#allocation2] sm:$0x1]
  %v5387 = vperm.slane %v5385, 0
  %v5389 = vadd.f32 %v5384, %v5387
  %vm5390 = vcmask 1024
  %5391 = vst.msk [vmem:[%s12] sm:$0x3] %vm5390, %v5389
  // Predicated region
  $region50: #{pet_model_forward.1} parent=0 // pred_check
    _
  $region51: #{pet_model_forward.1} parent=0 // pred_check_branch
    %5393 = sbr.rel (0) target = $region53
  $region52: #{pet_model_forward.1} parent=0 // pred_region
    _
  $region53: #{pet_model_forward.1} parent=0 // pred_fallthru
    _
  // Predicated region
  $region54: #{pet_model_forward.1} parent=0 // pred_check
    _
  $region55: #{pet_model_forward.1} parent=0 // pred_check_branch
    %5395 = sbr.rel (0) target = $region57
  $region56: #{pet_model_forward.1} parent=0 // pred_region
    _
  $region57: #{pet_model_forward.1} parent=0 // pred_fallthru
    _

</llo_original>
